<compile_context>
chip_gen: v6e
topology: v6e:2x2x1
jax: 0.10.0
libtpu: 0.0.40
codegen_flags: <defaults>
</compile_context>

<pallas_src>
import functools

import jax
import jax.numpy as jnp
from jax.experimental import pallas as pl
from jax.experimental.pallas import tpu as pltpu

_COMPUTE_DTYPE = jnp.bfloat16


# --------------------------------------------------------------------------- #
# Kernel body
# --------------------------------------------------------------------------- #
def _customized_mlp_kernel(x_ref, wgu_ref, wd_ref, w1_ref, w2_ref, o_ref, acc_ref):
    k = pl.program_id(1)
    tI = wd_ref.shape[0]

    x = x_ref[...]                                                     # (tm, H) bf16

    @pl.when(k == 0)
    def _init():
        # SVD low-rank branch, computed once per token tile: (x @ W1p) @ W2p.
        lr = jnp.dot(x, w1_ref[...], preferred_element_type=jnp.float32)   # (tm, Rp)
        acc_ref[...] = jnp.dot(lr.astype(x.dtype), w2_ref[...],
                               preferred_element_type=jnp.float32)         # (tm, H)

    # Fused gate/up matmul for this intermediate tile: x @ [Wg_k | Wu_k].
    gu = jnp.dot(x, wgu_ref[0], preferred_element_type=jnp.float32)        # (tm, 2*tI)
    g = gu[:, :tI]
    u = gu[:, tI:]
    h = jax.nn.silu(g) * u                                                 # f32 (tm, tI)

    acc_ref[...] += jnp.dot(h.astype(x.dtype), wd_ref[...],
                            preferred_element_type=jnp.float32)            # (tm, H)

    @pl.when(k == pl.num_programs(1) - 1)
    def _finalize():
        o_ref[...] = acc_ref[...].astype(o_ref.dtype)


# --------------------------------------------------------------------------- #
# Chip-aware configuration
# --------------------------------------------------------------------------- #
def _round_up(x, m):
    return -(-x // m) * m


def _tpu_generation():
    try:
        kind = jax.devices()[0].device_kind.lower()
    except Exception:
        return None
    if "v5 lite" in kind or "v5e" in kind or "v5lite" in kind:
        return "v5e"
    if "v6" in kind:
        return "v6e"
    if "7" in kind:
        return "v7x"
    return None


# (default tm, default tI, scoped-VMEM limit bytes)
_CHIP_CONFIG = {
    "v5e": (256, 512, 100 << 20),
    "v6e": (512, 512, 100 << 20),
    "v7x": (512, 256, 56 << 20),
    None:  (256, 512, 48 << 20),   # unknown chip: conservative VMEM budget
}


def _pick_tile_i(I, desired):
    """Largest lane-aligned divisor of I that is <= desired (or I itself)."""
    if I % 128 != 0:
        return I                      # can't lane-tile; use the full intermediate dim
    cand = max(128, min((desired // 128) * 128, I))
    while cand > 128 and I % cand != 0:
        cand -= 128
    return cand if I % cand == 0 else I


def _select_tm_and_vmem(M, H, tI, Rp, out_itemsize, tm_user):
    tm_def, _, vmem_limit = _CHIP_CONFIG.get(_tpu_generation(), _CHIP_CONFIG[None])
    tm = tm_def if tm_user is None else tm_user
    tm = max(128, min(_round_up(tm, 128), _round_up(M, 128)))
    # Megacore: make sure the "parallel" token axis has >= 2 steps whenever
    # there is actually work for two TensorCores.
    if -(-M // tm) < 2 and M > 128:
        tm = max(128, _round_up(-(-M // 2), 128))

    # Fit the double-buffered working set into the scoped VMEM budget.
    def working_set(tm_):
        dbuf = 2 * (tm_ * H * 2           # x bf16
                    + H * 2 * tI * 2      # [Wg_k|Wu_k] bf16
                    + tI * H * 2          # Wd_k bf16
                    + tm_ * H * out_itemsize)  # output block
        svd = 2 * (H * Rp + Rp * H) * 2   # SVD weights (worst case: double-buffered)
        acc = tm_ * H * 4                 # f32 accumulator scratch
        return dbuf + svd + acc

    while tm > 128 and working_set(tm) > int(0.9 * vmem_limit):
        tm -= 128
    return tm, vmem_limit


# --------------------------------------------------------------------------- #
# One-time weight prep (hoisted out of the per-call jit path)
# --------------------------------------------------------------------------- #
def prepare_customized_mlp_weights(wg_t, wu_t, wd_t, w1_t, w2_t, *, tI=None):
    """Run once at weight-load time; reuse the result for every forward call.

    wg_t: (H, I) gate_proj.weight.T     wu_t: (H, I) up_proj.weight.T
    wd_t: (I, H) down_proj.weight.T     w1_t: (H, R) svd w1.T
    w2_t: (R, H) svd w2.weight.T

    Returns (wgu, wd, w1p, w2p):
      wgu: (Kt, H, 2*tI) bf16, block k = [Wg_k | Wu_k]  (HBM-contiguous per block)
      wd : (I, H) bf16
      w1p: (H, Rp) bf16 zero-padded   w2p: (Rp, H) bf16 zero-padded
    """
    H, I = wg_t.shape
    R = w1_t.shape[1]
    if tI is None:
        tI = _CHIP_CONFIG.get(_tpu_generation(), _CHIP_CONFIG[None])[1]
    tI = _pick_tile_i(I, tI)
    Kt = I // tI
    Rp = _round_up(max(R, 1), 128)

    # TODO(synk): optional fp8 weight storage on v7x (halves weight-stream bytes).
    wg_b = wg_t.astype(_COMPUTE_DTYPE).reshape(H, Kt, tI)
    wu_b = wu_t.astype(_COMPUTE_DTYPE).reshape(H, Kt, tI)
    wgu = jnp.transpose(jnp.concatenate([wg_b, wu_b], axis=-1), (1, 0, 2))   # (Kt, H, 2*tI)
    wd_b = wd_t.astype(_COMPUTE_DTYPE)
    w1p = jnp.pad(w1_t.astype(_COMPUTE_DTYPE), ((0, 0), (0, Rp - R)))
    w2p = jnp.pad(w2_t.astype(_COMPUTE_DTYPE), ((0, Rp - R), (0, 0)))
    return jax.block_until_ready((wgu, wd_b, w1p, w2p))


# --------------------------------------------------------------------------- #
# pallas_call wrapper
# --------------------------------------------------------------------------- #
@functools.partial(
    jax.jit,
    static_argnames=("tm", "out_dtype", "single_buffer_svd", "vmem_limit_bytes"))
def _customized_mlp_call(x2d, wgu, wd, w1p, w2p, *, tm, out_dtype,
                         single_buffer_svd, vmem_limit_bytes):
    Mp, H = x2d.shape
    Kt, _, two_tI = wgu.shape
    tI = two_tI // 2
    I = Kt * tI
    Rp = w1p.shape[1]
    out_itemsize = jnp.dtype(out_dtype).itemsize

    if single_buffer_svd:
        # Constant blocks (index_map == (0,0) for every grid point): double
        # buffering is pure VMEM waste, so request a single buffer.
        w1_spec = pl.BlockSpec((H, Rp), lambda i, k: (0, 0),
                               pipeline_mode=pl.Buffered(buffer_count=1))
        w2_spec = pl.BlockSpec((Rp, H), lambda i, k: (0, 0),
                               pipeline_mode=pl.Buffered(buffer_count=1))
    else:
        w1_spec = pl.BlockSpec((H, Rp), lambda i, k: (0, 0))
        w2_spec = pl.BlockSpec((Rp, H), lambda i, k: (0, 0))

    # Honest memory traffic: weights are re-streamed once per token tile.
    w_bytes = (wgu.size + wd.size + w1p.size + w2p.size) * wgu.dtype.itemsize
    cost = pl.CostEstimate(
        flops=int(2 * Mp * (2 * H * I + I * H + H * Rp + Rp * H)),
        transcendentals=int(Mp * I),
        bytes_accessed=int(x2d.size * x2d.dtype.itemsize
                           + (Mp // tm) * w_bytes
                           + Mp * H * out_itemsize),
    )

    return pl.pallas_call(
        _customized_mlp_kernel,
        out_shape=jax.ShapeDtypeStruct((Mp, H), out_dtype),
        grid_spec=pltpu.PrefetchScalarGridSpec(
            num_scalar_prefetch=0,
            grid=(Mp // tm, Kt),
            in_specs=[
                pl.BlockSpec((tm, H), lambda i, k: (i, 0)),            # x token tile
                pl.BlockSpec((1, H, 2 * tI), lambda i, k: (k, 0, 0)),  # [Wg_k|Wu_k], contiguous
                pl.BlockSpec((tI, H), lambda i, k: (k, 0)),            # Wd_k
                w1_spec,                                               # SVD W1 (padded)
                w2_spec,                                               # SVD W2 (padded)
            ],
            out_specs=pl.BlockSpec((tm, H), lambda i, k: (i, 0)),
            scratch_shapes=[pltpu.VMEM((tm, H), jnp.float32)],         # f32 accumulator
        ),
        compiler_params=pltpu.CompilerParams(
            dimension_semantics=("parallel", "arbitrary"),
            vmem_limit_bytes=int(vmem_limit_bytes),
        ),
        cost_estimate=cost,
    )(x2d, wgu, wd, w1p, w2p)


_SINGLE_BUFFER_SVD_OK = None   # lazily probed: does this Pallas build accept Buffered(1)?


def customized_mlp(hidden_states, prepped_weights, *, tm=None, out_dtype=_COMPUTE_DTYPE):
    """hidden_states: (B, S, H). prepped_weights: prepare_customized_mlp_weights(...)."""
    global _SINGLE_BUFFER_SVD_OK
    wgu, wd, w1p, w2p = prepped_weights
    B, S, H = hidden_states.shape
    M = B * S
    tI = wgu.shape[2] // 2
    Rp = w1p.shape[1]
    out_itemsize = jnp.dtype(out_dtype).itemsize

    tm, vmem_limit = _select_tm_and_vmem(M, H, tI, Rp, out_itemsize, tm)
    Mp = _round_up(M, tm)

    x2d = hidden_states.reshape(M, H).astype(_COMPUTE_DTYPE)
    if Mp != M:
        x2d = jnp.pad(x2d, ((0, Mp - M), (0, 0)))

    want_sb = _SINGLE_BUFFER_SVD_OK is not False and hasattr(pl, "Buffered")
    try:
        out2d = _customized_mlp_call(x2d, wgu, wd, w1p, w2p, tm=tm,
                                     out_dtype=out_dtype,
                                     single_buffer_svd=want_sb,
                                     vmem_limit_bytes=vmem_limit)
        if want_sb:
            _SINGLE_BUFFER_SVD_OK = True
    except Exception:
        if not want_sb:
            raise
        # This Pallas build rejected Buffered(1); fall back to default buffering.
        _SINGLE_BUFFER_SVD_OK = False
        out2d = _customized_mlp_call(x2d, wgu, wd, w1p, w2p, tm=tm,
                                     out_dtype=out_dtype,
                                     single_buffer_svd=False,
                                     vmem_limit_bytes=vmem_limit)
    return out2d[:M].reshape(B, S, H)


# --------------------------------------------------------------------------- #
# Pure-JAX reference and self-test
# --------------------------------------------------------------------------- #
def _reference(hidden_states, wg_t, wu_t, wd_t, w1_t, w2_t):
    x = hidden_states.astype(jnp.float32)
    mlp_out = (jax.nn.silu(x @ wg_t) * (x @ wu_t)) @ wd_t
    svd_out = (x @ w1_t) @ w2_t
    return mlp_out + svd_out


if __name__ == "__main__":
    # Small, Llama-like config (hidden_act = "silu", pretraining_tp = 1).
    B, S = 2, 128
    HIDDEN = 256        # config.hidden_size
    INTER = 512         # config.intermediate_size (this layer)
    LOWRANK = 64        # lowrank

    key = jax.random.PRNGKey(0)
    kx, kg, ku, kd, k1, k2 = jax.random.split(key, 6)

    x = jax.random.normal(kx, (B, S, HIDDEN), dtype=jnp.float32)

    # Parameters stored already transposed to (in, out) for the kernel's x @ W layout.
    wg_t = (HIDDEN ** -0.5) * jax.random.normal(kg, (HIDDEN, INTER), dtype=jnp.float32)
    wu_t = (HIDDEN ** -0.5) * jax.random.normal(ku, (HIDDEN, INTER), dtype=jnp.float32)
    wd_t = (INTER ** -0.5) * jax.random.normal(kd, (INTER, HIDDEN), dtype=jnp.float32)
    w1_t = (HIDDEN ** -0.5) * jax.random.normal(k1, (HIDDEN, LOWRANK), dtype=jnp.float32)
    w2_t = (LOWRANK ** -0.5) * jax.random.normal(k2, (LOWRANK, HIDDEN), dtype=jnp.float32)

    # One-time weight prep (bf16 cast, gate/up interleave, low-rank pad).
    prepped = prepare_customized_mlp_weights(wg_t, wu_t, wd_t, w1_t, w2_t, tI=256)

    out = customized_mlp(x, prepped)
    out = jax.block_until_ready(out)

    ref = _reference(x, wg_t, wu_t, wd_t, w1_t, w2_t)
    assert out.shape == (B, S, HIDDEN)

    # bf16 operands/output with f32 accumulation vs. an all-f32 reference:
    # use a relative max-error check with a bf16-appropriate tolerance.
    rel_err = float(jnp.max(jnp.abs(out.astype(jnp.float32) - ref))
                    / (jnp.max(jnp.abs(ref)) + 1e-6))
    assert rel_err < 3e-2, f"mismatch vs reference, rel_err={rel_err}"

    print("KERNEL_OK")
</pallas_src>

<mosaic_0001>
module attributes {stable_mosaic.version = 11 : i64} {
  func.func @_customized_mlp_kernel(%arg0: i32, %arg1: i32, %arg2: memref<128x256xbf16, #tpu.memory_space<vmem>>, %arg3: memref<1x256x512xbf16, #tpu.memory_space<vmem>>, %arg4: memref<256x256xbf16, #tpu.memory_space<vmem>>, %arg5: memref<256x128xbf16, #tpu.memory_space<vmem>>, %arg6: memref<128x256xbf16, #tpu.memory_space<vmem>>, %arg7: memref<128x256xbf16, #tpu.memory_space<vmem>>, %arg8: memref<128x256xf32, #tpu.memory_space<vmem>>) attributes {dimension_semantics = [#tpu.dimension_semantics<parallel>, #tpu.dimension_semantics<arbitrary>], iteration_bounds = array<i64: 2, 2>, scalar_prefetch = 0 : i64, scratch_operands = 1 : i64, tpu.core_type = #tpu.core_type<tc>, window_params = [{transform_indices = @transform_0, window_bounds = array<i64: 128, 256>}, {transform_indices = @transform_1, window_bounds = array<i64: 1, 256, 512>}, {transform_indices = @transform_2, window_bounds = array<i64: 256, 256>}, {pipeline_mode = #tpu.pipeline_mode<synchronous>, transform_indices = @transform_3, window_bounds = array<i64: 256, 128>}, {pipeline_mode = #tpu.pipeline_mode<synchronous>, transform_indices = @transform_4, window_bounds = array<i64: 128, 256>}, {transform_indices = @transform_5, window_bounds = array<i64: 128, 256>}]} {
    %c0 = arith.constant 0 : index
    %c0_0 = arith.constant 0 : index
    %0 = vector.load %arg2[%c0, %c0_0] : memref<128x256xbf16, #tpu.memory_space<vmem>>, vector<128x256xbf16>
    %c0_i32 = arith.constant 0 : i32
    %1 = arith.cmpi eq, %arg1, %c0_i32 : i32
    %2 = arith.extui %1 : i1 to i32
    %c0_i32_1 = arith.constant 0 : i32
    %3 = arith.cmpi ne, %2, %c0_i32_1 : i32
    scf.if %3 {
      %c0_14 = arith.constant 0 : index
      %c0_15 = arith.constant 0 : index
      %25 = vector.load %arg5[%c0_14, %c0_15] : memref<256x128xbf16, #tpu.memory_space<vmem>>, vector<256x128xbf16>
      %cst_16 = arith.constant dense<0.000000e+00> : vector<128x128xf32>
      %26 = tpu.matmul %0, %25, %cst_16 {dimension_numbers = #tpu.dot_dimension_numbers<[1], [0], [0], [1], [0, 0, 1, 1], [], []>} : vector<128x256xbf16>, vector<256x128xbf16>, vector<128x128xf32> -> vector<128x128xf32>
      %27 = arith.truncf %26 : vector<128x128xf32> to vector<128x128xbf16>
      %c0_17 = arith.constant 0 : index
      %c0_18 = arith.constant 0 : index
      %28 = vector.load %arg6[%c0_17, %c0_18] : memref<128x256xbf16, #tpu.memory_space<vmem>>, vector<128x256xbf16>
      %cst_19 = arith.constant dense<0.000000e+00> : vector<128x256xf32>
      %29 = tpu.matmul %27, %28, %cst_19 {dimension_numbers = #tpu.dot_dimension_numbers<[1], [0], [0], [1], [0, 0, 1, 1], [], []>} : vector<128x128xbf16>, vector<128x256xbf16>, vector<128x256xf32> -> vector<128x256xf32>
      %c0_20 = arith.constant 0 : index
      %c0_21 = arith.constant 0 : index
      %30 = vector.load %arg8[%c0_20, %c0_21] : memref<128x256xf32, #tpu.memory_space<vmem>>, vector<128x256xf32>
      tpu.vector_store %arg8[%c0_20, %c0_21], %29 {strides = array<i32>} : memref<128x256xf32, #tpu.memory_space<vmem>>, vector<128x256xf32>,
    } else {
    }
    %c0_2 = arith.constant 0 : index
    %c0_3 = arith.constant 0 : index
    %c0_4 = arith.constant 0 : index
    %4 = vector.load %arg3[%c0_2, %c0_3, %c0_4] : memref<1x256x512xbf16, #tpu.memory_space<vmem>>, vector<1x256x512xbf16>
    %5 = vector.shape_cast %4 : vector<1x256x512xbf16> to vector<256x512xbf16>
    %cst = arith.constant dense<0.000000e+00> : vector<128x512xf32>
    %6 = tpu.matmul %0, %5, %cst {dimension_numbers = #tpu.dot_dimension_numbers<[1], [0], [0], [1], [0, 0, 1, 1], [], []>} : vector<128x256xbf16>, vector<256x512xbf16>, vector<128x512xf32> -> vector<128x512xf32>
    %7 = vector.extract_strided_slice %6 {offsets = [0, 0], sizes = [128, 256], strides = [1, 1]} : vector<128x512xf32> to vector<128x256xf32>
    %8 = vector.extract_strided_slice %6 {offsets = [0, 256], sizes = [128, 256], strides = [1, 1]} : vector<128x512xf32> to vector<128x256xf32>
    %9 = arith.negf %7 : vector<128x256xf32>
    %10 = math.exp %9 : vector<128x256xf32>
    %cst_5 = arith.constant 1.000000e+00 : f32
    %11 = vector.broadcast %cst_5 : f32 to vector<128x256xf32>
    %12 = arith.addf %11, %10 : vector<128x256xf32>
    %13 = arith.divf %11, %12 : vector<128x256xf32>
    %14 = arith.mulf %7, %13 : vector<128x256xf32>
    %15 = arith.mulf %14, %8 : vector<128x256xf32>
    %c0_6 = arith.constant 0 : index
    %c0_7 = arith.constant 0 : index
    %16 = vector.load %arg8[%c0_6, %c0_7] : memref<128x256xf32, #tpu.memory_space<vmem>>, vector<128x256xf32>
    %17 = arith.truncf %15 : vector<128x256xf32> to vector<128x256xbf16>
    %c0_8 = arith.constant 0 : index
    %c0_9 = arith.constant 0 : index
    %18 = vector.load %arg4[%c0_8, %c0_9] : memref<256x256xbf16, #tpu.memory_space<vmem>>, vector<256x256xbf16>
    %cst_10 = arith.constant dense<0.000000e+00> : vector<128x256xf32>
    %19 = tpu.matmul %17, %18, %cst_10 {dimension_numbers = #tpu.dot_dimension_numbers<[1], [0], [0], [1], [0, 0, 1, 1], [], []>} : vector<128x256xbf16>, vector<256x256xbf16>, vector<128x256xf32> -> vector<128x256xf32>
    %20 = arith.addf %16, %19 : vector<128x256xf32>
    %c0_11 = arith.constant 0 : index
    %c0_12 = arith.constant 0 : index
    %21 = vector.load %arg8[%c0_11, %c0_12] : memref<128x256xf32, #tpu.memory_space<vmem>>, vector<128x256xf32>
    tpu.vector_store %arg8[%c0_11, %c0_12], %20 {strides = array<i32>} : memref<128x256xf32, #tpu.memory_space<vmem>>, vector<128x256xf32>,
    %c1_i32 = arith.constant 1 : i32
    %22 = arith.cmpi eq, %arg1, %c1_i32 : i32
    %23 = arith.extui %22 : i1 to i32
    %c0_i32_13 = arith.constant 0 : i32
    %24 = arith.cmpi ne, %23, %c0_i32_13 : i32
    scf.if %24 {
      %c0_14 = arith.constant 0 : index
      %c0_15 = arith.constant 0 : index
      %25 = vector.load %arg8[%c0_14, %c0_15] : memref<128x256xf32, #tpu.memory_space<vmem>>, vector<128x256xf32>
      %26 = arith.truncf %25 : vector<128x256xf32> to vector<128x256xbf16>
      %c0_16 = arith.constant 0 : index
      %c0_17 = arith.constant 0 : index
      %27 = vector.load %arg7[%c0_16, %c0_17] : memref<128x256xbf16, #tpu.memory_space<vmem>>, vector<128x256xbf16>
      tpu.vector_store %arg7[%c0_16, %c0_17], %26 {strides = array<i32>} : memref<128x256xbf16, #tpu.memory_space<vmem>>, vector<128x256xbf16>,
    } else {
    }
    return
  }
  func.func @transform_0(%arg0: i32, %arg1: i32) -> (i32, i32) {
    %c0_i32 = arith.constant 0 : i32
    %c0_i32_0 = arith.constant 0 : i32
    return %arg0, %c0_i32 : i32, i32
  }
  func.func @transform_1(%arg0: i32, %arg1: i32) -> (i32, i32, i32) {
    %c0_i32 = arith.constant 0 : i32
    %c0_i32_0 = arith.constant 0 : i32
    %c0_i32_1 = arith.constant 0 : i32
    return %arg1, %c0_i32, %c0_i32_0 : i32, i32, i32
  }
  func.func @transform_2(%arg0: i32, %arg1: i32) -> (i32, i32) {
    %c0_i32 = arith.constant 0 : i32
    %c0_i32_0 = arith.constant 0 : i32
    return %arg1, %c0_i32 : i32, i32
  }
  func.func @transform_3(%arg0: i32, %arg1: i32) -> (i32, i32) {
    %c0_i32 = arith.constant 0 : i32
    %c0_i32_0 = arith.constant 0 : i32
    %c0_i32_1 = arith.constant 0 : i32
    return %c0_i32, %c0_i32_0 : i32, i32
  }
  func.func @transform_4(%arg0: i32, %arg1: i32) -> (i32, i32) {
    %c0_i32 = arith.constant 0 : i32
    %c0_i32_0 = arith.constant 0 : i32
    %c0_i32_1 = arith.constant 0 : i32
    return %c0_i32, %c0_i32_0 : i32, i32
  }
  func.func @transform_5(%arg0: i32, %arg1: i32) -> (i32, i32) {
    %c0_i32 = arith.constant 0 : i32
    %c0_i32_0 = arith.constant 0 : i32
    return %arg0, %c0_i32 : i32, i32
  }
}

module attributes {stable_mosaic.version = 11 : i64} {
  func.func @_customized_mlp_kernel(%arg0: i32, %arg1: i32, %arg2: memref<128x256xbf16, #tpu.memory_space<vmem>>, %arg3: memref<1x256x512xbf16, #tpu.memory_space<vmem>>, %arg4: memref<256x256xbf16, #tpu.memory_space<vmem>>, %arg5: memref<256x128xbf16, #tpu.memory_space<vmem>>, %arg6: memref<128x256xbf16, #tpu.memory_space<vmem>>, %arg7: memref<128x256xbf16, #tpu.memory_space<vmem>>, %arg8: memref<128x256xf32, #tpu.memory_space<vmem>>) attributes {dimension_semantics = [#tpu.dimension_semantics<parallel>, #tpu.dimension_semantics<arbitrary>], iteration_bounds = array<i64: 2, 2>, scalar_prefetch = 0 : i64, scratch_operands = 1 : i64, tpu.core_type = #tpu.core_type<tc>, window_params = [{transform_indices = @transform_0, window_bounds = array<i64: 128, 256>}, {transform_indices = @transform_1, window_bounds = array<i64: 1, 256, 512>}, {transform_indices = @transform_2, window_bounds = array<i64: 256, 256>}, {pipeline_mode = #tpu.pipeline_mode<synchronous>, transform_indices = @transform_3, window_bounds = array<i64: 256, 128>}, {pipeline_mode = #tpu.pipeline_mode<synchronous>, transform_indices = @transform_4, window_bounds = array<i64: 128, 256>}, {transform_indices = @transform_5, window_bounds = array<i64: 128, 256>}]} {
    %c0 = arith.constant 0 : index
    %c0_0 = arith.constant 0 : index
    %0 = vector.load %arg2[%c0, %c0_0] : memref<128x256xbf16, #tpu.memory_space<vmem>>, vector<128x256xbf16>
    %c0_i32 = arith.constant 0 : i32
    %1 = arith.cmpi eq, %arg1, %c0_i32 : i32
    %2 = arith.extui %1 : i1 to i32
    %c0_i32_1 = arith.constant 0 : i32
    %3 = arith.cmpi ne, %2, %c0_i32_1 : i32
    scf.if %3 {
      %c0_14 = arith.constant 0 : index
      %c0_15 = arith.constant 0 : index
      %25 = vector.load %arg5[%c0_14, %c0_15] : memref<256x128xbf16, #tpu.memory_space<vmem>>, vector<256x128xbf16>
      %cst_16 = arith.constant dense<0.000000e+00> : vector<128x128xf32>
      %26 = tpu.matmul %0, %25, %cst_16 {dimension_numbers = #tpu.dot_dimension_numbers<[1], [0], [0], [1], [0, 0, 1, 1], [], []>} : vector<128x256xbf16>, vector<256x128xbf16>, vector<128x128xf32> -> vector<128x128xf32>
      %27 = arith.truncf %26 : vector<128x128xf32> to vector<128x128xbf16>
      %c0_17 = arith.constant 0 : index
      %c0_18 = arith.constant 0 : index
      %28 = vector.load %arg6[%c0_17, %c0_18] : memref<128x256xbf16, #tpu.memory_space<vmem>>, vector<128x256xbf16>
      %cst_19 = arith.constant dense<0.000000e+00> : vector<128x256xf32>
      %29 = tpu.matmul %27, %28, %cst_19 {dimension_numbers = #tpu.dot_dimension_numbers<[1], [0], [0], [1], [0, 0, 1, 1], [], []>} : vector<128x128xbf16>, vector<128x256xbf16>, vector<128x256xf32> -> vector<128x256xf32>
      %c0_20 = arith.constant 0 : index
      %c0_21 = arith.constant 0 : index
      %30 = vector.load %arg8[%c0_20, %c0_21] : memref<128x256xf32, #tpu.memory_space<vmem>>, vector<128x256xf32>
      tpu.vector_store %arg8[%c0_20, %c0_21], %29 {strides = array<i32>} : memref<128x256xf32, #tpu.memory_space<vmem>>, vector<128x256xf32>,
    } else {
    }
    %c0_2 = arith.constant 0 : index
    %c0_3 = arith.constant 0 : index
    %c0_4 = arith.constant 0 : index
    %4 = vector.load %arg3[%c0_2, %c0_3, %c0_4] : memref<1x256x512xbf16, #tpu.memory_space<vmem>>, vector<1x256x512xbf16>
    %5 = vector.shape_cast %4 : vector<1x256x512xbf16> to vector<256x512xbf16>
    %cst = arith.constant dense<0.000000e+00> : vector<128x512xf32>
    %6 = tpu.matmul %0, %5, %cst {dimension_numbers = #tpu.dot_dimension_numbers<[1], [0], [0], [1], [0, 0, 1, 1], [], []>} : vector<128x256xbf16>, vector<256x512xbf16>, vector<128x512xf32> -> vector<128x512xf32>
    %7 = vector.extract_strided_slice %6 {offsets = [0, 0], sizes = [128, 256], strides = [1, 1]} : vector<128x512xf32> to vector<128x256xf32>
    %8 = vector.extract_strided_slice %6 {offsets = [0, 256], sizes = [128, 256], strides = [1, 1]} : vector<128x512xf32> to vector<128x256xf32>
    %9 = arith.negf %7 : vector<128x256xf32>
    %10 = math.exp %9 : vector<128x256xf32>
    %cst_5 = arith.constant 1.000000e+00 : f32
    %11 = vector.broadcast %cst_5 : f32 to vector<128x256xf32>
    %12 = arith.addf %11, %10 : vector<128x256xf32>
    %13 = arith.divf %11, %12 : vector<128x256xf32>
    %14 = arith.mulf %7, %13 : vector<128x256xf32>
    %15 = arith.mulf %14, %8 : vector<128x256xf32>
    %c0_6 = arith.constant 0 : index
    %c0_7 = arith.constant 0 : index
    %16 = vector.load %arg8[%c0_6, %c0_7] : memref<128x256xf32, #tpu.memory_space<vmem>>, vector<128x256xf32>
    %17 = arith.truncf %15 : vector<128x256xf32> to vector<128x256xbf16>
    %c0_8 = arith.constant 0 : index
    %c0_9 = arith.constant 0 : index
    %18 = vector.load %arg4[%c0_8, %c0_9] : memref<256x256xbf16, #tpu.memory_space<vmem>>, vector<256x256xbf16>
    %cst_10 = arith.constant dense<0.000000e+00> : vector<128x256xf32>
    %19 = tpu.matmul %17, %18, %cst_10 {dimension_numbers = #tpu.dot_dimension_numbers<[1], [0], [0], [1], [0, 0, 1, 1], [], []>} : vector<128x256xbf16>, vector<256x256xbf16>, vector<128x256xf32> -> vector<128x256xf32>
    %20 = arith.addf %16, %19 : vector<128x256xf32>
    %c0_11 = arith.constant 0 : index
    %c0_12 = arith.constant 0 : index
    %21 = vector.load %arg8[%c0_11, %c0_12] : memref<128x256xf32, #tpu.memory_space<vmem>>, vector<128x256xf32>
    tpu.vector_store %arg8[%c0_11, %c0_12], %20 {strides = array<i32>} : memref<128x256xf32, #tpu.memory_space<vmem>>, vector<128x256xf32>,
    %c1_i32 = arith.constant 1 : i32
    %22 = arith.cmpi eq, %arg1, %c1_i32 : i32
    %23 = arith.extui %22 : i1 to i32
    %c0_i32_13 = arith.constant 0 : i32
    %24 = arith.cmpi ne, %23, %c0_i32_13 : i32
    scf.if %24 {
      %c0_14 = arith.constant 0 : index
      %c0_15 = arith.constant 0 : index
      %25 = vector.load %arg8[%c0_14, %c0_15] : memref<128x256xf32, #tpu.memory_space<vmem>>, vector<128x256xf32>
      %26 = arith.truncf %25 : vector<128x256xf32> to vector<128x256xbf16>
      %c0_16 = arith.constant 0 : index
      %c0_17 = arith.constant 0 : index
      %27 = vector.load %arg7[%c0_16, %c0_17] : memref<128x256xbf16, #tpu.memory_space<vmem>>, vector<128x256xbf16>
      tpu.vector_store %arg7[%c0_16, %c0_17], %26 {strides = array<i32>} : memref<128x256xbf16, #tpu.memory_space<vmem>>, vector<128x256xbf16>,
    } else {
    }
    return
  }
  func.func @transform_0(%arg0: i32, %arg1: i32) -> (i32, i32) {
    %c0_i32 = arith.constant 0 : i32
    %c0_i32_0 = arith.constant 0 : i32
    return %arg0, %c0_i32 : i32, i32
  }
  func.func @transform_1(%arg0: i32, %arg1: i32) -> (i32, i32, i32) {
    %c0_i32 = arith.constant 0 : i32
    %c0_i32_0 = arith.constant 0 : i32
    %c0_i32_1 = arith.constant 0 : i32
    return %arg1, %c0_i32, %c0_i32_0 : i32, i32, i32
  }
  func.func @transform_2(%arg0: i32, %arg1: i32) -> (i32, i32) {
    %c0_i32 = arith.constant 0 : i32
    %c0_i32_0 = arith.constant 0 : i32
    return %arg1, %c0_i32 : i32, i32
  }
  func.func @transform_3(%arg0: i32, %arg1: i32) -> (i32, i32) {
    %c0_i32 = arith.constant 0 : i32
    %c0_i32_0 = arith.constant 0 : i32
    %c0_i32_1 = arith.constant 0 : i32
    return %c0_i32, %c0_i32_0 : i32, i32
  }
  func.func @transform_4(%arg0: i32, %arg1: i32) -> (i32, i32) {
    %c0_i32 = arith.constant 0 : i32
    %c0_i32_0 = arith.constant 0 : i32
    %c0_i32_1 = arith.constant 0 : i32
    return %c0_i32, %c0_i32_0 : i32, i32
  }
  func.func @transform_5(%arg0: i32, %arg1: i32) -> (i32, i32) {
    %c0_i32 = arith.constant 0 : i32
    %c0_i32_0 = arith.constant 0 : i32
    return %arg0, %c0_i32 : i32, i32
  }
}

</mosaic_0001>

<llo_original>
// kernel: _customized_mlp_call.1
$region0: #{_customized_mlp_call.1}
  #allocation0 [shape = 'u32[]', space=smem, size = 0x4, offset = 0x4, fixed_abs, tag = 'smem constant byte address 0x4 - core index']
  #allocation1 [shape = 'u32[144,128]{1,0:T(1,128)}', space=vmem, size = 0x12000, scoped, tag = 'internal scratch']
  #allocation2 [shape = 'f32[128,256]{1,0:T(8,128)}', space=vmem, size = 0x20000, scoped, tag = 'scratch operand']
  %s0 = inlined_call_operand.hbm [shape: bf16[256,256], index: 0, kind: input, shape index: {}]
  %s1 = inlined_call_operand.hbm [shape: bf16[2,256,512], index: 1, kind: input, shape index: {}]
  %s2 = inlined_call_operand.hbm [shape: bf16[512,256], index: 2, kind: input, shape index: {}]
  %s3 = inlined_call_operand.hbm [shape: bf16[256,128], index: 3, kind: input, shape index: {}]
  %s4 = inlined_call_operand.hbm [shape: bf16[128,256], index: 4, kind: input, shape index: {}]
  %s5 = inlined_call_operand.hbm [shape: bf16[256,256], index: 5, kind: output, shape index: {}]
  %s6 = sld [smem:[#allocation0]]
  $region81: #{_customized_mlp_call.1} parent=0
    _
  %s8 = ssub.s32 1, %s6
  %s9 = scalar_select 0, %s8, %s6
  $region1: #{_customized_mlp_call.1} parent=0
    #allocation3 [shape = 'u8[131072]{0}', space=vmem, size = 0x20000, scoped, tag = 'input window, operand 0']
    #allocation4 [shape = 's32[2]{0}', space=sflag, size = 0x8, scoped, tag = 'scoped memory for _customized_mlp_call.1']
    #allocation5 [shape = 's32[2]{0}', space=sflag, size = 0x8, scoped, tag = 'scoped memory for _customized_mlp_call.1']
    #allocation6 [shape = 'u8[524288]{0}', space=vmem, size = 0x80000, scoped, tag = 'input window, operand 1']
    #allocation7 [shape = 's32[2]{0}', space=sflag, size = 0x8, scoped, tag = 'scoped memory for _customized_mlp_call.1']
    #allocation8 [shape = 'u8[262144]{0}', space=vmem, size = 0x40000, scoped, tag = 'input window, operand 2']
    #allocation9 [shape = 'u8[65536]{0}', space=vmem, size = 0x10000, scoped, tag = 'input window, operand 3, single buffered']
    #allocation10 [shape = 's32[1]{0}', space=sflag, size = 0x4, scoped, tag = 'scoped memory for _customized_mlp_call.1']
    #allocation11 [shape = 'u8[65536]{0}', space=vmem, size = 0x10000, scoped, tag = 'input window, operand 4, single buffered']
    #allocation12 [shape = 'u8[131072]{0}', space=vmem, size = 0x20000, scoped, tag = 'output window, operand 0']
    %10 = vsyncpa [#allocation4], 0
    %s11 = scalar_lea.sflag [#allocation4], 1
    %12 = vsyncpa %s11, 0
    %13 = vsyncpa [#allocation7], 0
    %s14 = scalar_lea.sflag [#allocation7], 1
    %15 = vsyncpa %s14, 0
    %16 = vsyncpa [#allocation10], 0
    %17 = vsyncpa [#allocation5], 0
    %s18 = scalar_lea.sflag [#allocation5], 1
    %19 = vsyncpa %s18, 0
    loop: start=0, step=1, limit=6
    $region2: #{_customized_mlp_call.1} parent=1 // loop_pre_header
      _
    $region3: #{_customized_mlp_call.1} parent=1 // loop_header
      %s21 = sphi 0, %s25
      %p22 = scmp.ge.s32.totalorder %s21, 6
      %s28 = sphi 0, %s40
      %s29 = sphi 0, %s36
      %s30 = sphi 0, %s28
      %s31 = sphi 0, %s29
      %s32 = sphi 0, %s30
      %s33 = sphi 0, %s31
      %s43 = sphi 0, %s45
      %s46 = sphi 0, %s43
      %s47 = sphi 0, %s46
      %s63 = sphi 0, %s47
      %s69 = sphi 0, %s71
      %s72 = sphi 0, %s69
      %s73 = sphi 0, %s72
      %s89 = sphi 0, %s73
      %s95 = sphi 0, %s97
      %s98 = sphi 0, %s95
      %s99 = sphi 0, %s98
      %s115 = sphi 0, %s99
      %s119 = sphi 0, %s119
      %s121 = sphi 0, %s119
      %s122 = sphi 0, %s121
      %s136 = sphi 0, %s122
      %s140 = sphi 0, %s140
      %s142 = sphi 0, %s140
      %s143 = sphi 0, %s142
      %s157 = sphi 0, %s143
      %s163 = sphi 0, %s165
      %s166 = sphi 0, %s163
      %s167 = sphi 0, %s166
      %s183 = sphi 0, %s167
    $region4: #{_customized_mlp_call.1} parent=1 // loop_header_branch
      %24 = sbr.rel (%p22) target = $region8
    $region5: #{_customized_mlp_call.1} parent=1 // loop_body
      %s26 = ssub.s32 %s21, 1
      %s27 = ssub.s32 %s21, 2
      %s34 = sadd.s32 1, %s29
      %p35 = scmp.ge.s32.totalorder %s34, 2
      %s36 = scalar_select %p35, 0, %s34
      %s37 = sadd.s32 1, %s28
      %s38 = scalar_select %p35, %s37, %s28
      %p39 = scmp.ge.s32.totalorder %s38, 2
      %s40 = scalar_select %p39, 0, %s38
      %s41 = ssub.s32 %s28, %s40
      %p42 = scmp.eq.s32.totalorder %s41, 0
      %s44 = sadd.s32 %s43, 1
      %s45 = scalar_select %p42, %s43, %s44
      %p48 = pneg %p42
      %p49 = scmp.eq.s32.totalorder %s21, 3
      %p50 = por %p48, %p49
      %p51 = scmp.ne.s32.totalorder %s43, %s46
      %p52 = scmp.eq.s32.totalorder %s21, 0
      %p53 = por %p51, %p52
      %p54 = scmp.ne.s32.totalorder %s43, %s46
      %p55 = scmp.eq.s32.totalorder %s26, 3
      %p56 = por %p54, %p55
      %p57 = scmp.ne.s32.totalorder %s46, %s47
      %p58 = scmp.eq.s32.totalorder %s26, 0
      %p59 = por %p57, %p58
      %p60 = scmp.ne.s32.totalorder %s46, %s47
      %p61 = scmp.eq.s32.totalorder %s27, 3
      %p62 = por %p60, %p61
      %p64 = scmp.ne.s32.totalorder %s47, %s63
      %p65 = scmp.eq.s32.totalorder %s27, 0
      %p66 = por %p64, %p65
      %s67 = ssub.s32 %s29, %s36
      %p68 = scmp.eq.s32.totalorder %s67, 0
      %s70 = sadd.s32 %s69, 1
      %s71 = scalar_select %p68, %s69, %s70
      %p74 = pneg %p68
      %p75 = scmp.eq.s32.totalorder %s21, 3
      %p76 = por %p74, %p75
      %p77 = scmp.ne.s32.totalorder %s69, %s72
      %p78 = scmp.eq.s32.totalorder %s21, 0
      %p79 = por %p77, %p78
      %p80 = scmp.ne.s32.totalorder %s69, %s72
      %p81 = scmp.eq.s32.totalorder %s26, 3
      %p82 = por %p80, %p81
      %p83 = scmp.ne.s32.totalorder %s72, %s73
      %p84 = scmp.eq.s32.totalorder %s26, 0
      %p85 = por %p83, %p84
      %p86 = scmp.ne.s32.totalorder %s72, %s73
      %p87 = scmp.eq.s32.totalorder %s27, 3
      %p88 = por %p86, %p87
      %p90 = scmp.ne.s32.totalorder %s73, %s89
      %p91 = scmp.eq.s32.totalorder %s27, 0
      %p92 = por %p90, %p91
      %s93 = ssub.s32 %s29, %s36
      %p94 = scmp.eq.s32.totalorder %s93, 0
      %s96 = sadd.s32 %s95, 1
      %s97 = scalar_select %p94, %s95, %s96
      %p100 = pneg %p94
      %p101 = scmp.eq.s32.totalorder %s21, 3
      %p102 = por %p100, %p101
      %p103 = scmp.ne.s32.totalorder %s95, %s98
      %p104 = scmp.eq.s32.totalorder %s21, 0
      %p105 = por %p103, %p104
      %p106 = scmp.ne.s32.totalorder %s95, %s98
      %p107 = scmp.eq.s32.totalorder %s26, 3
      %p108 = por %p106, %p107
      %p109 = scmp.ne.s32.totalorder %s98, %s99
      %p110 = scmp.eq.s32.totalorder %s26, 0
      %p111 = por %p109, %p110
      %p112 = scmp.ne.s32.totalorder %s98, %s99
      %p113 = scmp.eq.s32.totalorder %s27, 3
      %p114 = por %p112, %p113
      %p116 = scmp.ne.s32.totalorder %s99, %s115
      %p117 = scmp.eq.s32.totalorder %s27, 0
      %p118 = por %p116, %p117
      %s120 = sadd.s32 %s119, 1
      %p123 = scmp.eq.s32.totalorder %s21, 3
      %p124 = scmp.ne.s32.totalorder %s119, %s121
      %p125 = scmp.eq.s32.totalorder %s21, 0
      %p126 = por %p124, %p125
      %p127 = scmp.ne.s32.totalorder %s119, %s121
      %p128 = scmp.eq.s32.totalorder %s26, 3
      %p129 = por %p127, %p128
      %p130 = scmp.ne.s32.totalorder %s121, %s122
      %p131 = scmp.eq.s32.totalorder %s26, 0
      %p132 = por %p130, %p131
      %p133 = scmp.ne.s32.totalorder %s121, %s122
      %p134 = scmp.eq.s32.totalorder %s27, 3
      %p135 = por %p133, %p134
      %p137 = scmp.ne.s32.totalorder %s122, %s136
      %p138 = scmp.eq.s32.totalorder %s27, 0
      %p139 = por %p137, %p138
      %s141 = sadd.s32 %s140, 1
      %p144 = scmp.eq.s32.totalorder %s21, 3
      %p145 = scmp.ne.s32.totalorder %s140, %s142
      %p146 = scmp.eq.s32.totalorder %s21, 0
      %p147 = por %p145, %p146
      %p148 = scmp.ne.s32.totalorder %s140, %s142
      %p149 = scmp.eq.s32.totalorder %s26, 3
      %p150 = por %p148, %p149
      %p151 = scmp.ne.s32.totalorder %s142, %s143
      %p152 = scmp.eq.s32.totalorder %s26, 0
      %p153 = por %p151, %p152
      %p154 = scmp.ne.s32.totalorder %s142, %s143
      %p155 = scmp.eq.s32.totalorder %s27, 3
      %p156 = por %p154, %p155
      %p158 = scmp.ne.s32.totalorder %s143, %s157
      %p159 = scmp.eq.s32.totalorder %s27, 0
      %p160 = por %p158, %p159
      %s161 = ssub.s32 %s28, %s40
      %p162 = scmp.eq.s32.totalorder %s161, 0
      %s164 = sadd.s32 %s163, 1
      %s165 = scalar_select %p162, %s163, %s164
      %p168 = pneg %p162
      %p169 = scmp.eq.s32.totalorder %s21, 3
      %p170 = por %p168, %p169
      %p171 = scmp.ne.s32.totalorder %s163, %s166
      %p172 = scmp.eq.s32.totalorder %s21, 0
      %p173 = por %p171, %p172
      %p174 = scmp.ne.s32.totalorder %s163, %s166
      %p175 = scmp.eq.s32.totalorder %s26, 3
      %p176 = por %p174, %p175
      %p177 = scmp.ne.s32.totalorder %s166, %s167
      %p178 = scmp.eq.s32.totalorder %s26, 0
      %p179 = por %p177, %p178
      %p180 = scmp.ne.s32.totalorder %s166, %s167
      %p181 = scmp.eq.s32.totalorder %s27, 3
      %p182 = por %p180, %p181
      %p184 = scmp.ne.s32.totalorder %s167, %s183
      %p185 = scmp.eq.s32.totalorder %s27, 0
      %p186 = por %p184, %p185
      %p187 = scmp.le.s32.totalorder 1, %s21
      %p188 = scmp.lt.s32.totalorder %s21, 5
      %p189 = pnand %p187, %p188
      %p190 = pneg %p189
      // Predicated region
      $region9: #{_customized_mlp_call.1} parent=5 // pred_check
        _
      $region10: #{_customized_mlp_call.1} parent=5 // pred_check_branch
        %192 = sbr.rel (%p189) target = $region12
      $region11: #{_customized_mlp_call.1} parent=5 // pred_region
        %s193 = ssub.s32 %s21, 1
        // Predicated region
        $region13: #{_customized_mlp_call.1} parent=11 // pred_check
          %p194 = pneg %p132
        $region14: #{_customized_mlp_call.1} parent=11 // pred_check_branch
          %196 = sbr.rel (%p194) target = $region16
        $region15: #{_customized_mlp_call.1} parent=11 // pred_region
          %s198 = ssub.s32 2048, 2048
          %199 = vsyncadd [#allocation10], %s198
          %s200 = sshll.u32 [#allocation9], 4
          %s201 = int_to_ptr.vmem [resolvable:$true] %s200
          %206 = dma.hbm_to_vmem [thread:$0]  %s3, 2048, %s201, [#allocation10], 64, 64, 4
        $region16: #{_customized_mlp_call.1} parent=11 // pred_fallthru
          _
        // Predicated region
        $region17: #{_customized_mlp_call.1} parent=11 // pred_check
          %p207 = pneg %p153
        $region18: #{_customized_mlp_call.1} parent=11 // pred_check_branch
          %209 = sbr.rel (%p207) target = $region20
        $region19: #{_customized_mlp_call.1} parent=11 // pred_region
          %s211 = ssub.s32 2048, 2048
          %212 = vsyncadd [#allocation10], %s211
          %s213 = sshll.u32 [#allocation11], 4
          %s214 = int_to_ptr.vmem [resolvable:$true] %s213
          %219 = dma.hbm_to_vmem [thread:$0]  %s4, 2048, %s214, [#allocation10], 128, 128, 8
        $region20: #{_customized_mlp_call.1} parent=11 // pred_fallthru
          _
      $region12: #{_customized_mlp_call.1} parent=5 // pred_fallthru
        _
      %p220 = scmp.lt.s32.totalorder %s21, 4
      // Predicated region
      $region21: #{_customized_mlp_call.1} parent=5 // pred_check
        %p221 = pneg %p220
      $region22: #{_customized_mlp_call.1} parent=5 // pred_check_branch
        %223 = sbr.rel (%p221) target = $region24
      $region23: #{_customized_mlp_call.1} parent=5 // pred_region
        // Predicated region
        $region25: #{_customized_mlp_call.1} parent=23 // pred_check
          %p224 = pneg %p53
        $region26: #{_customized_mlp_call.1} parent=23 // pred_check_branch
          %226 = sbr.rel (%p224) target = $region28
        $region27: #{_customized_mlp_call.1} parent=23 // pred_region
          %s227 = sand.u32 %s43, 1
          %s228 = scalar_lea.sflag [#allocation4], %s227
          %s229 = sand.u32 %s43, 1
          %s230 = smul.addr %s229, 128
          %s231 = scalar_lea.vmem [#allocation3], %s230
          %s232 = smul.u32 16, %s28
          %s234 = ssub.s32 2048, 2048
          %235 = vsyncadd %s228, %s234
          %s236 = smul.addr %s232, 2
          %s237 = smul.addr %s236, 64
          %s238 = scalar_lea.hbm %s0, %s237
          %s239 = sshll.u32 %s231, 4
          %s240 = int_to_ptr.vmem [resolvable:$true] %s239
          %245 = dma.hbm_to_vmem [thread:$0]  %s238, 2048, %s240, %s228, 128, 128, 8
        $region28: #{_customized_mlp_call.1} parent=23 // pred_fallthru
          _
        // Predicated region
        $region29: #{_customized_mlp_call.1} parent=23 // pred_check
          %p246 = pneg %p79
        $region30: #{_customized_mlp_call.1} parent=23 // pred_check_branch
          %248 = sbr.rel (%p246) target = $region32
        $region31: #{_customized_mlp_call.1} parent=23 // pred_region
          %s249 = sand.u32 %s21, 1
          %s250 = scalar_lea.sflag [#allocation7], %s249
          %s251 = sand.u32 %s69, 1
          %s252 = smul.addr %s251, 512
          %s253 = scalar_lea.vmem [#allocation6], %s252
          %s255 = ssub.s32 8192, 8192
          %256 = vsyncadd %s250, %s255
          %s257 = smul.addr %s29, 128
          %s258 = smul.addr %s257, 64
          %s259 = scalar_lea.hbm %s1, %s258
          %s260 = sshll.u32 %s253, 4
          %s261 = int_to_ptr.vmem [resolvable:$true] %s260
          %266 = dma.hbm_to_vmem [thread:$0]  %s259, 8192, %s261, %s250, 256, 256, 16
        $region32: #{_customized_mlp_call.1} parent=23 // pred_fallthru
          _
        // Predicated region
        $region33: #{_customized_mlp_call.1} parent=23 // pred_check
          %p267 = pneg %p105
        $region34: #{_customized_mlp_call.1} parent=23 // pred_check_branch
          %269 = sbr.rel (%p267) target = $region36
        $region35: #{_customized_mlp_call.1} parent=23 // pred_region
          %s270 = sand.u32 %s21, 1
          %s271 = scalar_lea.sflag [#allocation7], %s270
          %s272 = sand.u32 %s95, 1
          %s273 = smul.addr %s272, 256
          %s274 = scalar_lea.vmem [#allocation8], %s273
          %s275 = smul.u32 32, %s29
          %s277 = ssub.s32 4096, 4096
          %278 = vsyncadd %s271, %s277
          %s279 = smul.addr %s275, 2
          %s280 = smul.addr %s279, 64
          %s281 = scalar_lea.hbm %s2, %s280
          %s282 = sshll.u32 %s274, 4
          %s283 = int_to_ptr.vmem [resolvable:$true] %s282
          %288 = dma.hbm_to_vmem [thread:$0]  %s281, 4096, %s283, %s271, 128, 128, 8
        $region36: #{_customized_mlp_call.1} parent=23 // pred_fallthru
          _
      $region24: #{_customized_mlp_call.1} parent=5 // pred_fallthru
        _
      %p289 = scmp.le.s32.totalorder 1, %s21
      %p290 = scmp.lt.s32.totalorder %s21, 5
      %p291 = pnand %p289, %p290
      %p292 = pneg %p291
      // Predicated region
      $region37: #{_customized_mlp_call.1} parent=5 // pred_check
        _
      $region38: #{_customized_mlp_call.1} parent=5 // pred_check_branch
        %294 = sbr.rel (%p291) target = $region40
      $region39: #{_customized_mlp_call.1} parent=5 // pred_region
        %s295 = ssub.s32 %s21, 1
        %s296 = sand.u32 %s46, 1
        %s297 = scalar_lea.sflag [#allocation4], %s296
        %s298 = sand.u32 %s46, 1
        %s299 = smul.addr %s298, 128
        %s300 = scalar_lea.vmem [#allocation3], %s299
        // Predicated region
        $region41: #{_customized_mlp_call.1} parent=39 // pred_check
          %p301 = pneg %p59
        $region42: #{_customized_mlp_call.1} parent=39 // pred_check_branch
          %303 = sbr.rel (%p301) target = $region44
        $region43: #{_customized_mlp_call.1} parent=39 // pred_region
          %304 = dma.done %s297, 2048
        $region44: #{_customized_mlp_call.1} parent=39 // pred_fallthru
          _
        %s305 = sand.u32 %s26, 1
        %s306 = scalar_lea.sflag [#allocation7], %s305
        %s307 = sand.u32 %s72, 1
        %s308 = smul.addr %s307, 512
        %s309 = scalar_lea.vmem [#allocation6], %s308
        // Predicated region
        $region45: #{_customized_mlp_call.1} parent=39 // pred_check
          %p310 = pneg %p85
        $region46: #{_customized_mlp_call.1} parent=39 // pred_check_branch
          %312 = sbr.rel (%p310) target = $region48
        $region47: #{_customized_mlp_call.1} parent=39 // pred_region
          %313 = dma.done %s306, 8192
        $region48: #{_customized_mlp_call.1} parent=39 // pred_fallthru
          _
        %s314 = sand.u32 %s26, 1
        %s315 = scalar_lea.sflag [#allocation7], %s314
        %s316 = sand.u32 %s98, 1
        %s317 = smul.addr %s316, 256
        %s318 = scalar_lea.vmem [#allocation8], %s317
        // Predicated region
        $region49: #{_customized_mlp_call.1} parent=39 // pred_check
          %p319 = pneg %p111
        $region50: #{_customized_mlp_call.1} parent=39 // pred_check_branch
          %321 = sbr.rel (%p319) target = $region52
        $region51: #{_customized_mlp_call.1} parent=39 // pred_region
          %322 = dma.done %s315, 4096
        $region52: #{_customized_mlp_call.1} parent=39 // pred_fallthru
          _
        // Predicated region
        $region53: #{_customized_mlp_call.1} parent=39 // pred_check
          %p323 = pneg %p132
        $region54: #{_customized_mlp_call.1} parent=39 // pred_check_branch
          %325 = sbr.rel (%p323) target = $region56
        $region55: #{_customized_mlp_call.1} parent=39 // pred_region
          %326 = dma.done [#allocation10], 2048
        $region56: #{_customized_mlp_call.1} parent=39 // pred_fallthru
          _
        // Predicated region
        $region57: #{_customized_mlp_call.1} parent=39 // pred_check
          %p327 = pneg %p153
        $region58: #{_customized_mlp_call.1} parent=39 // pred_check_branch
          %329 = sbr.rel (%p327) target = $region60
        $region59: #{_customized_mlp_call.1} parent=39 // pred_region
          %330 = dma.done [#allocation10], 2048
        $region60: #{_customized_mlp_call.1} parent=39 // pred_fallthru
          _
        %s331 = sand.u32 %s46, 1
        %s332 = scalar_lea.sflag [#allocation4], %s331
        %s333 = sand.u32 %s46, 1
        %s334 = smul.addr %s333, 128
        %s335 = scalar_lea.vmem [#allocation3], %s334
        %p336 = pneg %p59
        %p337 = pneg %p56
        %s338 = sand.u32 %s26, 1
        %s339 = scalar_lea.sflag [#allocation7], %s338
        %s340 = sand.u32 %s72, 1
        %s341 = smul.addr %s340, 512
        %s342 = scalar_lea.vmem [#allocation6], %s341
        %p343 = pneg %p85
        %p344 = pneg %p82
        %s345 = sand.u32 %s26, 1
        %s346 = scalar_lea.sflag [#allocation7], %s345
        %s347 = sand.u32 %s98, 1
        %s348 = smul.addr %s347, 256
        %s349 = scalar_lea.vmem [#allocation8], %s348
        %p350 = pneg %p111
        %p351 = pneg %p108
        %p352 = pneg %p132
        %p353 = pneg %p129
        %p354 = pneg %p153
        %p355 = pneg %p150
        %p356 = pneg %p179
        %p357 = pneg %p176
        %s358 = sand.u32 %s166, 1
        %s359 = scalar_lea.sflag [#allocation5], %s358
        %s360 = sand.u32 %s166, 1
        %s361 = smul.addr %s360, 128
        %s362 = scalar_lea.vmem [#allocation12], %s361
        %s363 = smul.u32 16, %s30
        %s364 = smul.u32 32, %s31
        %s365 = smul.u32 16, %s30
        %v367 = vld [vmem:[%s300] sm:$0xff]
        %v368 = vld [vmem:[%s300 + $0x8] sm:$0xff]
        %v369 = vld [vmem:[%s300 + $0x10] sm:$0xff]
        %v370 = vld [vmem:[%s300 + $0x18] sm:$0xff]
        %v371 = vld [vmem:[%s300 + $0x20] sm:$0xff]
        %v372 = vld [vmem:[%s300 + $0x28] sm:$0xff]
        %v373 = vld [vmem:[%s300 + $0x30] sm:$0xff]
        %v374 = vld [vmem:[%s300 + $0x38] sm:$0xff]
        %v375 = vld [vmem:[%s300 + $0x40] sm:$0xff]
        %v376 = vld [vmem:[%s300 + $0x48] sm:$0xff]
        %v377 = vld [vmem:[%s300 + $0x50] sm:$0xff]
        %v378 = vld [vmem:[%s300 + $0x58] sm:$0xff]
        %v379 = vld [vmem:[%s300 + $0x60] sm:$0xff]
        %v380 = vld [vmem:[%s300 + $0x68] sm:$0xff]
        %v381 = vld [vmem:[%s300 + $0x70] sm:$0xff]
        %v382 = vld [vmem:[%s300 + $0x78] sm:$0xff]
        %p383 = scmp.eq.s32.totalorder %s31, 0
        // Predicated region
        $region61: #{_customized_mlp_call.1} parent=39 // pred_check
          %p384 = pneg %p383
        $region62: #{_customized_mlp_call.1} parent=39 // pred_check_branch
          %386 = sbr.rel (%p384) target = $region64
        $region63: #{_customized_mlp_call.1} parent=39 // pred_region
          %v387 = vld [vmem:[#allocation9] sm:$0xf]
          %v388 = vld [vmem:[#allocation9 + $0x4] sm:$0xf]
          %v389 = vld [vmem:[#allocation9 + $0x8] sm:$0xf]
          %v390 = vld [vmem:[#allocation9 + $0xc] sm:$0xf]
          %v391 = vld [vmem:[#allocation9 + $0x10] sm:$0xf]
          %v392 = vld [vmem:[#allocation9 + $0x14] sm:$0xf]
          %v393 = vld [vmem:[#allocation9 + $0x18] sm:$0xf]
          %v394 = vld [vmem:[#allocation9 + $0x1c] sm:$0xf]
          %v395 = vld [vmem:[#allocation9 + $0x20] sm:$0xf]
          %v396 = vld [vmem:[#allocation9 + $0x24] sm:$0xf]
          %v397 = vld [vmem:[#allocation9 + $0x28] sm:$0xf]
          %v398 = vld [vmem:[#allocation9 + $0x2c] sm:$0xf]
          %v399 = vld [vmem:[#allocation9 + $0x30] sm:$0xf]
          %v400 = vld [vmem:[#allocation9 + $0x34] sm:$0xf]
          %v401 = vld [vmem:[#allocation9 + $0x38] sm:$0xf]
          %v402 = vld [vmem:[#allocation9 + $0x3c] sm:$0xf]
          %v403 = vld [vmem:[#allocation9 + $0x40] sm:$0xf]
          %v404 = vld [vmem:[#allocation9 + $0x44] sm:$0xf]
          %v405 = vld [vmem:[#allocation9 + $0x48] sm:$0xf]
          %v406 = vld [vmem:[#allocation9 + $0x4c] sm:$0xf]
          %v407 = vld [vmem:[#allocation9 + $0x50] sm:$0xf]
          %v408 = vld [vmem:[#allocation9 + $0x54] sm:$0xf]
          %v409 = vld [vmem:[#allocation9 + $0x58] sm:$0xf]
          %v410 = vld [vmem:[#allocation9 + $0x5c] sm:$0xf]
          %v411 = vld [vmem:[#allocation9 + $0x60] sm:$0xf]
          %v412 = vld [vmem:[#allocation9 + $0x64] sm:$0xf]
          %v413 = vld [vmem:[#allocation9 + $0x68] sm:$0xf]
          %v414 = vld [vmem:[#allocation9 + $0x6c] sm:$0xf]
          %v415 = vld [vmem:[#allocation9 + $0x70] sm:$0xf]
          %v416 = vld [vmem:[#allocation9 + $0x74] sm:$0xf]
          %v417 = vld [vmem:[#allocation9 + $0x78] sm:$0xf]
          %v418 = vld [vmem:[#allocation9 + $0x7c] sm:$0xf]
          %v435 = vunpack.c.l.b16 %v367
          %v436 = vunpack.c.h.b16 %v367
          %v437 = vunpack.c.l.b16 %v368
          %v438 = vunpack.c.h.b16 %v368
          %v439 = vunpack.c.l.b16 %v369
          %v440 = vunpack.c.h.b16 %v369
          %v441 = vunpack.c.l.b16 %v370
          %v442 = vunpack.c.h.b16 %v370
          %v443 = vunpack.c.l.b16 %v371
          %v444 = vunpack.c.h.b16 %v371
          %v445 = vunpack.c.l.b16 %v372
          %v446 = vunpack.c.h.b16 %v372
          %v447 = vunpack.c.l.b16 %v373
          %v448 = vunpack.c.h.b16 %v373
          %v449 = vunpack.c.l.b16 %v374
          %v450 = vunpack.c.h.b16 %v374
          %v451 = vunpack.c.l.b16 %v375
          %v452 = vunpack.c.h.b16 %v375
          %v453 = vunpack.c.l.b16 %v376
          %v454 = vunpack.c.h.b16 %v376
          %v455 = vunpack.c.l.b16 %v377
          %v456 = vunpack.c.h.b16 %v377
          %v457 = vunpack.c.l.b16 %v378
          %v458 = vunpack.c.h.b16 %v378
          %v459 = vunpack.c.l.b16 %v379
          %v460 = vunpack.c.h.b16 %v379
          %v461 = vunpack.c.l.b16 %v380
          %v462 = vunpack.c.h.b16 %v380
          %v463 = vunpack.c.l.b16 %v381
          %v464 = vunpack.c.h.b16 %v381
          %v465 = vunpack.c.l.b16 %v382
          %v466 = vunpack.c.h.b16 %v382
          %v467 = vpack.c.b16 %v437, %v435
          %v468 = vpack.c.b16 %v438, %v436
          %v469 = vpack.c.b16 %v441, %v439
          %v470 = vpack.c.b16 %v442, %v440
          %v471 = vpack.c.b16 %v445, %v443
          %v472 = vpack.c.b16 %v446, %v444
          %v473 = vpack.c.b16 %v449, %v447
          %v474 = vpack.c.b16 %v450, %v448
          %v475 = vpack.c.b16 %v453, %v451
          %v476 = vpack.c.b16 %v454, %v452
          %v477 = vpack.c.b16 %v457, %v455
          %v478 = vpack.c.b16 %v458, %v456
          %v479 = vpack.c.b16 %v461, %v459
          %v480 = vpack.c.b16 %v462, %v460
          %v481 = vpack.c.b16 %v465, %v463
          %v482 = vpack.c.b16 %v466, %v464
          %v531 = vunpack.c.l.b16 %v387
          %v532 = vunpack.c.l.b16 %v388
          %v533 = vunpack.c.l.b16 %v389
          %v534 = vunpack.c.l.b16 %v390
          %v535 = vunpack.c.l.b16 %v391
          %v536 = vunpack.c.l.b16 %v392
          %v537 = vunpack.c.l.b16 %v393
          %v538 = vunpack.c.l.b16 %v394
          %v539 = vunpack.c.l.b16 %v395
          %v540 = vunpack.c.l.b16 %v396
          %v541 = vunpack.c.l.b16 %v397
          %v542 = vunpack.c.l.b16 %v398
          %v543 = vunpack.c.l.b16 %v399
          %v544 = vunpack.c.l.b16 %v400
          %v545 = vunpack.c.l.b16 %v401
          %v546 = vunpack.c.l.b16 %v402
          %v547 = vunpack.c.l.b16 %v403
          %v548 = vunpack.c.l.b16 %v404
          %v549 = vunpack.c.l.b16 %v405
          %v550 = vunpack.c.l.b16 %v406
          %v551 = vunpack.c.l.b16 %v407
          %v552 = vunpack.c.l.b16 %v408
          %v553 = vunpack.c.l.b16 %v409
          %v554 = vunpack.c.l.b16 %v410
          %v555 = vunpack.c.l.b16 %v411
          %v556 = vunpack.c.l.b16 %v412
          %v557 = vunpack.c.l.b16 %v413
          %v558 = vunpack.c.l.b16 %v414
          %v559 = vunpack.c.l.b16 %v415
          %v560 = vunpack.c.l.b16 %v416
          %v561 = vunpack.c.l.b16 %v417
          %v562 = vunpack.c.l.b16 %v418
          %v563 = vpack.c.b16 %v532, %v531
          %v564 = vpack.c.b16 %v534, %v533
          %v565 = vpack.c.b16 %v536, %v535
          %v566 = vpack.c.b16 %v538, %v537
          %v567 = vpack.c.b16 %v540, %v539
          %v568 = vpack.c.b16 %v542, %v541
          %v569 = vpack.c.b16 %v544, %v543
          %v570 = vpack.c.b16 %v546, %v545
          %v571 = vpack.c.b16 %v548, %v547
          %v572 = vpack.c.b16 %v550, %v549
          %v573 = vpack.c.b16 %v552, %v551
          %v574 = vpack.c.b16 %v554, %v553
          %v575 = vpack.c.b16 %v556, %v555
          %v576 = vpack.c.b16 %v558, %v557
          %v577 = vpack.c.b16 %v560, %v559
          %v578 = vpack.c.b16 %v562, %v561
          %595 = vmatprep.subr.bf16.mxu0 0
          %596 = vmatpush1.bf16.msra.mxu0 %v570
          %597 = vmatprep.subr.bf16.mxu0 0
          %598 = vmatpush1.bf16.msra.mxu0 %v569
          %599 = vmatprep.subr.bf16.mxu0 0
          %600 = vmatpush1.bf16.msra.mxu0 %v568
          %601 = vmatprep.subr.bf16.mxu0 0
          %602 = vmatpush1.bf16.msra.mxu0 %v567
          %603 = vmatprep.subr.bf16.mxu0 0
          %604 = vmatpush1.bf16.msra.mxu0 %v566
          %605 = vmatprep.subr.bf16.mxu0 0
          %606 = vmatpush1.bf16.msra.mxu0 %v565
          %607 = vmatprep.subr.bf16.mxu0 0
          %608 = vmatpush1.bf16.msra.mxu0 %v564
          %609 = vmatprep.subr.bf16.mxu0 0
          %610 = vmatpush1.bf16.msra.mxu0 %v563
          %611 = vmatprep.subr.bf16.mxu0 0
          %612 = vmatpush2.bf16.msra.mxu0 %v578
          %613 = vmatprep.subr.bf16.mxu0 0
          %614 = vmatpush2.bf16.msra.mxu0 %v577
          %615 = vmatprep.subr.bf16.mxu0 0
          %616 = vmatpush2.bf16.msra.mxu0 %v576
          %617 = vmatprep.subr.bf16.mxu0 0
          %618 = vmatpush2.bf16.msra.mxu0 %v575
          %619 = vmatprep.subr.bf16.mxu0 0
          %620 = vmatpush2.bf16.msra.mxu0 %v574
          %621 = vmatprep.subr.bf16.mxu0 0
          %622 = vmatpush2.bf16.msra.mxu0 %v573
          %623 = vmatprep.subr.bf16.mxu0 0
          %624 = vmatpush2.bf16.msra.mxu0 %v572
          %625 = vmatprep.subr.bf16.mxu0 0
          %626 = vmatpush2.bf16.msra.mxu0 %v571
          %627 = vmatprep.mubr.bf16.mxu0 %v468
          %628 = vmatmul.mubr.bf16.gmra.mxu0 %v467
          %v629 = vpop.f32.mrf.mxu0
          %v630 = vadd.f32 0.0, %v629
          %v631 = vpop.f32.mrf.mxu0
          %v632 = vpop.f32.mrf.mxu0
          %v633 = vadd.f32 0.0, %v632
          %v634 = vpop.f32.mrf.mxu0
          %635 = vmatprep.mubr.bf16.mxu0 %v470
          %636 = vmatmul.mubr.bf16.gmra.mxu0 %v469
          %v637 = vpop.f32.mrf.mxu0
          %v638 = vadd.f32 0.0, %v637
          %v639 = vpop.f32.mrf.mxu0
          %v640 = vpop.f32.mrf.mxu0
          %v641 = vadd.f32 0.0, %v640
          %v642 = vpop.f32.mrf.mxu0
          %643 = vmatprep.mubr.bf16.mxu0 %v472
          %644 = vmatmul.mubr.bf16.gmra.mxu0 %v471
          %v645 = vpop.f32.mrf.mxu0
          %v646 = vadd.f32 0.0, %v645
          %v647 = vpop.f32.mrf.mxu0
          %v648 = vpop.f32.mrf.mxu0
          %v649 = vadd.f32 0.0, %v648
          %v650 = vpop.f32.mrf.mxu0
          %651 = vmatprep.mubr.bf16.mxu0 %v474
          %652 = vmatmul.mubr.bf16.gmra.mxu0 %v473
          %v653 = vpop.f32.mrf.mxu0
          %v654 = vadd.f32 0.0, %v653
          %v655 = vpop.f32.mrf.mxu0
          %v656 = vpop.f32.mrf.mxu0
          %v657 = vadd.f32 0.0, %v656
          %v658 = vpop.f32.mrf.mxu0
          %659 = vmatprep.mubr.bf16.mxu0 %v476
          %660 = vmatmul.mubr.bf16.gmra.mxu0 %v475
          %v661 = vpop.f32.mrf.mxu0
          %v662 = vadd.f32 0.0, %v661
          %v663 = vpop.f32.mrf.mxu0
          %v664 = vpop.f32.mrf.mxu0
          %v665 = vadd.f32 0.0, %v664
          %v666 = vpop.f32.mrf.mxu0
          %667 = vmatprep.mubr.bf16.mxu0 %v478
          %668 = vmatmul.mubr.bf16.gmra.mxu0 %v477
          %v669 = vpop.f32.mrf.mxu0
          %v670 = vadd.f32 0.0, %v669
          %v671 = vpop.f32.mrf.mxu0
          %v672 = vpop.f32.mrf.mxu0
          %v673 = vadd.f32 0.0, %v672
          %v674 = vpop.f32.mrf.mxu0
          %675 = vmatprep.mubr.bf16.mxu0 %v480
          %676 = vmatmul.mubr.bf16.gmra.mxu0 %v479
          %v677 = vpop.f32.mrf.mxu0
          %v678 = vadd.f32 0.0, %v677
          %v679 = vpop.f32.mrf.mxu0
          %v680 = vpop.f32.mrf.mxu0
          %v681 = vadd.f32 0.0, %v680
          %v682 = vpop.f32.mrf.mxu0
          %683 = vmatprep.mubr.bf16.mxu0 %v482
          %684 = vmatmul.mubr.bf16.gmra.mxu0 %v481
          %v685 = vpop.f32.mrf.mxu0
          %v686 = vadd.f32 0.0, %v685
          %v687 = vpop.f32.mrf.mxu0
          %v688 = vpop.f32.mrf.mxu0
          %v689 = vadd.f32 0.0, %v688
          %v690 = vpop.f32.mrf.mxu0
          %691 = vdwg.mxu0
          %v692 = vpack.c.bf16 %v633, %v630
          %v693 = vpack.c.bf16 %v641, %v638
          %v694 = vpack.c.bf16 %v649, %v646
          %v695 = vpack.c.bf16 %v657, %v654
          %v696 = vpack.c.bf16 %v665, %v662
          %v697 = vpack.c.bf16 %v673, %v670
          %v698 = vpack.c.bf16 %v681, %v678
          %v699 = vpack.c.bf16 %v689, %v686
          %v700 = vld [vmem:[#allocation11] sm:$0xff]
          %v701 = vld [vmem:[#allocation11 + $0x8] sm:$0xff]
          %v702 = vld [vmem:[#allocation11 + $0x10] sm:$0xff]
          %v703 = vld [vmem:[#allocation11 + $0x18] sm:$0xff]
          %v704 = vld [vmem:[#allocation11 + $0x20] sm:$0xff]
          %v705 = vld [vmem:[#allocation11 + $0x28] sm:$0xff]
          %v706 = vld [vmem:[#allocation11 + $0x30] sm:$0xff]
          %v707 = vld [vmem:[#allocation11 + $0x38] sm:$0xff]
          %v708 = vld [vmem:[#allocation11 + $0x40] sm:$0xff]
          %v709 = vld [vmem:[#allocation11 + $0x48] sm:$0xff]
          %v710 = vld [vmem:[#allocation11 + $0x50] sm:$0xff]
          %v711 = vld [vmem:[#allocation11 + $0x58] sm:$0xff]
          %v712 = vld [vmem:[#allocation11 + $0x60] sm:$0xff]
          %v713 = vld [vmem:[#allocation11 + $0x68] sm:$0xff]
          %v714 = vld [vmem:[#allocation11 + $0x70] sm:$0xff]
          %v715 = vld [vmem:[#allocation11 + $0x78] sm:$0xff]
          %v732 = vunpack.c.l.b16 %v700
          %v733 = vunpack.c.h.b16 %v700
          %v734 = vunpack.c.l.b16 %v701
          %v735 = vunpack.c.h.b16 %v701
          %v736 = vunpack.c.l.b16 %v702
          %v737 = vunpack.c.h.b16 %v702
          %v738 = vunpack.c.l.b16 %v703
          %v739 = vunpack.c.h.b16 %v703
          %v740 = vunpack.c.l.b16 %v704
          %v741 = vunpack.c.h.b16 %v704
          %v742 = vunpack.c.l.b16 %v705
          %v743 = vunpack.c.h.b16 %v705
          %v744 = vunpack.c.l.b16 %v706
          %v745 = vunpack.c.h.b16 %v706
          %v746 = vunpack.c.l.b16 %v707
          %v747 = vunpack.c.h.b16 %v707
          %v748 = vunpack.c.l.b16 %v708
          %v749 = vunpack.c.h.b16 %v708
          %v750 = vunpack.c.l.b16 %v709
          %v751 = vunpack.c.h.b16 %v709
          %v752 = vunpack.c.l.b16 %v710
          %v753 = vunpack.c.h.b16 %v710
          %v754 = vunpack.c.l.b16 %v711
          %v755 = vunpack.c.h.b16 %v711
          %v756 = vunpack.c.l.b16 %v712
          %v757 = vunpack.c.h.b16 %v712
          %v758 = vunpack.c.l.b16 %v713
          %v759 = vunpack.c.h.b16 %v713
          %v760 = vunpack.c.l.b16 %v714
          %v761 = vunpack.c.h.b16 %v714
          %v762 = vunpack.c.l.b16 %v715
          %v763 = vunpack.c.h.b16 %v715
          %v764 = vpack.c.b16 %v734, %v732
          %v765 = vpack.c.b16 %v735, %v733
          %v766 = vpack.c.b16 %v738, %v736
          %v767 = vpack.c.b16 %v739, %v737
          %v768 = vpack.c.b16 %v742, %v740
          %v769 = vpack.c.b16 %v743, %v741
          %v770 = vpack.c.b16 %v746, %v744
          %v771 = vpack.c.b16 %v747, %v745
          %v772 = vpack.c.b16 %v750, %v748
          %v773 = vpack.c.b16 %v751, %v749
          %v774 = vpack.c.b16 %v754, %v752
          %v775 = vpack.c.b16 %v755, %v753
          %v776 = vpack.c.b16 %v758, %v756
          %v777 = vpack.c.b16 %v759, %v757
          %v778 = vpack.c.b16 %v762, %v760
          %v779 = vpack.c.b16 %v763, %v761
          %796 = vmatprep.subr.bf16.mxu0 %v779
          %797 = vmatpush1.bf16.msra.mxu0 %v778
          %798 = vmatprep.subr.bf16.mxu0 %v777
          %799 = vmatpush1.bf16.msra.mxu0 %v776
          %800 = vmatprep.subr.bf16.mxu0 %v775
          %801 = vmatpush1.bf16.msra.mxu0 %v774
          %802 = vmatprep.subr.bf16.mxu0 %v773
          %803 = vmatpush1.bf16.msra.mxu0 %v772
          %804 = vmatprep.subr.bf16.mxu0 %v771
          %805 = vmatpush1.bf16.msra.mxu0 %v770
          %806 = vmatprep.subr.bf16.mxu0 %v769
          %807 = vmatpush1.bf16.msra.mxu0 %v768
          %808 = vmatprep.subr.bf16.mxu0 %v767
          %809 = vmatpush1.bf16.msra.mxu0 %v766
          %810 = vmatprep.subr.bf16.mxu0 %v765
          %811 = vmatpush1.bf16.msra.mxu0 %v764
          %812 = vmatprep.subr.bf16.mxu0 0
          %813 = vmatpush2.bf16.msra.mxu0 0
          %814 = vmatprep.subr.bf16.mxu0 0
          %815 = vmatpush2.bf16.msra.mxu0 0
          %816 = vmatprep.subr.bf16.mxu0 0
          %817 = vmatpush2.bf16.msra.mxu0 0
          %818 = vmatprep.subr.bf16.mxu0 0
          %819 = vmatpush2.bf16.msra.mxu0 0
          %820 = vmatprep.subr.bf16.mxu0 0
          %821 = vmatpush2.bf16.msra.mxu0 0
          %822 = vmatprep.subr.bf16.mxu0 0
          %823 = vmatpush2.bf16.msra.mxu0 0
          %824 = vmatprep.subr.bf16.mxu0 0
          %825 = vmatpush2.bf16.msra.mxu0 0
          %826 = vmatprep.subr.bf16.mxu0 0
          %827 = vmatpush2.bf16.msra.mxu0 0
          %828 = vmatprep.mubr.bf16.mxu0 0
          %829 = vmatmul.mubr.bf16.gmra.mxu0 %v692
          %v830 = vpop.f32.mrf.mxu0
          %v831 = vadd.f32 0.0, %v830
          %v832 = vpop.f32.mrf.mxu0
          %v833 = vadd.f32 0.0, %v832
          %v834 = vpop.f32.mrf.mxu0
          %v835 = vadd.f32 0.0, %v834
          %v836 = vpop.f32.mrf.mxu0
          %v837 = vadd.f32 0.0, %v836
          %838 = vmatprep.mubr.bf16.mxu0 0
          %839 = vmatmul.mubr.bf16.gmra.mxu0 %v693
          %v840 = vpop.f32.mrf.mxu0
          %v841 = vadd.f32 0.0, %v840
          %v842 = vpop.f32.mrf.mxu0
          %v843 = vadd.f32 0.0, %v842
          %v844 = vpop.f32.mrf.mxu0
          %v845 = vadd.f32 0.0, %v844
          %v846 = vpop.f32.mrf.mxu0
          %v847 = vadd.f32 0.0, %v846
          %848 = vmatprep.mubr.bf16.mxu0 0
          %849 = vmatmul.mubr.bf16.gmra.mxu0 %v694
          %v850 = vpop.f32.mrf.mxu0
          %v851 = vadd.f32 0.0, %v850
          %v852 = vpop.f32.mrf.mxu0
          %v853 = vadd.f32 0.0, %v852
          %v854 = vpop.f32.mrf.mxu0
          %v855 = vadd.f32 0.0, %v854
          %v856 = vpop.f32.mrf.mxu0
          %v857 = vadd.f32 0.0, %v856
          %858 = vmatprep.mubr.bf16.mxu0 0
          %859 = vmatmul.mubr.bf16.gmra.mxu0 %v695
          %v860 = vpop.f32.mrf.mxu0
          %v861 = vadd.f32 0.0, %v860
          %v862 = vpop.f32.mrf.mxu0
          %v863 = vadd.f32 0.0, %v862
          %v864 = vpop.f32.mrf.mxu0
          %v865 = vadd.f32 0.0, %v864
          %v866 = vpop.f32.mrf.mxu0
          %v867 = vadd.f32 0.0, %v866
          %868 = vmatprep.mubr.bf16.mxu0 0
          %869 = vmatmul.mubr.bf16.gmra.mxu0 %v696
          %v870 = vpop.f32.mrf.mxu0
          %v871 = vadd.f32 0.0, %v870
          %v872 = vpop.f32.mrf.mxu0
          %v873 = vadd.f32 0.0, %v872
          %v874 = vpop.f32.mrf.mxu0
          %v875 = vadd.f32 0.0, %v874
          %v876 = vpop.f32.mrf.mxu0
          %v877 = vadd.f32 0.0, %v876
          %878 = vmatprep.mubr.bf16.mxu0 0
          %879 = vmatmul.mubr.bf16.gmra.mxu0 %v697
          %v880 = vpop.f32.mrf.mxu0
          %v881 = vadd.f32 0.0, %v880
          %v882 = vpop.f32.mrf.mxu0
          %v883 = vadd.f32 0.0, %v882
          %v884 = vpop.f32.mrf.mxu0
          %v885 = vadd.f32 0.0, %v884
          %v886 = vpop.f32.mrf.mxu0
          %v887 = vadd.f32 0.0, %v886
          %888 = vmatprep.mubr.bf16.mxu0 0
          %889 = vmatmul.mubr.bf16.gmra.mxu0 %v698
          %v890 = vpop.f32.mrf.mxu0
          %v891 = vadd.f32 0.0, %v890
          %v892 = vpop.f32.mrf.mxu0
          %v893 = vadd.f32 0.0, %v892
          %v894 = vpop.f32.mrf.mxu0
          %v895 = vadd.f32 0.0, %v894
          %v896 = vpop.f32.mrf.mxu0
          %v897 = vadd.f32 0.0, %v896
          %898 = vmatprep.mubr.bf16.mxu0 0
          %899 = vmatmul.mubr.bf16.gmra.mxu0 %v699
          %v900 = vpop.f32.mrf.mxu0
          %v901 = vadd.f32 0.0, %v900
          %v902 = vpop.f32.mrf.mxu0
          %v903 = vadd.f32 0.0, %v902
          %v904 = vpop.f32.mrf.mxu0
          %v905 = vadd.f32 0.0, %v904
          %v906 = vpop.f32.mrf.mxu0
          %v907 = vadd.f32 0.0, %v906
          %908 = vdwg.mxu0
          %909 = vst [vmem:[#allocation2] sm:$0xff] %v831
          %910 = vst [vmem:[#allocation2 + $0x8] sm:$0xff] %v833
          %911 = vst [vmem:[#allocation2 + $0x10] sm:$0xff] %v835
          %912 = vst [vmem:[#allocation2 + $0x18] sm:$0xff] %v837
          %913 = vst [vmem:[#allocation2 + $0x20] sm:$0xff] %v841
          %914 = vst [vmem:[#allocation2 + $0x28] sm:$0xff] %v843
          %915 = vst [vmem:[#allocation2 + $0x30] sm:$0xff] %v845
          %916 = vst [vmem:[#allocation2 + $0x38] sm:$0xff] %v847
          %917 = vst [vmem:[#allocation2 + $0x40] sm:$0xff] %v851
          %918 = vst [vmem:[#allocation2 + $0x48] sm:$0xff] %v853
          %919 = vst [vmem:[#allocation2 + $0x50] sm:$0xff] %v855
          %920 = vst [vmem:[#allocation2 + $0x58] sm:$0xff] %v857
          %921 = vst [vmem:[#allocation2 + $0x60] sm:$0xff] %v861
          %922 = vst [vmem:[#allocation2 + $0x68] sm:$0xff] %v863
          %923 = vst [vmem:[#allocation2 + $0x70] sm:$0xff] %v865
          %924 = vst [vmem:[#allocation2 + $0x78] sm:$0xff] %v867
          %925 = vst [vmem:[#allocation2 + $0x80] sm:$0xff] %v871
          %926 = vst [vmem:[#allocation2 + $0x88] sm:$0xff] %v873
          %927 = vst [vmem:[#allocation2 + $0x90] sm:$0xff] %v875
          %928 = vst [vmem:[#allocation2 + $0x98] sm:$0xff] %v877
          %929 = vst [vmem:[#allocation2 + $0xa0] sm:$0xff] %v881
          %930 = vst [vmem:[#allocation2 + $0xa8] sm:$0xff] %v883
          %931 = vst [vmem:[#allocation2 + $0xb0] sm:$0xff] %v885
          %932 = vst [vmem:[#allocation2 + $0xb8] sm:$0xff] %v887
          %933 = vst [vmem:[#allocation2 + $0xc0] sm:$0xff] %v891
          %934 = vst [vmem:[#allocation2 + $0xc8] sm:$0xff] %v893
          %935 = vst [vmem:[#allocation2 + $0xd0] sm:$0xff] %v895
          %936 = vst [vmem:[#allocation2 + $0xd8] sm:$0xff] %v897
          %937 = vst [vmem:[#allocation2 + $0xe0] sm:$0xff] %v901
          %938 = vst [vmem:[#allocation2 + $0xe8] sm:$0xff] %v903
          %939 = vst [vmem:[#allocation2 + $0xf0] sm:$0xff] %v905
          %940 = vst [vmem:[#allocation2 + $0xf8] sm:$0xff] %v907
        $region64: #{_customized_mlp_call.1} parent=39 // pred_fallthru
          _
        %v941 = vld [vmem:[%s309] sm:$0xff]
        %v942 = vld [vmem:[%s309 + $0x8] sm:$0xff]
        %v943 = vld [vmem:[%s309 + $0x10] sm:$0xff]
        %v944 = vld [vmem:[%s309 + $0x18] sm:$0xff]
        %v945 = vld [vmem:[%s309 + $0x20] sm:$0xff]
        %v946 = vld [vmem:[%s309 + $0x28] sm:$0xff]
        %v947 = vld [vmem:[%s309 + $0x30] sm:$0xff]
        %v948 = vld [vmem:[%s309 + $0x38] sm:$0xff]
        %v949 = vld [vmem:[%s309 + $0x40] sm:$0xff]
        %v950 = vld [vmem:[%s309 + $0x48] sm:$0xff]
        %v951 = vld [vmem:[%s309 + $0x50] sm:$0xff]
        %v952 = vld [vmem:[%s309 + $0x58] sm:$0xff]
        %v953 = vld [vmem:[%s309 + $0x60] sm:$0xff]
        %v954 = vld [vmem:[%s309 + $0x68] sm:$0xff]
        %v955 = vld [vmem:[%s309 + $0x70] sm:$0xff]
        %v956 = vld [vmem:[%s309 + $0x78] sm:$0xff]
        %v957 = vld [vmem:[%s309 + $0x80] sm:$0xff]
        %v958 = vld [vmem:[%s309 + $0x88] sm:$0xff]
        %v959 = vld [vmem:[%s309 + $0x90] sm:$0xff]
        %v960 = vld [vmem:[%s309 + $0x98] sm:$0xff]
        %v961 = vld [vmem:[%s309 + $0xa0] sm:$0xff]
        %v962 = vld [vmem:[%s309 + $0xa8] sm:$0xff]
        %v963 = vld [vmem:[%s309 + $0xb0] sm:$0xff]
        %v964 = vld [vmem:[%s309 + $0xb8] sm:$0xff]
        %v965 = vld [vmem:[%s309 + $0xc0] sm:$0xff]
        %v966 = vld [vmem:[%s309 + $0xc8] sm:$0xff]
        %v967 = vld [vmem:[%s309 + $0xd0] sm:$0xff]
        %v968 = vld [vmem:[%s309 + $0xd8] sm:$0xff]
        %v969 = vld [vmem:[%s309 + $0xe0] sm:$0xff]
        %v970 = vld [vmem:[%s309 + $0xe8] sm:$0xff]
        %v971 = vld [vmem:[%s309 + $0xf0] sm:$0xff]
        %v972 = vld [vmem:[%s309 + $0xf8] sm:$0xff]
        %v973 = vld [vmem:[%s309 + $0x100] sm:$0xff]
        %v974 = vld [vmem:[%s309 + $0x108] sm:$0xff]
        %v975 = vld [vmem:[%s309 + $0x110] sm:$0xff]
        %v976 = vld [vmem:[%s309 + $0x118] sm:$0xff]
        %v977 = vld [vmem:[%s309 + $0x120] sm:$0xff]
        %v978 = vld [vmem:[%s309 + $0x128] sm:$0xff]
        %v979 = vld [vmem:[%s309 + $0x130] sm:$0xff]
        %v980 = vld [vmem:[%s309 + $0x138] sm:$0xff]
        %v981 = vld [vmem:[%s309 + $0x140] sm:$0xff]
        %v982 = vld [vmem:[%s309 + $0x148] sm:$0xff]
        %v983 = vld [vmem:[%s309 + $0x150] sm:$0xff]
        %v984 = vld [vmem:[%s309 + $0x158] sm:$0xff]
        %v985 = vld [vmem:[%s309 + $0x160] sm:$0xff]
        %v986 = vld [vmem:[%s309 + $0x168] sm:$0xff]
        %v987 = vld [vmem:[%s309 + $0x170] sm:$0xff]
        %v988 = vld [vmem:[%s309 + $0x178] sm:$0xff]
        %v989 = vld [vmem:[%s309 + $0x180] sm:$0xff]
        %v990 = vld [vmem:[%s309 + $0x188] sm:$0xff]
        %v991 = vld [vmem:[%s309 + $0x190] sm:$0xff]
        %v992 = vld [vmem:[%s309 + $0x198] sm:$0xff]
        %v993 = vld [vmem:[%s309 + $0x1a0] sm:$0xff]
        %v994 = vld [vmem:[%s309 + $0x1a8] sm:$0xff]
        %v995 = vld [vmem:[%s309 + $0x1b0] sm:$0xff]
        %v996 = vld [vmem:[%s309 + $0x1b8] sm:$0xff]
        %v997 = vld [vmem:[%s309 + $0x1c0] sm:$0xff]
        %v998 = vld [vmem:[%s309 + $0x1c8] sm:$0xff]
        %v999 = vld [vmem:[%s309 + $0x1d0] sm:$0xff]
        %v1000 = vld [vmem:[%s309 + $0x1d8] sm:$0xff]
        %v1001 = vld [vmem:[%s309 + $0x1e0] sm:$0xff]
        %v1002 = vld [vmem:[%s309 + $0x1e8] sm:$0xff]
        %v1003 = vld [vmem:[%s309 + $0x1f0] sm:$0xff]
        %v1004 = vld [vmem:[%s309 + $0x1f8] sm:$0xff]
        %v1021 = vunpack.c.l.b16 %v367
        %v1022 = vunpack.c.h.b16 %v367
        %v1023 = vunpack.c.l.b16 %v368
        %v1024 = vunpack.c.h.b16 %v368
        %v1025 = vunpack.c.l.b16 %v369
        %v1026 = vunpack.c.h.b16 %v369
        %v1027 = vunpack.c.l.b16 %v370
        %v1028 = vunpack.c.h.b16 %v370
        %v1029 = vunpack.c.l.b16 %v371
        %v1030 = vunpack.c.h.b16 %v371
        %v1031 = vunpack.c.l.b16 %v372
        %v1032 = vunpack.c.h.b16 %v372
        %v1033 = vunpack.c.l.b16 %v373
        %v1034 = vunpack.c.h.b16 %v373
        %v1035 = vunpack.c.l.b16 %v374
        %v1036 = vunpack.c.h.b16 %v374
        %v1037 = vunpack.c.l.b16 %v375
        %v1038 = vunpack.c.h.b16 %v375
        %v1039 = vunpack.c.l.b16 %v376
        %v1040 = vunpack.c.h.b16 %v376
        %v1041 = vunpack.c.l.b16 %v377
        %v1042 = vunpack.c.h.b16 %v377
        %v1043 = vunpack.c.l.b16 %v378
        %v1044 = vunpack.c.h.b16 %v378
        %v1045 = vunpack.c.l.b16 %v379
        %v1046 = vunpack.c.h.b16 %v379
        %v1047 = vunpack.c.l.b16 %v380
        %v1048 = vunpack.c.h.b16 %v380
        %v1049 = vunpack.c.l.b16 %v381
        %v1050 = vunpack.c.h.b16 %v381
        %v1051 = vunpack.c.l.b16 %v382
        %v1052 = vunpack.c.h.b16 %v382
        %v1053 = vpack.c.b16 %v1023, %v1021
        %v1054 = vpack.c.b16 %v1024, %v1022
        %v1055 = vpack.c.b16 %v1027, %v1025
        %v1056 = vpack.c.b16 %v1028, %v1026
        %v1057 = vpack.c.b16 %v1031, %v1029
        %v1058 = vpack.c.b16 %v1032, %v1030
        %v1059 = vpack.c.b16 %v1035, %v1033
        %v1060 = vpack.c.b16 %v1036, %v1034
        %v1061 = vpack.c.b16 %v1039, %v1037
        %v1062 = vpack.c.b16 %v1040, %v1038
        %v1063 = vpack.c.b16 %v1043, %v1041
        %v1064 = vpack.c.b16 %v1044, %v1042
        %v1065 = vpack.c.b16 %v1047, %v1045
        %v1066 = vpack.c.b16 %v1048, %v1046
        %v1067 = vpack.c.b16 %v1051, %v1049
        %v1068 = vpack.c.b16 %v1052, %v1050
        %v1149 = vunpack.c.l.b16 %v941
        %v1150 = vunpack.c.h.b16 %v941
        %v1151 = vunpack.c.l.b16 %v942
        %v1152 = vunpack.c.h.b16 %v942
        %v1153 = vunpack.c.l.b16 %v943
        %v1154 = vunpack.c.h.b16 %v943
        %v1155 = vunpack.c.l.b16 %v944
        %v1156 = vunpack.c.h.b16 %v944
        %v1157 = vunpack.c.l.b16 %v945
        %v1158 = vunpack.c.h.b16 %v945
        %v1159 = vunpack.c.l.b16 %v946
        %v1160 = vunpack.c.h.b16 %v946
        %v1161 = vunpack.c.l.b16 %v947
        %v1162 = vunpack.c.h.b16 %v947
        %v1163 = vunpack.c.l.b16 %v948
        %v1164 = vunpack.c.h.b16 %v948
        %v1165 = vunpack.c.l.b16 %v949
        %v1166 = vunpack.c.h.b16 %v949
        %v1167 = vunpack.c.l.b16 %v950
        %v1168 = vunpack.c.h.b16 %v950
        %v1169 = vunpack.c.l.b16 %v951
        %v1170 = vunpack.c.h.b16 %v951
        %v1171 = vunpack.c.l.b16 %v952
        %v1172 = vunpack.c.h.b16 %v952
        %v1173 = vunpack.c.l.b16 %v953
        %v1174 = vunpack.c.h.b16 %v953
        %v1175 = vunpack.c.l.b16 %v954
        %v1176 = vunpack.c.h.b16 %v954
        %v1177 = vunpack.c.l.b16 %v955
        %v1178 = vunpack.c.h.b16 %v955
        %v1179 = vunpack.c.l.b16 %v956
        %v1180 = vunpack.c.h.b16 %v956
        %v1181 = vunpack.c.l.b16 %v957
        %v1182 = vunpack.c.h.b16 %v957
        %v1183 = vunpack.c.l.b16 %v958
        %v1184 = vunpack.c.h.b16 %v958
        %v1185 = vunpack.c.l.b16 %v959
        %v1186 = vunpack.c.h.b16 %v959
        %v1187 = vunpack.c.l.b16 %v960
        %v1188 = vunpack.c.h.b16 %v960
        %v1189 = vunpack.c.l.b16 %v961
        %v1190 = vunpack.c.h.b16 %v961
        %v1191 = vunpack.c.l.b16 %v962
        %v1192 = vunpack.c.h.b16 %v962
        %v1193 = vunpack.c.l.b16 %v963
        %v1194 = vunpack.c.h.b16 %v963
        %v1195 = vunpack.c.l.b16 %v964
        %v1196 = vunpack.c.h.b16 %v964
        %v1197 = vunpack.c.l.b16 %v965
        %v1198 = vunpack.c.h.b16 %v965
        %v1199 = vunpack.c.l.b16 %v966
        %v1200 = vunpack.c.h.b16 %v966
        %v1201 = vunpack.c.l.b16 %v967
        %v1202 = vunpack.c.h.b16 %v967
        %v1203 = vunpack.c.l.b16 %v968
        %v1204 = vunpack.c.h.b16 %v968
        %v1205 = vunpack.c.l.b16 %v969
        %v1206 = vunpack.c.h.b16 %v969
        %v1207 = vunpack.c.l.b16 %v970
        %v1208 = vunpack.c.h.b16 %v970
        %v1209 = vunpack.c.l.b16 %v971
        %v1210 = vunpack.c.h.b16 %v971
        %v1211 = vunpack.c.l.b16 %v972
        %v1212 = vunpack.c.h.b16 %v972
        %v1213 = vunpack.c.l.b16 %v973
        %v1214 = vunpack.c.h.b16 %v973
        %v1215 = vunpack.c.l.b16 %v974
        %v1216 = vunpack.c.h.b16 %v974
        %v1217 = vunpack.c.l.b16 %v975
        %v1218 = vunpack.c.h.b16 %v975
        %v1219 = vunpack.c.l.b16 %v976
        %v1220 = vunpack.c.h.b16 %v976
        %v1221 = vunpack.c.l.b16 %v977
        %v1222 = vunpack.c.h.b16 %v977
        %v1223 = vunpack.c.l.b16 %v978
        %v1224 = vunpack.c.h.b16 %v978
        %v1225 = vunpack.c.l.b16 %v979
        %v1226 = vunpack.c.h.b16 %v979
        %v1227 = vunpack.c.l.b16 %v980
        %v1228 = vunpack.c.h.b16 %v980
        %v1229 = vunpack.c.l.b16 %v981
        %v1230 = vunpack.c.h.b16 %v981
        %v1231 = vunpack.c.l.b16 %v982
        %v1232 = vunpack.c.h.b16 %v982
        %v1233 = vunpack.c.l.b16 %v983
        %v1234 = vunpack.c.h.b16 %v983
        %v1235 = vunpack.c.l.b16 %v984
        %v1236 = vunpack.c.h.b16 %v984
        %v1237 = vunpack.c.l.b16 %v985
        %v1238 = vunpack.c.h.b16 %v985
        %v1239 = vunpack.c.l.b16 %v986
        %v1240 = vunpack.c.h.b16 %v986
        %v1241 = vunpack.c.l.b16 %v987
        %v1242 = vunpack.c.h.b16 %v987
        %v1243 = vunpack.c.l.b16 %v988
        %v1244 = vunpack.c.h.b16 %v988
        %v1245 = vunpack.c.l.b16 %v989
        %v1246 = vunpack.c.h.b16 %v989
        %v1247 = vunpack.c.l.b16 %v990
        %v1248 = vunpack.c.h.b16 %v990
        %v1249 = vunpack.c.l.b16 %v991
        %v1250 = vunpack.c.h.b16 %v991
        %v1251 = vunpack.c.l.b16 %v992
        %v1252 = vunpack.c.h.b16 %v992
        %v1253 = vunpack.c.l.b16 %v993
        %v1254 = vunpack.c.h.b16 %v993
        %v1255 = vunpack.c.l.b16 %v994
        %v1256 = vunpack.c.h.b16 %v994
        %v1257 = vunpack.c.l.b16 %v995
        %v1258 = vunpack.c.h.b16 %v995
        %v1259 = vunpack.c.l.b16 %v996
        %v1260 = vunpack.c.h.b16 %v996
        %v1261 = vunpack.c.l.b16 %v997
        %v1262 = vunpack.c.h.b16 %v997
        %v1263 = vunpack.c.l.b16 %v998
        %v1264 = vunpack.c.h.b16 %v998
        %v1265 = vunpack.c.l.b16 %v999
        %v1266 = vunpack.c.h.b16 %v999
        %v1267 = vunpack.c.l.b16 %v1000
        %v1268 = vunpack.c.h.b16 %v1000
        %v1269 = vunpack.c.l.b16 %v1001
        %v1270 = vunpack.c.h.b16 %v1001
        %v1271 = vunpack.c.l.b16 %v1002
        %v1272 = vunpack.c.h.b16 %v1002
        %v1273 = vunpack.c.l.b16 %v1003
        %v1274 = vunpack.c.h.b16 %v1003
        %v1275 = vunpack.c.l.b16 %v1004
        %v1276 = vunpack.c.h.b16 %v1004
        %v1277 = vpack.c.b16 %v1153, %v1149
        %v1278 = vpack.c.b16 %v1154, %v1150
        %v1279 = vpack.c.b16 %v1155, %v1151
        %v1280 = vpack.c.b16 %v1156, %v1152
        %v1281 = vpack.c.b16 %v1161, %v1157
        %v1282 = vpack.c.b16 %v1162, %v1158
        %v1283 = vpack.c.b16 %v1163, %v1159
        %v1284 = vpack.c.b16 %v1164, %v1160
        %v1285 = vpack.c.b16 %v1169, %v1165
        %v1286 = vpack.c.b16 %v1170, %v1166
        %v1287 = vpack.c.b16 %v1171, %v1167
        %v1288 = vpack.c.b16 %v1172, %v1168
        %v1289 = vpack.c.b16 %v1177, %v1173
        %v1290 = vpack.c.b16 %v1178, %v1174
        %v1291 = vpack.c.b16 %v1179, %v1175
        %v1292 = vpack.c.b16 %v1180, %v1176
        %v1293 = vpack.c.b16 %v1185, %v1181
        %v1294 = vpack.c.b16 %v1186, %v1182
        %v1295 = vpack.c.b16 %v1187, %v1183
        %v1296 = vpack.c.b16 %v1188, %v1184
        %v1297 = vpack.c.b16 %v1193, %v1189
        %v1298 = vpack.c.b16 %v1194, %v1190
        %v1299 = vpack.c.b16 %v1195, %v1191
        %v1300 = vpack.c.b16 %v1196, %v1192
        %v1301 = vpack.c.b16 %v1201, %v1197
        %v1302 = vpack.c.b16 %v1202, %v1198
        %v1303 = vpack.c.b16 %v1203, %v1199
        %v1304 = vpack.c.b16 %v1204, %v1200
        %v1305 = vpack.c.b16 %v1209, %v1205
        %v1306 = vpack.c.b16 %v1210, %v1206
        %v1307 = vpack.c.b16 %v1211, %v1207
        %v1308 = vpack.c.b16 %v1212, %v1208
        %v1309 = vpack.c.b16 %v1217, %v1213
        %v1310 = vpack.c.b16 %v1218, %v1214
        %v1311 = vpack.c.b16 %v1219, %v1215
        %v1312 = vpack.c.b16 %v1220, %v1216
        %v1313 = vpack.c.b16 %v1225, %v1221
        %v1314 = vpack.c.b16 %v1226, %v1222
        %v1315 = vpack.c.b16 %v1227, %v1223
        %v1316 = vpack.c.b16 %v1228, %v1224
        %v1317 = vpack.c.b16 %v1233, %v1229
        %v1318 = vpack.c.b16 %v1234, %v1230
        %v1319 = vpack.c.b16 %v1235, %v1231
        %v1320 = vpack.c.b16 %v1236, %v1232
        %v1321 = vpack.c.b16 %v1241, %v1237
        %v1322 = vpack.c.b16 %v1242, %v1238
        %v1323 = vpack.c.b16 %v1243, %v1239
        %v1324 = vpack.c.b16 %v1244, %v1240
        %v1325 = vpack.c.b16 %v1249, %v1245
        %v1326 = vpack.c.b16 %v1250, %v1246
        %v1327 = vpack.c.b16 %v1251, %v1247
        %v1328 = vpack.c.b16 %v1252, %v1248
        %v1329 = vpack.c.b16 %v1257, %v1253
        %v1330 = vpack.c.b16 %v1258, %v1254
        %v1331 = vpack.c.b16 %v1259, %v1255
        %v1332 = vpack.c.b16 %v1260, %v1256
        %v1333 = vpack.c.b16 %v1265, %v1261
        %v1334 = vpack.c.b16 %v1266, %v1262
        %v1335 = vpack.c.b16 %v1267, %v1263
        %v1336 = vpack.c.b16 %v1268, %v1264
        %v1337 = vpack.c.b16 %v1273, %v1269
        %v1338 = vpack.c.b16 %v1274, %v1270
        %v1339 = vpack.c.b16 %v1275, %v1271
        %v1340 = vpack.c.b16 %v1276, %v1272
        %1405 = vmatprep.subr.bf16.mxu0 %v1306
        %1406 = vmatpush1.bf16.msra.mxu0 %v1305
        %1407 = vmatprep.subr.bf16.mxu0 %v1302
        %1408 = vmatpush1.bf16.msra.mxu0 %v1301
        %1409 = vmatprep.subr.bf16.mxu0 %v1298
        %1410 = vmatpush1.bf16.msra.mxu0 %v1297
        %1411 = vmatprep.subr.bf16.mxu0 %v1294
        %1412 = vmatpush1.bf16.msra.mxu0 %v1293
        %1413 = vmatprep.subr.bf16.mxu0 %v1290
        %1414 = vmatpush1.bf16.msra.mxu0 %v1289
        %1415 = vmatprep.subr.bf16.mxu0 %v1286
        %1416 = vmatpush1.bf16.msra.mxu0 %v1285
        %1417 = vmatprep.subr.bf16.mxu0 %v1282
        %1418 = vmatpush1.bf16.msra.mxu0 %v1281
        %1419 = vmatprep.subr.bf16.mxu0 %v1278
        %1420 = vmatpush1.bf16.msra.mxu0 %v1277
        %1421 = vmatprep.subr.bf16.mxu0 %v1338
        %1422 = vmatpush2.bf16.msra.mxu0 %v1337
        %1423 = vmatprep.subr.bf16.mxu0 %v1334
        %1424 = vmatpush2.bf16.msra.mxu0 %v1333
        %1425 = vmatprep.subr.bf16.mxu0 %v1330
        %1426 = vmatpush2.bf16.msra.mxu0 %v1329
        %1427 = vmatprep.subr.bf16.mxu0 %v1326
        %1428 = vmatpush2.bf16.msra.mxu0 %v1325
        %1429 = vmatprep.subr.bf16.mxu0 %v1322
        %1430 = vmatpush2.bf16.msra.mxu0 %v1321
        %1431 = vmatprep.subr.bf16.mxu0 %v1318
        %1432 = vmatpush2.bf16.msra.mxu0 %v1317
        %1433 = vmatprep.subr.bf16.mxu0 %v1314
        %1434 = vmatpush2.bf16.msra.mxu0 %v1313
        %1435 = vmatprep.subr.bf16.mxu0 %v1310
        %1436 = vmatpush2.bf16.msra.mxu0 %v1309
        %1437 = vmatprep.mubr.bf16.mxu0 %v1054
        %1438 = vmatmul.mubr.bf16.gmra.mxu0 %v1053
        %v1439 = vpop.f32.mrf.mxu0
        %v1440 = vadd.f32 0.0, %v1439
        %v1441 = vpop.f32.mrf.mxu0
        %v1442 = vadd.f32 0.0, %v1441
        %v1443 = vpop.f32.mrf.mxu0
        %v1444 = vadd.f32 0.0, %v1443
        %v1445 = vpop.f32.mrf.mxu0
        %v1446 = vadd.f32 0.0, %v1445
        %1447 = vmatprep.mubr.bf16.mxu0 %v1056
        %1448 = vmatmul.mubr.bf16.gmra.mxu0 %v1055
        %v1449 = vpop.f32.mrf.mxu0
        %v1450 = vadd.f32 0.0, %v1449
        %v1451 = vpop.f32.mrf.mxu0
        %v1452 = vadd.f32 0.0, %v1451
        %v1453 = vpop.f32.mrf.mxu0
        %v1454 = vadd.f32 0.0, %v1453
        %v1455 = vpop.f32.mrf.mxu0
        %v1456 = vadd.f32 0.0, %v1455
        %1457 = vmatprep.mubr.bf16.mxu0 %v1058
        %1458 = vmatmul.mubr.bf16.gmra.mxu0 %v1057
        %v1459 = vpop.f32.mrf.mxu0
        %v1460 = vadd.f32 0.0, %v1459
        %v1461 = vpop.f32.mrf.mxu0
        %v1462 = vadd.f32 0.0, %v1461
        %v1463 = vpop.f32.mrf.mxu0
        %v1464 = vadd.f32 0.0, %v1463
        %v1465 = vpop.f32.mrf.mxu0
        %v1466 = vadd.f32 0.0, %v1465
        %1467 = vmatprep.mubr.bf16.mxu0 %v1060
        %1468 = vmatmul.mubr.bf16.gmra.mxu0 %v1059
        %v1469 = vpop.f32.mrf.mxu0
        %v1470 = vadd.f32 0.0, %v1469
        %v1471 = vpop.f32.mrf.mxu0
        %v1472 = vadd.f32 0.0, %v1471
        %v1473 = vpop.f32.mrf.mxu0
        %v1474 = vadd.f32 0.0, %v1473
        %v1475 = vpop.f32.mrf.mxu0
        %v1476 = vadd.f32 0.0, %v1475
        %1477 = vmatprep.mubr.bf16.mxu0 %v1062
        %1478 = vmatmul.mubr.bf16.gmra.mxu0 %v1061
        %v1479 = vpop.f32.mrf.mxu0
        %v1480 = vadd.f32 0.0, %v1479
        %v1481 = vpop.f32.mrf.mxu0
        %v1482 = vadd.f32 0.0, %v1481
        %v1483 = vpop.f32.mrf.mxu0
        %v1484 = vadd.f32 0.0, %v1483
        %v1485 = vpop.f32.mrf.mxu0
        %v1486 = vadd.f32 0.0, %v1485
        %1487 = vmatprep.mubr.bf16.mxu0 %v1064
        %1488 = vmatmul.mubr.bf16.gmra.mxu0 %v1063
        %v1489 = vpop.f32.mrf.mxu0
        %v1490 = vadd.f32 0.0, %v1489
        %v1491 = vpop.f32.mrf.mxu0
        %v1492 = vadd.f32 0.0, %v1491
        %v1493 = vpop.f32.mrf.mxu0
        %v1494 = vadd.f32 0.0, %v1493
        %v1495 = vpop.f32.mrf.mxu0
        %v1496 = vadd.f32 0.0, %v1495
        %1497 = vmatprep.mubr.bf16.mxu0 %v1066
        %1498 = vmatmul.mubr.bf16.gmra.mxu0 %v1065
        %v1499 = vpop.f32.mrf.mxu0
        %v1500 = vadd.f32 0.0, %v1499
        %v1501 = vpop.f32.mrf.mxu0
        %v1502 = vadd.f32 0.0, %v1501
        %v1503 = vpop.f32.mrf.mxu0
        %v1504 = vadd.f32 0.0, %v1503
        %v1505 = vpop.f32.mrf.mxu0
        %v1506 = vadd.f32 0.0, %v1505
        %1507 = vmatprep.mubr.bf16.mxu0 %v1068
        %1508 = vmatmul.mubr.bf16.gmra.mxu0 %v1067
        %v1509 = vpop.f32.mrf.mxu0
        %v1510 = vadd.f32 0.0, %v1509
        %v1511 = vpop.f32.mrf.mxu0
        %v1512 = vadd.f32 0.0, %v1511
        %v1513 = vpop.f32.mrf.mxu0
        %v1514 = vadd.f32 0.0, %v1513
        %v1515 = vpop.f32.mrf.mxu0
        %v1516 = vadd.f32 0.0, %v1515
        %1517 = vdwg.mxu0
        %1518 = vmatprep.subr.bf16.mxu0 %v1308
        %1519 = vmatpush1.bf16.msra.mxu0 %v1307
        %1520 = vmatprep.subr.bf16.mxu0 %v1304
        %1521 = vmatpush1.bf16.msra.mxu0 %v1303
        %1522 = vmatprep.subr.bf16.mxu0 %v1300
        %1523 = vmatpush1.bf16.msra.mxu0 %v1299
        %1524 = vmatprep.subr.bf16.mxu0 %v1296
        %1525 = vmatpush1.bf16.msra.mxu0 %v1295
        %1526 = vmatprep.subr.bf16.mxu0 %v1292
        %1527 = vmatpush1.bf16.msra.mxu0 %v1291
        %1528 = vmatprep.subr.bf16.mxu0 %v1288
        %1529 = vmatpush1.bf16.msra.mxu0 %v1287
        %1530 = vmatprep.subr.bf16.mxu0 %v1284
        %1531 = vmatpush1.bf16.msra.mxu0 %v1283
        %1532 = vmatprep.subr.bf16.mxu0 %v1280
        %1533 = vmatpush1.bf16.msra.mxu0 %v1279
        %1534 = vmatprep.subr.bf16.mxu0 %v1340
        %1535 = vmatpush2.bf16.msra.mxu0 %v1339
        %1536 = vmatprep.subr.bf16.mxu0 %v1336
        %1537 = vmatpush2.bf16.msra.mxu0 %v1335
        %1538 = vmatprep.subr.bf16.mxu0 %v1332
        %1539 = vmatpush2.bf16.msra.mxu0 %v1331
        %1540 = vmatprep.subr.bf16.mxu0 %v1328
        %1541 = vmatpush2.bf16.msra.mxu0 %v1327
        %1542 = vmatprep.subr.bf16.mxu0 %v1324
        %1543 = vmatpush2.bf16.msra.mxu0 %v1323
        %1544 = vmatprep.subr.bf16.mxu0 %v1320
        %1545 = vmatpush2.bf16.msra.mxu0 %v1319
        %1546 = vmatprep.subr.bf16.mxu0 %v1316
        %1547 = vmatpush2.bf16.msra.mxu0 %v1315
        %1548 = vmatprep.subr.bf16.mxu0 %v1312
        %1549 = vmatpush2.bf16.msra.mxu0 %v1311
        %1550 = vmatprep.mubr.bf16.mxu0 %v1054
        %1551 = vmatmul.mubr.bf16.gmra.mxu0 %v1053
        %v1552 = vpop.f32.mrf.mxu0
        %v1553 = vadd.f32 0.0, %v1552
        %v1554 = vpop.f32.mrf.mxu0
        %v1555 = vadd.f32 0.0, %v1554
        %v1556 = vpop.f32.mrf.mxu0
        %v1557 = vadd.f32 0.0, %v1556
        %v1558 = vpop.f32.mrf.mxu0
        %v1559 = vadd.f32 0.0, %v1558
        %1560 = vmatprep.mubr.bf16.mxu0 %v1056
        %1561 = vmatmul.mubr.bf16.gmra.mxu0 %v1055
        %v1562 = vpop.f32.mrf.mxu0
        %v1563 = vadd.f32 0.0, %v1562
        %v1564 = vpop.f32.mrf.mxu0
        %v1565 = vadd.f32 0.0, %v1564
        %v1566 = vpop.f32.mrf.mxu0
        %v1567 = vadd.f32 0.0, %v1566
        %v1568 = vpop.f32.mrf.mxu0
        %v1569 = vadd.f32 0.0, %v1568
        %1570 = vmatprep.mubr.bf16.mxu0 %v1058
        %1571 = vmatmul.mubr.bf16.gmra.mxu0 %v1057
        %v1572 = vpop.f32.mrf.mxu0
        %v1573 = vadd.f32 0.0, %v1572
        %v1574 = vpop.f32.mrf.mxu0
        %v1575 = vadd.f32 0.0, %v1574
        %v1576 = vpop.f32.mrf.mxu0
        %v1577 = vadd.f32 0.0, %v1576
        %v1578 = vpop.f32.mrf.mxu0
        %v1579 = vadd.f32 0.0, %v1578
        %1580 = vmatprep.mubr.bf16.mxu0 %v1060
        %1581 = vmatmul.mubr.bf16.gmra.mxu0 %v1059
        %v1582 = vpop.f32.mrf.mxu0
        %v1583 = vadd.f32 0.0, %v1582
        %v1584 = vpop.f32.mrf.mxu0
        %v1585 = vadd.f32 0.0, %v1584
        %v1586 = vpop.f32.mrf.mxu0
        %v1587 = vadd.f32 0.0, %v1586
        %v1588 = vpop.f32.mrf.mxu0
        %v1589 = vadd.f32 0.0, %v1588
        %1590 = vmatprep.mubr.bf16.mxu0 %v1062
        %1591 = vmatmul.mubr.bf16.gmra.mxu0 %v1061
        %v1592 = vpop.f32.mrf.mxu0
        %v1593 = vadd.f32 0.0, %v1592
        %v1594 = vpop.f32.mrf.mxu0
        %v1595 = vadd.f32 0.0, %v1594
        %v1596 = vpop.f32.mrf.mxu0
        %v1597 = vadd.f32 0.0, %v1596
        %v1598 = vpop.f32.mrf.mxu0
        %v1599 = vadd.f32 0.0, %v1598
        %1600 = vmatprep.mubr.bf16.mxu0 %v1064
        %1601 = vmatmul.mubr.bf16.gmra.mxu0 %v1063
        %v1602 = vpop.f32.mrf.mxu0
        %v1603 = vadd.f32 0.0, %v1602
        %v1604 = vpop.f32.mrf.mxu0
        %v1605 = vadd.f32 0.0, %v1604
        %v1606 = vpop.f32.mrf.mxu0
        %v1607 = vadd.f32 0.0, %v1606
        %v1608 = vpop.f32.mrf.mxu0
        %v1609 = vadd.f32 0.0, %v1608
        %1610 = vmatprep.mubr.bf16.mxu0 %v1066
        %1611 = vmatmul.mubr.bf16.gmra.mxu0 %v1065
        %v1612 = vpop.f32.mrf.mxu0
        %v1613 = vadd.f32 0.0, %v1612
        %v1614 = vpop.f32.mrf.mxu0
        %v1615 = vadd.f32 0.0, %v1614
        %v1616 = vpop.f32.mrf.mxu0
        %v1617 = vadd.f32 0.0, %v1616
        %v1618 = vpop.f32.mrf.mxu0
        %v1619 = vadd.f32 0.0, %v1618
        %1620 = vmatprep.mubr.bf16.mxu0 %v1068
        %1621 = vmatmul.mubr.bf16.gmra.mxu0 %v1067
        %v1622 = vpop.f32.mrf.mxu0
        %v1623 = vadd.f32 0.0, %v1622
        %v1624 = vpop.f32.mrf.mxu0
        %v1625 = vadd.f32 0.0, %v1624
        %v1626 = vpop.f32.mrf.mxu0
        %v1627 = vadd.f32 0.0, %v1626
        %v1628 = vpop.f32.mrf.mxu0
        %v1629 = vadd.f32 0.0, %v1628
        %1630 = vdwg.mxu0
        %v1631 = vxor.u32 %v1440, 2147483648
        %v1632 = vxor.u32 %v1442, 2147483648
        %v1633 = vxor.u32 %v1444, 2147483648
        %v1634 = vxor.u32 %v1446, 2147483648
        %v1635 = vxor.u32 %v1450, 2147483648
        %v1636 = vxor.u32 %v1452, 2147483648
        %v1637 = vxor.u32 %v1454, 2147483648
        %v1638 = vxor.u32 %v1456, 2147483648
        %v1639 = vxor.u32 %v1460, 2147483648
        %v1640 = vxor.u32 %v1462, 2147483648
        %v1641 = vxor.u32 %v1464, 2147483648
        %v1642 = vxor.u32 %v1466, 2147483648
        %v1643 = vxor.u32 %v1470, 2147483648
        %v1644 = vxor.u32 %v1472, 2147483648
        %v1645 = vxor.u32 %v1474, 2147483648
        %v1646 = vxor.u32 %v1476, 2147483648
        %v1647 = vxor.u32 %v1480, 2147483648
        %v1648 = vxor.u32 %v1482, 2147483648
        %v1649 = vxor.u32 %v1484, 2147483648
        %v1650 = vxor.u32 %v1486, 2147483648
        %v1651 = vxor.u32 %v1490, 2147483648
        %v1652 = vxor.u32 %v1492, 2147483648
        %v1653 = vxor.u32 %v1494, 2147483648
        %v1654 = vxor.u32 %v1496, 2147483648
        %v1655 = vxor.u32 %v1500, 2147483648
        %v1656 = vxor.u32 %v1502, 2147483648
        %v1657 = vxor.u32 %v1504, 2147483648
        %v1658 = vxor.u32 %v1506, 2147483648
        %v1659 = vxor.u32 %v1510, 2147483648
        %v1660 = vxor.u32 %v1512, 2147483648
        %v1661 = vxor.u32 %v1514, 2147483648
        %v1662 = vxor.u32 %v1516, 2147483648
        %v1663 = vmul.f32 %v1631, 1.442695
        %v1664 = vpow.pop %v1663
        %v1665 = vmul.f32 %v1632, 1.442695
        %v1666 = vpow.pop %v1665
        %v1667 = vmul.f32 %v1633, 1.442695
        %v1668 = vpow.pop %v1667
        %v1669 = vmul.f32 %v1634, 1.442695
        %v1670 = vpow.pop %v1669
        %v1671 = vmul.f32 %v1635, 1.442695
        %v1672 = vpow.pop %v1671
        %v1673 = vmul.f32 %v1636, 1.442695
        %v1674 = vpow.pop %v1673
        %v1675 = vmul.f32 %v1637, 1.442695
        %v1676 = vpow.pop %v1675
        %v1677 = vmul.f32 %v1638, 1.442695
        %v1678 = vpow.pop %v1677
        %v1679 = vmul.f32 %v1639, 1.442695
        %v1680 = vpow.pop %v1679
        %v1681 = vmul.f32 %v1640, 1.442695
        %v1682 = vpow.pop %v1681
        %v1683 = vmul.f32 %v1641, 1.442695
        %v1684 = vpow.pop %v1683
        %v1685 = vmul.f32 %v1642, 1.442695
        %v1686 = vpow.pop %v1685
        %v1687 = vmul.f32 %v1643, 1.442695
        %v1688 = vpow.pop %v1687
        %v1689 = vmul.f32 %v1644, 1.442695
        %v1690 = vpow.pop %v1689
        %v1691 = vmul.f32 %v1645, 1.442695
        %v1692 = vpow.pop %v1691
        %v1693 = vmul.f32 %v1646, 1.442695
        %v1694 = vpow.pop %v1693
        %v1695 = vmul.f32 %v1647, 1.442695
        %v1696 = vpow.pop %v1695
        %v1697 = vmul.f32 %v1648, 1.442695
        %v1698 = vpow.pop %v1697
        %v1699 = vmul.f32 %v1649, 1.442695
        %v1700 = vpow.pop %v1699
        %v1701 = vmul.f32 %v1650, 1.442695
        %v1702 = vpow.pop %v1701
        %v1703 = vmul.f32 %v1651, 1.442695
        %v1704 = vpow.pop %v1703
        %v1705 = vmul.f32 %v1652, 1.442695
        %v1706 = vpow.pop %v1705
        %v1707 = vmul.f32 %v1653, 1.442695
        %v1708 = vpow.pop %v1707
        %v1709 = vmul.f32 %v1654, 1.442695
        %v1710 = vpow.pop %v1709
        %v1711 = vmul.f32 %v1655, 1.442695
        %v1712 = vpow.pop %v1711
        %v1713 = vmul.f32 %v1656, 1.442695
        %v1714 = vpow.pop %v1713
        %v1715 = vmul.f32 %v1657, 1.442695
        %v1716 = vpow.pop %v1715
        %v1717 = vmul.f32 %v1658, 1.442695
        %v1718 = vpow.pop %v1717
        %v1719 = vmul.f32 %v1659, 1.442695
        %v1720 = vpow.pop %v1719
        %v1721 = vmul.f32 %v1660, 1.442695
        %v1722 = vpow.pop %v1721
        %v1723 = vmul.f32 %v1661, 1.442695
        %v1724 = vpow.pop %v1723
        %v1725 = vmul.f32 %v1662, 1.442695
        %v1726 = vpow.pop %v1725
        %v1727 = vadd.f32 %v1664, 1.0
        %v1728 = vadd.f32 %v1666, 1.0
        %v1729 = vadd.f32 %v1668, 1.0
        %v1730 = vadd.f32 %v1670, 1.0
        %v1731 = vadd.f32 %v1672, 1.0
        %v1732 = vadd.f32 %v1674, 1.0
        %v1733 = vadd.f32 %v1676, 1.0
        %v1734 = vadd.f32 %v1678, 1.0
        %v1735 = vadd.f32 %v1680, 1.0
        %v1736 = vadd.f32 %v1682, 1.0
        %v1737 = vadd.f32 %v1684, 1.0
        %v1738 = vadd.f32 %v1686, 1.0
        %v1739 = vadd.f32 %v1688, 1.0
        %v1740 = vadd.f32 %v1690, 1.0
        %v1741 = vadd.f32 %v1692, 1.0
        %v1742 = vadd.f32 %v1694, 1.0
        %v1743 = vadd.f32 %v1696, 1.0
        %v1744 = vadd.f32 %v1698, 1.0
        %v1745 = vadd.f32 %v1700, 1.0
        %v1746 = vadd.f32 %v1702, 1.0
        %v1747 = vadd.f32 %v1704, 1.0
        %v1748 = vadd.f32 %v1706, 1.0
        %v1749 = vadd.f32 %v1708, 1.0
        %v1750 = vadd.f32 %v1710, 1.0
        %v1751 = vadd.f32 %v1712, 1.0
        %v1752 = vadd.f32 %v1714, 1.0
        %v1753 = vadd.f32 %v1716, 1.0
        %v1754 = vadd.f32 %v1718, 1.0
        %v1755 = vadd.f32 %v1720, 1.0
        %v1756 = vadd.f32 %v1722, 1.0
        %v1757 = vadd.f32 %v1724, 1.0
        %v1758 = vadd.f32 %v1726, 1.0
        %v1759 = vrcp.pop %v1727
        %v1760 = vmul.f32 1.0, %v1759
        %v1761 = vrcp.pop %v1728
        %v1762 = vmul.f32 1.0, %v1761
        %v1763 = vrcp.pop %v1729
        %v1764 = vmul.f32 1.0, %v1763
        %v1765 = vrcp.pop %v1730
        %v1766 = vmul.f32 1.0, %v1765
        %v1767 = vrcp.pop %v1731
        %v1768 = vmul.f32 1.0, %v1767
        %v1769 = vrcp.pop %v1732
        %v1770 = vmul.f32 1.0, %v1769
        %v1771 = vrcp.pop %v1733
        %v1772 = vmul.f32 1.0, %v1771
        %v1773 = vrcp.pop %v1734
        %v1774 = vmul.f32 1.0, %v1773
        %v1775 = vrcp.pop %v1735
        %v1776 = vmul.f32 1.0, %v1775
        %v1777 = vrcp.pop %v1736
        %v1778 = vmul.f32 1.0, %v1777
        %v1779 = vrcp.pop %v1737
        %v1780 = vmul.f32 1.0, %v1779
        %v1781 = vrcp.pop %v1738
        %v1782 = vmul.f32 1.0, %v1781
        %v1783 = vrcp.pop %v1739
        %v1784 = vmul.f32 1.0, %v1783
        %v1785 = vrcp.pop %v1740
        %v1786 = vmul.f32 1.0, %v1785
        %v1787 = vrcp.pop %v1741
        %v1788 = vmul.f32 1.0, %v1787
        %v1789 = vrcp.pop %v1742
        %v1790 = vmul.f32 1.0, %v1789
        %v1791 = vrcp.pop %v1743
        %v1792 = vmul.f32 1.0, %v1791
        %v1793 = vrcp.pop %v1744
        %v1794 = vmul.f32 1.0, %v1793
        %v1795 = vrcp.pop %v1745
        %v1796 = vmul.f32 1.0, %v1795
        %v1797 = vrcp.pop %v1746
        %v1798 = vmul.f32 1.0, %v1797
        %v1799 = vrcp.pop %v1747
        %v1800 = vmul.f32 1.0, %v1799
        %v1801 = vrcp.pop %v1748
        %v1802 = vmul.f32 1.0, %v1801
        %v1803 = vrcp.pop %v1749
        %v1804 = vmul.f32 1.0, %v1803
        %v1805 = vrcp.pop %v1750
        %v1806 = vmul.f32 1.0, %v1805
        %v1807 = vrcp.pop %v1751
        %v1808 = vmul.f32 1.0, %v1807
        %v1809 = vrcp.pop %v1752
        %v1810 = vmul.f32 1.0, %v1809
        %v1811 = vrcp.pop %v1753
        %v1812 = vmul.f32 1.0, %v1811
        %v1813 = vrcp.pop %v1754
        %v1814 = vmul.f32 1.0, %v1813
        %v1815 = vrcp.pop %v1755
        %v1816 = vmul.f32 1.0, %v1815
        %v1817 = vrcp.pop %v1756
        %v1818 = vmul.f32 1.0, %v1817
        %v1819 = vrcp.pop %v1757
        %v1820 = vmul.f32 1.0, %v1819
        %v1821 = vrcp.pop %v1758
        %v1822 = vmul.f32 1.0, %v1821
        %v1823 = vmul.f32 %v1440, %v1760
        %v1824 = vmul.f32 %v1442, %v1762
        %v1825 = vmul.f32 %v1444, %v1764
        %v1826 = vmul.f32 %v1446, %v1766
        %v1827 = vmul.f32 %v1450, %v1768
        %v1828 = vmul.f32 %v1452, %v1770
        %v1829 = vmul.f32 %v1454, %v1772
        %v1830 = vmul.f32 %v1456, %v1774
        %v1831 = vmul.f32 %v1460, %v1776
        %v1832 = vmul.f32 %v1462, %v1778
        %v1833 = vmul.f32 %v1464, %v1780
        %v1834 = vmul.f32 %v1466, %v1782
        %v1835 = vmul.f32 %v1470, %v1784
        %v1836 = vmul.f32 %v1472, %v1786
        %v1837 = vmul.f32 %v1474, %v1788
        %v1838 = vmul.f32 %v1476, %v1790
        %v1839 = vmul.f32 %v1480, %v1792
        %v1840 = vmul.f32 %v1482, %v1794
        %v1841 = vmul.f32 %v1484, %v1796
        %v1842 = vmul.f32 %v1486, %v1798
        %v1843 = vmul.f32 %v1490, %v1800
        %v1844 = vmul.f32 %v1492, %v1802
        %v1845 = vmul.f32 %v1494, %v1804
        %v1846 = vmul.f32 %v1496, %v1806
        %v1847 = vmul.f32 %v1500, %v1808
        %v1848 = vmul.f32 %v1502, %v1810
        %v1849 = vmul.f32 %v1504, %v1812
        %v1850 = vmul.f32 %v1506, %v1814
        %v1851 = vmul.f32 %v1510, %v1816
        %v1852 = vmul.f32 %v1512, %v1818
        %v1853 = vmul.f32 %v1514, %v1820
        %v1854 = vmul.f32 %v1516, %v1822
        %v1855 = vmul.f32 %v1823, %v1553
        %v1856 = vmul.f32 %v1824, %v1555
        %v1857 = vmul.f32 %v1825, %v1557
        %v1858 = vmul.f32 %v1826, %v1559
        %v1859 = vmul.f32 %v1827, %v1563
        %v1860 = vmul.f32 %v1828, %v1565
        %v1861 = vmul.f32 %v1829, %v1567
        %v1862 = vmul.f32 %v1830, %v1569
        %v1863 = vmul.f32 %v1831, %v1573
        %v1864 = vmul.f32 %v1832, %v1575
        %v1865 = vmul.f32 %v1833, %v1577
        %v1866 = vmul.f32 %v1834, %v1579
        %v1867 = vmul.f32 %v1835, %v1583
        %v1868 = vmul.f32 %v1836, %v1585
        %v1869 = vmul.f32 %v1837, %v1587
        %v1870 = vmul.f32 %v1838, %v1589
        %v1871 = vmul.f32 %v1839, %v1593
        %v1872 = vmul.f32 %v1840, %v1595
        %v1873 = vmul.f32 %v1841, %v1597
        %v1874 = vmul.f32 %v1842, %v1599
        %v1875 = vmul.f32 %v1843, %v1603
        %v1876 = vmul.f32 %v1844, %v1605
        %v1877 = vmul.f32 %v1845, %v1607
        %v1878 = vmul.f32 %v1846, %v1609
        %v1879 = vmul.f32 %v1847, %v1613
        %v1880 = vmul.f32 %v1848, %v1615
        %v1881 = vmul.f32 %v1849, %v1617
        %v1882 = vmul.f32 %v1850, %v1619
        %v1883 = vmul.f32 %v1851, %v1623
        %v1884 = vmul.f32 %v1852, %v1625
        %v1885 = vmul.f32 %v1853, %v1627
        %v1886 = vmul.f32 %v1854, %v1629
        %v1887 = vld [vmem:[#allocation2] sm:$0xff]
        %v1888 = vld [vmem:[#allocation2 + $0x8] sm:$0xff]
        %v1889 = vld [vmem:[#allocation2 + $0x10] sm:$0xff]
        %v1890 = vld [vmem:[#allocation2 + $0x18] sm:$0xff]
        %v1891 = vld [vmem:[#allocation2 + $0x20] sm:$0xff]
        %v1892 = vld [vmem:[#allocation2 + $0x28] sm:$0xff]
        %v1893 = vld [vmem:[#allocation2 + $0x30] sm:$0xff]
        %v1894 = vld [vmem:[#allocation2 + $0x38] sm:$0xff]
        %v1895 = vld [vmem:[#allocation2 + $0x40] sm:$0xff]
        %v1896 = vld [vmem:[#allocation2 + $0x48] sm:$0xff]
        %v1897 = vld [vmem:[#allocation2 + $0x50] sm:$0xff]
        %v1898 = vld [vmem:[#allocation2 + $0x58] sm:$0xff]
        %v1899 = vld [vmem:[#allocation2 + $0x60] sm:$0xff]
        %v1900 = vld [vmem:[#allocation2 + $0x68] sm:$0xff]
        %v1901 = vld [vmem:[#allocation2 + $0x70] sm:$0xff]
        %v1902 = vld [vmem:[#allocation2 + $0x78] sm:$0xff]
        %v1903 = vld [vmem:[#allocation2 + $0x80] sm:$0xff]
        %v1904 = vld [vmem:[#allocation2 + $0x88] sm:$0xff]
        %v1905 = vld [vmem:[#allocation2 + $0x90] sm:$0xff]
        %v1906 = vld [vmem:[#allocation2 + $0x98] sm:$0xff]
        %v1907 = vld [vmem:[#allocation2 + $0xa0] sm:$0xff]
        %v1908 = vld [vmem:[#allocation2 + $0xa8] sm:$0xff]
        %v1909 = vld [vmem:[#allocation2 + $0xb0] sm:$0xff]
        %v1910 = vld [vmem:[#allocation2 + $0xb8] sm:$0xff]
        %v1911 = vld [vmem:[#allocation2 + $0xc0] sm:$0xff]
        %v1912 = vld [vmem:[#allocation2 + $0xc8] sm:$0xff]
        %v1913 = vld [vmem:[#allocation2 + $0xd0] sm:$0xff]
        %v1914 = vld [vmem:[#allocation2 + $0xd8] sm:$0xff]
        %v1915 = vld [vmem:[#allocation2 + $0xe0] sm:$0xff]
        %v1916 = vld [vmem:[#allocation2 + $0xe8] sm:$0xff]
        %v1917 = vld [vmem:[#allocation2 + $0xf0] sm:$0xff]
        %v1918 = vld [vmem:[#allocation2 + $0xf8] sm:$0xff]
        %v1919 = vpack.c.bf16 %v1857, %v1855
        %v1920 = vpack.c.bf16 %v1858, %v1856
        %v1921 = vpack.c.bf16 %v1861, %v1859
        %v1922 = vpack.c.bf16 %v1862, %v1860
        %v1923 = vpack.c.bf16 %v1865, %v1863
        %v1924 = vpack.c.bf16 %v1866, %v1864
        %v1925 = vpack.c.bf16 %v1869, %v1867
        %v1926 = vpack.c.bf16 %v1870, %v1868
        %v1927 = vpack.c.bf16 %v1873, %v1871
        %v1928 = vpack.c.bf16 %v1874, %v1872
        %v1929 = vpack.c.bf16 %v1877, %v1875
        %v1930 = vpack.c.bf16 %v1878, %v1876
        %v1931 = vpack.c.bf16 %v1881, %v1879
        %v1932 = vpack.c.bf16 %v1882, %v1880
        %v1933 = vpack.c.bf16 %v1885, %v1883
        %v1934 = vpack.c.bf16 %v1886, %v1884
        %v1935 = vld [vmem:[%s318] sm:$0xff]
        %v1936 = vld [vmem:[%s318 + $0x8] sm:$0xff]
        %v1937 = vld [vmem:[%s318 + $0x10] sm:$0xff]
        %v1938 = vld [vmem:[%s318 + $0x18] sm:$0xff]
        %v1939 = vld [vmem:[%s318 + $0x20] sm:$0xff]
        %v1940 = vld [vmem:[%s318 + $0x28] sm:$0xff]
        %v1941 = vld [vmem:[%s318 + $0x30] sm:$0xff]
        %v1942 = vld [vmem:[%s318 + $0x38] sm:$0xff]
        %v1943 = vld [vmem:[%s318 + $0x40] sm:$0xff]
        %v1944 = vld [vmem:[%s318 + $0x48] sm:$0xff]
        %v1945 = vld [vmem:[%s318 + $0x50] sm:$0xff]
        %v1946 = vld [vmem:[%s318 + $0x58] sm:$0xff]
        %v1947 = vld [vmem:[%s318 + $0x60] sm:$0xff]
        %v1948 = vld [vmem:[%s318 + $0x68] sm:$0xff]
        %v1949 = vld [vmem:[%s318 + $0x70] sm:$0xff]
        %v1950 = vld [vmem:[%s318 + $0x78] sm:$0xff]
        %v1951 = vld [vmem:[%s318 + $0x80] sm:$0xff]
        %v1952 = vld [vmem:[%s318 + $0x88] sm:$0xff]
        %v1953 = vld [vmem:[%s318 + $0x90] sm:$0xff]
        %v1954 = vld [vmem:[%s318 + $0x98] sm:$0xff]
        %v1955 = vld [vmem:[%s318 + $0xa0] sm:$0xff]
        %v1956 = vld [vmem:[%s318 + $0xa8] sm:$0xff]
        %v1957 = vld [vmem:[%s318 + $0xb0] sm:$0xff]
        %v1958 = vld [vmem:[%s318 + $0xb8] sm:$0xff]
        %v1959 = vld [vmem:[%s318 + $0xc0] sm:$0xff]
        %v1960 = vld [vmem:[%s318 + $0xc8] sm:$0xff]
        %v1961 = vld [vmem:[%s318 + $0xd0] sm:$0xff]
        %v1962 = vld [vmem:[%s318 + $0xd8] sm:$0xff]
        %v1963 = vld [vmem:[%s318 + $0xe0] sm:$0xff]
        %v1964 = vld [vmem:[%s318 + $0xe8] sm:$0xff]
        %v1965 = vld [vmem:[%s318 + $0xf0] sm:$0xff]
        %v1966 = vld [vmem:[%s318 + $0xf8] sm:$0xff]
        %v1999 = vunpack.c.l.b16 %v1935
        %v2000 = vunpack.c.h.b16 %v1935
        %v2001 = vunpack.c.l.b16 %v1936
        %v2002 = vunpack.c.h.b16 %v1936
        %v2003 = vunpack.c.l.b16 %v1937
        %v2004 = vunpack.c.h.b16 %v1937
        %v2005 = vunpack.c.l.b16 %v1938
        %v2006 = vunpack.c.h.b16 %v1938
        %v2007 = vunpack.c.l.b16 %v1939
        %v2008 = vunpack.c.h.b16 %v1939
        %v2009 = vunpack.c.l.b16 %v1940
        %v2010 = vunpack.c.h.b16 %v1940
        %v2011 = vunpack.c.l.b16 %v1941
        %v2012 = vunpack.c.h.b16 %v1941
        %v2013 = vunpack.c.l.b16 %v1942
        %v2014 = vunpack.c.h.b16 %v1942
        %v2015 = vunpack.c.l.b16 %v1943
        %v2016 = vunpack.c.h.b16 %v1943
        %v2017 = vunpack.c.l.b16 %v1944
        %v2018 = vunpack.c.h.b16 %v1944
        %v2019 = vunpack.c.l.b16 %v1945
        %v2020 = vunpack.c.h.b16 %v1945
        %v2021 = vunpack.c.l.b16 %v1946
        %v2022 = vunpack.c.h.b16 %v1946
        %v2023 = vunpack.c.l.b16 %v1947
        %v2024 = vunpack.c.h.b16 %v1947
        %v2025 = vunpack.c.l.b16 %v1948
        %v2026 = vunpack.c.h.b16 %v1948
        %v2027 = vunpack.c.l.b16 %v1949
        %v2028 = vunpack.c.h.b16 %v1949
        %v2029 = vunpack.c.l.b16 %v1950
        %v2030 = vunpack.c.h.b16 %v1950
        %v2031 = vunpack.c.l.b16 %v1951
        %v2032 = vunpack.c.h.b16 %v1951
        %v2033 = vunpack.c.l.b16 %v1952
        %v2034 = vunpack.c.h.b16 %v1952
        %v2035 = vunpack.c.l.b16 %v1953
        %v2036 = vunpack.c.h.b16 %v1953
        %v2037 = vunpack.c.l.b16 %v1954
        %v2038 = vunpack.c.h.b16 %v1954
        %v2039 = vunpack.c.l.b16 %v1955
        %v2040 = vunpack.c.h.b16 %v1955
        %v2041 = vunpack.c.l.b16 %v1956
        %v2042 = vunpack.c.h.b16 %v1956
        %v2043 = vunpack.c.l.b16 %v1957
        %v2044 = vunpack.c.h.b16 %v1957
        %v2045 = vunpack.c.l.b16 %v1958
        %v2046 = vunpack.c.h.b16 %v1958
        %v2047 = vunpack.c.l.b16 %v1959
        %v2048 = vunpack.c.h.b16 %v1959
        %v2049 = vunpack.c.l.b16 %v1960
        %v2050 = vunpack.c.h.b16 %v1960
        %v2051 = vunpack.c.l.b16 %v1961
        %v2052 = vunpack.c.h.b16 %v1961
        %v2053 = vunpack.c.l.b16 %v1962
        %v2054 = vunpack.c.h.b16 %v1962
        %v2055 = vunpack.c.l.b16 %v1963
        %v2056 = vunpack.c.h.b16 %v1963
        %v2057 = vunpack.c.l.b16 %v1964
        %v2058 = vunpack.c.h.b16 %v1964
        %v2059 = vunpack.c.l.b16 %v1965
        %v2060 = vunpack.c.h.b16 %v1965
        %v2061 = vunpack.c.l.b16 %v1966
        %v2062 = vunpack.c.h.b16 %v1966
        %v2063 = vpack.c.b16 %v2001, %v1999
        %v2064 = vpack.c.b16 %v2002, %v2000
        %v2065 = vpack.c.b16 %v2005, %v2003
        %v2066 = vpack.c.b16 %v2006, %v2004
        %v2067 = vpack.c.b16 %v2009, %v2007
        %v2068 = vpack.c.b16 %v2010, %v2008
        %v2069 = vpack.c.b16 %v2013, %v2011
        %v2070 = vpack.c.b16 %v2014, %v2012
        %v2071 = vpack.c.b16 %v2017, %v2015
        %v2072 = vpack.c.b16 %v2018, %v2016
        %v2073 = vpack.c.b16 %v2021, %v2019
        %v2074 = vpack.c.b16 %v2022, %v2020
        %v2075 = vpack.c.b16 %v2025, %v2023
        %v2076 = vpack.c.b16 %v2026, %v2024
        %v2077 = vpack.c.b16 %v2029, %v2027
        %v2078 = vpack.c.b16 %v2030, %v2028
        %v2079 = vpack.c.b16 %v2033, %v2031
        %v2080 = vpack.c.b16 %v2034, %v2032
        %v2081 = vpack.c.b16 %v2037, %v2035
        %v2082 = vpack.c.b16 %v2038, %v2036
        %v2083 = vpack.c.b16 %v2041, %v2039
        %v2084 = vpack.c.b16 %v2042, %v2040
        %v2085 = vpack.c.b16 %v2045, %v2043
        %v2086 = vpack.c.b16 %v2046, %v2044
        %v2087 = vpack.c.b16 %v2049, %v2047
        %v2088 = vpack.c.b16 %v2050, %v2048
        %v2089 = vpack.c.b16 %v2053, %v2051
        %v2090 = vpack.c.b16 %v2054, %v2052
        %v2091 = vpack.c.b16 %v2057, %v2055
        %v2092 = vpack.c.b16 %v2058, %v2056
        %v2093 = vpack.c.b16 %v2061, %v2059
        %v2094 = vpack.c.b16 %v2062, %v2060
        %2127 = vmatprep.subr.bf16.mxu0 %v2078
        %2128 = vmatpush1.bf16.msra.mxu0 %v2077
        %2129 = vmatprep.subr.bf16.mxu0 %v2076
        %2130 = vmatpush1.bf16.msra.mxu0 %v2075
        %2131 = vmatprep.subr.bf16.mxu0 %v2074
        %2132 = vmatpush1.bf16.msra.mxu0 %v2073
        %2133 = vmatprep.subr.bf16.mxu0 %v2072
        %2134 = vmatpush1.bf16.msra.mxu0 %v2071
        %2135 = vmatprep.subr.bf16.mxu0 %v2070
        %2136 = vmatpush1.bf16.msra.mxu0 %v2069
        %2137 = vmatprep.subr.bf16.mxu0 %v2068
        %2138 = vmatpush1.bf16.msra.mxu0 %v2067
        %2139 = vmatprep.subr.bf16.mxu0 %v2066
        %2140 = vmatpush1.bf16.msra.mxu0 %v2065
        %2141 = vmatprep.subr.bf16.mxu0 %v2064
        %2142 = vmatpush1.bf16.msra.mxu0 %v2063
        %2143 = vmatprep.subr.bf16.mxu0 %v2094
        %2144 = vmatpush2.bf16.msra.mxu0 %v2093
        %2145 = vmatprep.subr.bf16.mxu0 %v2092
        %2146 = vmatpush2.bf16.msra.mxu0 %v2091
        %2147 = vmatprep.subr.bf16.mxu0 %v2090
        %2148 = vmatpush2.bf16.msra.mxu0 %v2089
        %2149 = vmatprep.subr.bf16.mxu0 %v2088
        %2150 = vmatpush2.bf16.msra.mxu0 %v2087
        %2151 = vmatprep.subr.bf16.mxu0 %v2086
        %2152 = vmatpush2.bf16.msra.mxu0 %v2085
        %2153 = vmatprep.subr.bf16.mxu0 %v2084
        %2154 = vmatpush2.bf16.msra.mxu0 %v2083
        %2155 = vmatprep.subr.bf16.mxu0 %v2082
        %2156 = vmatpush2.bf16.msra.mxu0 %v2081
        %2157 = vmatprep.subr.bf16.mxu0 %v2080
        %2158 = vmatpush2.bf16.msra.mxu0 %v2079
        %2159 = vmatprep.mubr.bf16.mxu0 %v1920
        %2160 = vmatmul.mubr.bf16.gmra.mxu0 %v1919
        %v2161 = vpop.f32.mrf.mxu0
        %v2162 = vadd.f32 0.0, %v2161
        %v2163 = vpop.f32.mrf.mxu0
        %v2164 = vadd.f32 0.0, %v2163
        %v2165 = vpop.f32.mrf.mxu0
        %v2166 = vadd.f32 0.0, %v2165
        %v2167 = vpop.f32.mrf.mxu0
        %v2168 = vadd.f32 0.0, %v2167
        %2169 = vmatprep.mubr.bf16.mxu0 %v1922
        %2170 = vmatmul.mubr.bf16.gmra.mxu0 %v1921
        %v2171 = vpop.f32.mrf.mxu0
        %v2172 = vadd.f32 0.0, %v2171
        %v2173 = vpop.f32.mrf.mxu0
        %v2174 = vadd.f32 0.0, %v2173
        %v2175 = vpop.f32.mrf.mxu0
        %v2176 = vadd.f32 0.0, %v2175
        %v2177 = vpop.f32.mrf.mxu0
        %v2178 = vadd.f32 0.0, %v2177
        %2179 = vmatprep.mubr.bf16.mxu0 %v1924
        %2180 = vmatmul.mubr.bf16.gmra.mxu0 %v1923
        %v2181 = vpop.f32.mrf.mxu0
        %v2182 = vadd.f32 0.0, %v2181
        %v2183 = vpop.f32.mrf.mxu0
        %v2184 = vadd.f32 0.0, %v2183
        %v2185 = vpop.f32.mrf.mxu0
        %v2186 = vadd.f32 0.0, %v2185
        %v2187 = vpop.f32.mrf.mxu0
        %v2188 = vadd.f32 0.0, %v2187
        %2189 = vmatprep.mubr.bf16.mxu0 %v1926
        %2190 = vmatmul.mubr.bf16.gmra.mxu0 %v1925
        %v2191 = vpop.f32.mrf.mxu0
        %v2192 = vadd.f32 0.0, %v2191
        %v2193 = vpop.f32.mrf.mxu0
        %v2194 = vadd.f32 0.0, %v2193
        %v2195 = vpop.f32.mrf.mxu0
        %v2196 = vadd.f32 0.0, %v2195
        %v2197 = vpop.f32.mrf.mxu0
        %v2198 = vadd.f32 0.0, %v2197
        %2199 = vmatprep.mubr.bf16.mxu0 %v1928
        %2200 = vmatmul.mubr.bf16.gmra.mxu0 %v1927
        %v2201 = vpop.f32.mrf.mxu0
        %v2202 = vadd.f32 0.0, %v2201
        %v2203 = vpop.f32.mrf.mxu0
        %v2204 = vadd.f32 0.0, %v2203
        %v2205 = vpop.f32.mrf.mxu0
        %v2206 = vadd.f32 0.0, %v2205
        %v2207 = vpop.f32.mrf.mxu0
        %v2208 = vadd.f32 0.0, %v2207
        %2209 = vmatprep.mubr.bf16.mxu0 %v1930
        %2210 = vmatmul.mubr.bf16.gmra.mxu0 %v1929
        %v2211 = vpop.f32.mrf.mxu0
        %v2212 = vadd.f32 0.0, %v2211
        %v2213 = vpop.f32.mrf.mxu0
        %v2214 = vadd.f32 0.0, %v2213
        %v2215 = vpop.f32.mrf.mxu0
        %v2216 = vadd.f32 0.0, %v2215
        %v2217 = vpop.f32.mrf.mxu0
        %v2218 = vadd.f32 0.0, %v2217
        %2219 = vmatprep.mubr.bf16.mxu0 %v1932
        %2220 = vmatmul.mubr.bf16.gmra.mxu0 %v1931
        %v2221 = vpop.f32.mrf.mxu0
        %v2222 = vadd.f32 0.0, %v2221
        %v2223 = vpop.f32.mrf.mxu0
        %v2224 = vadd.f32 0.0, %v2223
        %v2225 = vpop.f32.mrf.mxu0
        %v2226 = vadd.f32 0.0, %v2225
        %v2227 = vpop.f32.mrf.mxu0
        %v2228 = vadd.f32 0.0, %v2227
        %2229 = vmatprep.mubr.bf16.mxu0 %v1934
        %2230 = vmatmul.mubr.bf16.gmra.mxu0 %v1933
        %v2231 = vpop.f32.mrf.mxu0
        %v2232 = vadd.f32 0.0, %v2231
        %v2233 = vpop.f32.mrf.mxu0
        %v2234 = vadd.f32 0.0, %v2233
        %v2235 = vpop.f32.mrf.mxu0
        %v2236 = vadd.f32 0.0, %v2235
        %v2237 = vpop.f32.mrf.mxu0
        %v2238 = vadd.f32 0.0, %v2237
        %2239 = vdwg.mxu0
        %v2240 = vadd.f32 %v1887, %v2162
        %v2241 = vadd.f32 %v1888, %v2164
        %v2242 = vadd.f32 %v1889, %v2166
        %v2243 = vadd.f32 %v1890, %v2168
        %v2244 = vadd.f32 %v1891, %v2172
        %v2245 = vadd.f32 %v1892, %v2174
        %v2246 = vadd.f32 %v1893, %v2176
        %v2247 = vadd.f32 %v1894, %v2178
        %v2248 = vadd.f32 %v1895, %v2182
        %v2249 = vadd.f32 %v1896, %v2184
        %v2250 = vadd.f32 %v1897, %v2186
        %v2251 = vadd.f32 %v1898, %v2188
        %v2252 = vadd.f32 %v1899, %v2192
        %v2253 = vadd.f32 %v1900, %v2194
        %v2254 = vadd.f32 %v1901, %v2196
        %v2255 = vadd.f32 %v1902, %v2198
        %v2256 = vadd.f32 %v1903, %v2202
        %v2257 = vadd.f32 %v1904, %v2204
        %v2258 = vadd.f32 %v1905, %v2206
        %v2259 = vadd.f32 %v1906, %v2208
        %v2260 = vadd.f32 %v1907, %v2212
        %v2261 = vadd.f32 %v1908, %v2214
        %v2262 = vadd.f32 %v1909, %v2216
        %v2263 = vadd.f32 %v1910, %v2218
        %v2264 = vadd.f32 %v1911, %v2222
        %v2265 = vadd.f32 %v1912, %v2224
        %v2266 = vadd.f32 %v1913, %v2226
        %v2267 = vadd.f32 %v1914, %v2228
        %v2268 = vadd.f32 %v1915, %v2232
        %v2269 = vadd.f32 %v1916, %v2234
        %v2270 = vadd.f32 %v1917, %v2236
        %v2271 = vadd.f32 %v1918, %v2238
        %2272 = vst [vmem:[#allocation2] sm:$0xff] %v2240
        %2273 = vst [vmem:[#allocation2 + $0x8] sm:$0xff] %v2241
        %2274 = vst [vmem:[#allocation2 + $0x10] sm:$0xff] %v2242
        %2275 = vst [vmem:[#allocation2 + $0x18] sm:$0xff] %v2243
        %2276 = vst [vmem:[#allocation2 + $0x20] sm:$0xff] %v2244
        %2277 = vst [vmem:[#allocation2 + $0x28] sm:$0xff] %v2245
        %2278 = vst [vmem:[#allocation2 + $0x30] sm:$0xff] %v2246
        %2279 = vst [vmem:[#allocation2 + $0x38] sm:$0xff] %v2247
        %2280 = vst [vmem:[#allocation2 + $0x40] sm:$0xff] %v2248
        %2281 = vst [vmem:[#allocation2 + $0x48] sm:$0xff] %v2249
        %2282 = vst [vmem:[#allocation2 + $0x50] sm:$0xff] %v2250
        %2283 = vst [vmem:[#allocation2 + $0x58] sm:$0xff] %v2251
        %2284 = vst [vmem:[#allocation2 + $0x60] sm:$0xff] %v2252
        %2285 = vst [vmem:[#allocation2 + $0x68] sm:$0xff] %v2253
        %2286 = vst [vmem:[#allocation2 + $0x70] sm:$0xff] %v2254
        %2287 = vst [vmem:[#allocation2 + $0x78] sm:$0xff] %v2255
        %2288 = vst [vmem:[#allocation2 + $0x80] sm:$0xff] %v2256
        %2289 = vst [vmem:[#allocation2 + $0x88] sm:$0xff] %v2257
        %2290 = vst [vmem:[#allocation2 + $0x90] sm:$0xff] %v2258
        %2291 = vst [vmem:[#allocation2 + $0x98] sm:$0xff] %v2259
        %2292 = vst [vmem:[#allocation2 + $0xa0] sm:$0xff] %v2260
        %2293 = vst [vmem:[#allocation2 + $0xa8] sm:$0xff] %v2261
        %2294 = vst [vmem:[#allocation2 + $0xb0] sm:$0xff] %v2262
        %2295 = vst [vmem:[#allocation2 + $0xb8] sm:$0xff] %v2263
        %2296 = vst [vmem:[#allocation2 + $0xc0] sm:$0xff] %v2264
        %2297 = vst [vmem:[#allocation2 + $0xc8] sm:$0xff] %v2265
        %2298 = vst [vmem:[#allocation2 + $0xd0] sm:$0xff] %v2266
        %2299 = vst [vmem:[#allocation2 + $0xd8] sm:$0xff] %v2267
        %2300 = vst [vmem:[#allocation2 + $0xe0] sm:$0xff] %v2268
        %2301 = vst [vmem:[#allocation2 + $0xe8] sm:$0xff] %v2269
        %2302 = vst [vmem:[#allocation2 + $0xf0] sm:$0xff] %v2270
        %2303 = vst [vmem:[#allocation2 + $0xf8] sm:$0xff] %v2271
        %p2304 = scmp.eq.s32.totalorder %s31, 1
        // Predicated region
        $region65: #{_customized_mlp_call.1} parent=39 // pred_check
          %p2305 = pneg %p2304
        $region66: #{_customized_mlp_call.1} parent=39 // pred_check_branch
          %2307 = sbr.rel (%p2305) target = $region68
        $region67: #{_customized_mlp_call.1} parent=39 // pred_region
          %v2308 = vld [vmem:[#allocation2] sm:$0xff]
          %v2309 = vld [vmem:[#allocation2 + $0x8] sm:$0xff]
          %v2310 = vld [vmem:[#allocation2 + $0x10] sm:$0xff]
          %v2311 = vld [vmem:[#allocation2 + $0x18] sm:$0xff]
          %v2312 = vld [vmem:[#allocation2 + $0x20] sm:$0xff]
          %v2313 = vld [vmem:[#allocation2 + $0x28] sm:$0xff]
          %v2314 = vld [vmem:[#allocation2 + $0x30] sm:$0xff]
          %v2315 = vld [vmem:[#allocation2 + $0x38] sm:$0xff]
          %v2316 = vld [vmem:[#allocation2 + $0x40] sm:$0xff]
          %v2317 = vld [vmem:[#allocation2 + $0x48] sm:$0xff]
          %v2318 = vld [vmem:[#allocation2 + $0x50] sm:$0xff]
          %v2319 = vld [vmem:[#allocation2 + $0x58] sm:$0xff]
          %v2320 = vld [vmem:[#allocation2 + $0x60] sm:$0xff]
          %v2321 = vld [vmem:[#allocation2 + $0x68] sm:$0xff]
          %v2322 = vld [vmem:[#allocation2 + $0x70] sm:$0xff]
          %v2323 = vld [vmem:[#allocation2 + $0x78] sm:$0xff]
          %v2324 = vld [vmem:[#allocation2 + $0x80] sm:$0xff]
          %v2325 = vld [vmem:[#allocation2 + $0x88] sm:$0xff]
          %v2326 = vld [vmem:[#allocation2 + $0x90] sm:$0xff]
          %v2327 = vld [vmem:[#allocation2 + $0x98] sm:$0xff]
          %v2328 = vld [vmem:[#allocation2 + $0xa0] sm:$0xff]
          %v2329 = vld [vmem:[#allocation2 + $0xa8] sm:$0xff]
          %v2330 = vld [vmem:[#allocation2 + $0xb0] sm:$0xff]
          %v2331 = vld [vmem:[#allocation2 + $0xb8] sm:$0xff]
          %v2332 = vld [vmem:[#allocation2 + $0xc0] sm:$0xff]
          %v2333 = vld [vmem:[#allocation2 + $0xc8] sm:$0xff]
          %v2334 = vld [vmem:[#allocation2 + $0xd0] sm:$0xff]
          %v2335 = vld [vmem:[#allocation2 + $0xd8] sm:$0xff]
          %v2336 = vld [vmem:[#allocation2 + $0xe0] sm:$0xff]
          %v2337 = vld [vmem:[#allocation2 + $0xe8] sm:$0xff]
          %v2338 = vld [vmem:[#allocation2 + $0xf0] sm:$0xff]
          %v2339 = vld [vmem:[#allocation2 + $0xf8] sm:$0xff]
          %v2340 = vpack.c.bf16 %v2310, %v2308
          %v2341 = vpack.c.bf16 %v2311, %v2309
          %v2342 = vpack.c.bf16 %v2314, %v2312
          %v2343 = vpack.c.bf16 %v2315, %v2313
          %v2344 = vpack.c.bf16 %v2318, %v2316
          %v2345 = vpack.c.bf16 %v2319, %v2317
          %v2346 = vpack.c.bf16 %v2322, %v2320
          %v2347 = vpack.c.bf16 %v2323, %v2321
          %v2348 = vpack.c.bf16 %v2326, %v2324
          %v2349 = vpack.c.bf16 %v2327, %v2325
          %v2350 = vpack.c.bf16 %v2330, %v2328
          %v2351 = vpack.c.bf16 %v2331, %v2329
          %v2352 = vpack.c.bf16 %v2334, %v2332
          %v2353 = vpack.c.bf16 %v2335, %v2333
          %v2354 = vpack.c.bf16 %v2338, %v2336
          %v2355 = vpack.c.bf16 %v2339, %v2337
          %v2372 = vunpack.c.l.b16 %v2340
          %v2373 = vunpack.c.l.b16 %v2341
          %v2374 = vunpack.c.h.b16 %v2340
          %v2375 = vunpack.c.h.b16 %v2341
          %v2376 = vunpack.c.l.b16 %v2342
          %v2377 = vunpack.c.l.b16 %v2343
          %v2378 = vunpack.c.h.b16 %v2342
          %v2379 = vunpack.c.h.b16 %v2343
          %v2380 = vunpack.c.l.b16 %v2344
          %v2381 = vunpack.c.l.b16 %v2345
          %v2382 = vunpack.c.h.b16 %v2344
          %v2383 = vunpack.c.h.b16 %v2345
          %v2384 = vunpack.c.l.b16 %v2346
          %v2385 = vunpack.c.l.b16 %v2347
          %v2386 = vunpack.c.h.b16 %v2346
          %v2387 = vunpack.c.h.b16 %v2347
          %v2388 = vunpack.c.l.b16 %v2348
          %v2389 = vunpack.c.l.b16 %v2349
          %v2390 = vunpack.c.h.b16 %v2348
          %v2391 = vunpack.c.h.b16 %v2349
          %v2392 = vunpack.c.l.b16 %v2350
          %v2393 = vunpack.c.l.b16 %v2351
          %v2394 = vunpack.c.h.b16 %v2350
          %v2395 = vunpack.c.h.b16 %v2351
          %v2396 = vunpack.c.l.b16 %v2352
          %v2397 = vunpack.c.l.b16 %v2353
          %v2398 = vunpack.c.h.b16 %v2352
          %v2399 = vunpack.c.h.b16 %v2353
          %v2400 = vunpack.c.l.b16 %v2354
          %v2401 = vunpack.c.l.b16 %v2355
          %v2402 = vunpack.c.h.b16 %v2354
          %v2403 = vunpack.c.h.b16 %v2355
          %v2404 = vpack.c.b16 %v2373, %v2372
          %v2405 = vpack.c.b16 %v2375, %v2374
          %v2406 = vpack.c.b16 %v2377, %v2376
          %v2407 = vpack.c.b16 %v2379, %v2378
          %v2408 = vpack.c.b16 %v2381, %v2380
          %v2409 = vpack.c.b16 %v2383, %v2382
          %v2410 = vpack.c.b16 %v2385, %v2384
          %v2411 = vpack.c.b16 %v2387, %v2386
          %v2412 = vpack.c.b16 %v2389, %v2388
          %v2413 = vpack.c.b16 %v2391, %v2390
          %v2414 = vpack.c.b16 %v2393, %v2392
          %v2415 = vpack.c.b16 %v2395, %v2394
          %v2416 = vpack.c.b16 %v2397, %v2396
          %v2417 = vpack.c.b16 %v2399, %v2398
          %v2418 = vpack.c.b16 %v2401, %v2400
          %v2419 = vpack.c.b16 %v2403, %v2402
          %2436 = vst [vmem:[%s362] sm:$0xff] %v2404
          %2437 = vst [vmem:[%s362 + $0x8] sm:$0xff] %v2405
          %2438 = vst [vmem:[%s362 + $0x10] sm:$0xff] %v2406
          %2439 = vst [vmem:[%s362 + $0x18] sm:$0xff] %v2407
          %2440 = vst [vmem:[%s362 + $0x20] sm:$0xff] %v2408
          %2441 = vst [vmem:[%s362 + $0x28] sm:$0xff] %v2409
          %2442 = vst [vmem:[%s362 + $0x30] sm:$0xff] %v2410
          %2443 = vst [vmem:[%s362 + $0x38] sm:$0xff] %v2411
          %2444 = vst [vmem:[%s362 + $0x40] sm:$0xff] %v2412
          %2445 = vst [vmem:[%s362 + $0x48] sm:$0xff] %v2413
          %2446 = vst [vmem:[%s362 + $0x50] sm:$0xff] %v2414
          %2447 = vst [vmem:[%s362 + $0x58] sm:$0xff] %v2415
          %2448 = vst [vmem:[%s362 + $0x60] sm:$0xff] %v2416
          %2449 = vst [vmem:[%s362 + $0x68] sm:$0xff] %v2417
          %2450 = vst [vmem:[%s362 + $0x70] sm:$0xff] %v2418
          %2451 = vst [vmem:[%s362 + $0x78] sm:$0xff] %v2419
        $region68: #{_customized_mlp_call.1} parent=39 // pred_fallthru
          _
        %s2452 = sand.u32 %s166, 1
        %s2453 = scalar_lea.sflag [#allocation5], %s2452
        %s2454 = sand.u32 %s166, 1
        %s2455 = smul.addr %s2454, 128
        %s2456 = scalar_lea.vmem [#allocation12], %s2455
        // Predicated region
        $region69: #{_customized_mlp_call.1} parent=39 // pred_check
          %p2457 = pneg %p176
        $region70: #{_customized_mlp_call.1} parent=39 // pred_check_branch
          %2459 = sbr.rel (%p2457) target = $region72
        $region71: #{_customized_mlp_call.1} parent=39 // pred_region
          %s2460 = smul.u32 16, %s30
          %s2462 = ssub.s32 2048, 2048
          %2463 = vsyncadd %s2453, %s2462
          %s2464 = smul.addr %s2460, 2
          %s2465 = smul.addr %s2464, 64
          %s2466 = scalar_lea.hbm %s5, %s2465
          %s2467 = sshll.u32 %s2456, 4
          %s2468 = int_to_ptr.vmem [resolvable:$true] %s2467
          %2473 = dma.vmem_to_hbm [thread:$0]  %s2468, 2048, %s2466, %s2453, 128, 128, 8
        $region72: #{_customized_mlp_call.1} parent=39 // pred_fallthru
          _
      $region40: #{_customized_mlp_call.1} parent=5 // pred_fallthru
        _
      %p2474 = scmp.le.s32.totalorder 2, %s21
      // Predicated region
      $region73: #{_customized_mlp_call.1} parent=5 // pred_check
        %p2475 = pneg %p2474
      $region74: #{_customized_mlp_call.1} parent=5 // pred_check_branch
        %2477 = sbr.rel (%p2475) target = $region76
      $region75: #{_customized_mlp_call.1} parent=5 // pred_region
        %s2478 = ssub.s32 %s21, 2
        // Predicated region
        $region77: #{_customized_mlp_call.1} parent=75 // pred_check
          %p2479 = pneg %p182
        $region78: #{_customized_mlp_call.1} parent=75 // pred_check_branch
          %2481 = sbr.rel (%p2479) target = $region80
        $region79: #{_customized_mlp_call.1} parent=75 // pred_region
          %s2482 = sand.u32 %s167, 1
          %s2483 = scalar_lea.sflag [#allocation5], %s2482
          %s2484 = sand.u32 %s167, 1
          %s2485 = smul.addr %s2484, 128
          %s2486 = scalar_lea.vmem [#allocation12], %s2485
          %2487 = dma.done %s2483, 2048
        $region80: #{_customized_mlp_call.1} parent=75 // pred_fallthru
          _
      $region76: #{_customized_mlp_call.1} parent=5 // pred_fallthru
        _
    $region6: #{_customized_mlp_call.1} parent=1 // loop_footer
      %s25 = sadd.s32 1, %s21
    $region7: #{_customized_mlp_call.1} parent=1 // loop_footer_branch
      %20 = sbr.rel target = $region3
    $region8: #{_customized_mlp_call.1} parent=1 // loop_exit
      _
    %2488 = vsyncpa [#allocation4], 1
    %s2489 = scalar_lea.sflag [#allocation4], 1
    %2490 = vsyncpa %s2489, 1
    %2491 = vsyncpa [#allocation7], 1
    %s2492 = scalar_lea.sflag [#allocation7], 1
    %2493 = vsyncpa %s2492, 1
    %2494 = vsyncpa [#allocation10], 1
    %2495 = vsyncpa [#allocation5], 1
    %s2496 = scalar_lea.sflag [#allocation5], 1
    %2497 = vsyncpa %s2496, 1

// kernel: _customized_mlp_call.1
$region0: #{_customized_mlp_call.1}
  #allocation0 [shape = 'u32[]', space=smem, size = 0x4, offset = 0x4, fixed_abs, tag = 'smem constant byte address 0x4 - core index']
  #allocation1 [shape = 'u32[144,128]{1,0:T(1,128)}', space=vmem, size = 0x12000, scoped, tag = 'internal scratch']
  #allocation2 [shape = 'f32[128,256]{1,0:T(8,128)}', space=vmem, size = 0x20000, scoped, tag = 'scratch operand']
  %s0 = inlined_call_operand.hbm [shape: bf16[256,256], index: 0, kind: input, shape index: {}]
  %s1 = inlined_call_operand.hbm [shape: bf16[2,256,512], index: 1, kind: input, shape index: {}]
  %s2 = inlined_call_operand.hbm [shape: bf16[512,256], index: 2, kind: input, shape index: {}]
  %s3 = inlined_call_operand.hbm [shape: bf16[256,128], index: 3, kind: input, shape index: {}]
  %s4 = inlined_call_operand.hbm [shape: bf16[128,256], index: 4, kind: input, shape index: {}]
  %s5 = inlined_call_operand.hbm [shape: bf16[256,256], index: 5, kind: output, shape index: {}]
  %s6 = sld [smem:[#allocation0]]
  $region81: #{_customized_mlp_call.1} parent=0
    _
  %s8 = ssub.s32 1, %s6
  %s9 = scalar_select 0, %s8, %s6
  $region1: #{_customized_mlp_call.1} parent=0
    #allocation3 [shape = 'u8[131072]{0}', space=vmem, size = 0x20000, scoped, tag = 'input window, operand 0']
    #allocation4 [shape = 's32[2]{0}', space=sflag, size = 0x8, scoped, tag = 'scoped memory for _customized_mlp_call.1']
    #allocation5 [shape = 's32[2]{0}', space=sflag, size = 0x8, scoped, tag = 'scoped memory for _customized_mlp_call.1']
    #allocation6 [shape = 'u8[524288]{0}', space=vmem, size = 0x80000, scoped, tag = 'input window, operand 1']
    #allocation7 [shape = 's32[2]{0}', space=sflag, size = 0x8, scoped, tag = 'scoped memory for _customized_mlp_call.1']
    #allocation8 [shape = 'u8[262144]{0}', space=vmem, size = 0x40000, scoped, tag = 'input window, operand 2']
    #allocation9 [shape = 'u8[65536]{0}', space=vmem, size = 0x10000, scoped, tag = 'input window, operand 3, single buffered']
    #allocation10 [shape = 's32[1]{0}', space=sflag, size = 0x4, scoped, tag = 'scoped memory for _customized_mlp_call.1']
    #allocation11 [shape = 'u8[65536]{0}', space=vmem, size = 0x10000, scoped, tag = 'input window, operand 4, single buffered']
    #allocation12 [shape = 'u8[131072]{0}', space=vmem, size = 0x20000, scoped, tag = 'output window, operand 0']
    %10 = vsyncpa [#allocation4], 0
    %s11 = scalar_lea.sflag [#allocation4], 1
    %12 = vsyncpa %s11, 0
    %13 = vsyncpa [#allocation7], 0
    %s14 = scalar_lea.sflag [#allocation7], 1
    %15 = vsyncpa %s14, 0
    %16 = vsyncpa [#allocation10], 0
    %17 = vsyncpa [#allocation5], 0
    %s18 = scalar_lea.sflag [#allocation5], 1
    %19 = vsyncpa %s18, 0
    loop: start=0, step=1, limit=6
    $region2: #{_customized_mlp_call.1} parent=1 // loop_pre_header
      _
    $region3: #{_customized_mlp_call.1} parent=1 // loop_header
      %s21 = sphi 0, %s25
      %p22 = scmp.ge.s32.totalorder %s21, 6
      %s28 = sphi 0, %s40
      %s29 = sphi 0, %s36
      %s30 = sphi 0, %s28
      %s31 = sphi 0, %s29
      %s32 = sphi 0, %s30
      %s33 = sphi 0, %s31
      %s43 = sphi 0, %s45
      %s46 = sphi 0, %s43
      %s47 = sphi 0, %s46
      %s63 = sphi 0, %s47
      %s69 = sphi 0, %s71
      %s72 = sphi 0, %s69
      %s73 = sphi 0, %s72
      %s89 = sphi 0, %s73
      %s95 = sphi 0, %s97
      %s98 = sphi 0, %s95
      %s99 = sphi 0, %s98
      %s115 = sphi 0, %s99
      %s119 = sphi 0, %s119
      %s121 = sphi 0, %s119
      %s122 = sphi 0, %s121
      %s136 = sphi 0, %s122
      %s140 = sphi 0, %s140
      %s142 = sphi 0, %s140
      %s143 = sphi 0, %s142
      %s157 = sphi 0, %s143
      %s163 = sphi 0, %s165
      %s166 = sphi 0, %s163
      %s167 = sphi 0, %s166
      %s183 = sphi 0, %s167
    $region4: #{_customized_mlp_call.1} parent=1 // loop_header_branch
      %24 = sbr.rel (%p22) target = $region8
    $region5: #{_customized_mlp_call.1} parent=1 // loop_body
      %s26 = ssub.s32 %s21, 1
      %s27 = ssub.s32 %s21, 2
      %s34 = sadd.s32 1, %s29
      %p35 = scmp.ge.s32.totalorder %s34, 2
      %s36 = scalar_select %p35, 0, %s34
      %s37 = sadd.s32 1, %s28
      %s38 = scalar_select %p35, %s37, %s28
      %p39 = scmp.ge.s32.totalorder %s38, 2
      %s40 = scalar_select %p39, 0, %s38
      %s41 = ssub.s32 %s28, %s40
      %p42 = scmp.eq.s32.totalorder %s41, 0
      %s44 = sadd.s32 %s43, 1
      %s45 = scalar_select %p42, %s43, %s44
      %p48 = pneg %p42
      %p49 = scmp.eq.s32.totalorder %s21, 3
      %p50 = por %p48, %p49
      %p51 = scmp.ne.s32.totalorder %s43, %s46
      %p52 = scmp.eq.s32.totalorder %s21, 0
      %p53 = por %p51, %p52
      %p54 = scmp.ne.s32.totalorder %s43, %s46
      %p55 = scmp.eq.s32.totalorder %s26, 3
      %p56 = por %p54, %p55
      %p57 = scmp.ne.s32.totalorder %s46, %s47
      %p58 = scmp.eq.s32.totalorder %s26, 0
      %p59 = por %p57, %p58
      %p60 = scmp.ne.s32.totalorder %s46, %s47
      %p61 = scmp.eq.s32.totalorder %s27, 3
      %p62 = por %p60, %p61
      %p64 = scmp.ne.s32.totalorder %s47, %s63
      %p65 = scmp.eq.s32.totalorder %s27, 0
      %p66 = por %p64, %p65
      %s67 = ssub.s32 %s29, %s36
      %p68 = scmp.eq.s32.totalorder %s67, 0
      %s70 = sadd.s32 %s69, 1
      %s71 = scalar_select %p68, %s69, %s70
      %p74 = pneg %p68
      %p75 = scmp.eq.s32.totalorder %s21, 3
      %p76 = por %p74, %p75
      %p77 = scmp.ne.s32.totalorder %s69, %s72
      %p78 = scmp.eq.s32.totalorder %s21, 0
      %p79 = por %p77, %p78
      %p80 = scmp.ne.s32.totalorder %s69, %s72
      %p81 = scmp.eq.s32.totalorder %s26, 3
      %p82 = por %p80, %p81
      %p83 = scmp.ne.s32.totalorder %s72, %s73
      %p84 = scmp.eq.s32.totalorder %s26, 0
      %p85 = por %p83, %p84
      %p86 = scmp.ne.s32.totalorder %s72, %s73
      %p87 = scmp.eq.s32.totalorder %s27, 3
      %p88 = por %p86, %p87
      %p90 = scmp.ne.s32.totalorder %s73, %s89
      %p91 = scmp.eq.s32.totalorder %s27, 0
      %p92 = por %p90, %p91
      %s93 = ssub.s32 %s29, %s36
      %p94 = scmp.eq.s32.totalorder %s93, 0
      %s96 = sadd.s32 %s95, 1
      %s97 = scalar_select %p94, %s95, %s96
      %p100 = pneg %p94
      %p101 = scmp.eq.s32.totalorder %s21, 3
      %p102 = por %p100, %p101
      %p103 = scmp.ne.s32.totalorder %s95, %s98
      %p104 = scmp.eq.s32.totalorder %s21, 0
      %p105 = por %p103, %p104
      %p106 = scmp.ne.s32.totalorder %s95, %s98
      %p107 = scmp.eq.s32.totalorder %s26, 3
      %p108 = por %p106, %p107
      %p109 = scmp.ne.s32.totalorder %s98, %s99
      %p110 = scmp.eq.s32.totalorder %s26, 0
      %p111 = por %p109, %p110
      %p112 = scmp.ne.s32.totalorder %s98, %s99
      %p113 = scmp.eq.s32.totalorder %s27, 3
      %p114 = por %p112, %p113
      %p116 = scmp.ne.s32.totalorder %s99, %s115
      %p117 = scmp.eq.s32.totalorder %s27, 0
      %p118 = por %p116, %p117
      %s120 = sadd.s32 %s119, 1
      %p123 = scmp.eq.s32.totalorder %s21, 3
      %p124 = scmp.ne.s32.totalorder %s119, %s121
      %p125 = scmp.eq.s32.totalorder %s21, 0
      %p126 = por %p124, %p125
      %p127 = scmp.ne.s32.totalorder %s119, %s121
      %p128 = scmp.eq.s32.totalorder %s26, 3
      %p129 = por %p127, %p128
      %p130 = scmp.ne.s32.totalorder %s121, %s122
      %p131 = scmp.eq.s32.totalorder %s26, 0
      %p132 = por %p130, %p131
      %p133 = scmp.ne.s32.totalorder %s121, %s122
      %p134 = scmp.eq.s32.totalorder %s27, 3
      %p135 = por %p133, %p134
      %p137 = scmp.ne.s32.totalorder %s122, %s136
      %p138 = scmp.eq.s32.totalorder %s27, 0
      %p139 = por %p137, %p138
      %s141 = sadd.s32 %s140, 1
      %p144 = scmp.eq.s32.totalorder %s21, 3
      %p145 = scmp.ne.s32.totalorder %s140, %s142
      %p146 = scmp.eq.s32.totalorder %s21, 0
      %p147 = por %p145, %p146
      %p148 = scmp.ne.s32.totalorder %s140, %s142
      %p149 = scmp.eq.s32.totalorder %s26, 3
      %p150 = por %p148, %p149
      %p151 = scmp.ne.s32.totalorder %s142, %s143
      %p152 = scmp.eq.s32.totalorder %s26, 0
      %p153 = por %p151, %p152
      %p154 = scmp.ne.s32.totalorder %s142, %s143
      %p155 = scmp.eq.s32.totalorder %s27, 3
      %p156 = por %p154, %p155
      %p158 = scmp.ne.s32.totalorder %s143, %s157
      %p159 = scmp.eq.s32.totalorder %s27, 0
      %p160 = por %p158, %p159
      %s161 = ssub.s32 %s28, %s40
      %p162 = scmp.eq.s32.totalorder %s161, 0
      %s164 = sadd.s32 %s163, 1
      %s165 = scalar_select %p162, %s163, %s164
      %p168 = pneg %p162
      %p169 = scmp.eq.s32.totalorder %s21, 3
      %p170 = por %p168, %p169
      %p171 = scmp.ne.s32.totalorder %s163, %s166
      %p172 = scmp.eq.s32.totalorder %s21, 0
      %p173 = por %p171, %p172
      %p174 = scmp.ne.s32.totalorder %s163, %s166
      %p175 = scmp.eq.s32.totalorder %s26, 3
      %p176 = por %p174, %p175
      %p177 = scmp.ne.s32.totalorder %s166, %s167
      %p178 = scmp.eq.s32.totalorder %s26, 0
      %p179 = por %p177, %p178
      %p180 = scmp.ne.s32.totalorder %s166, %s167
      %p181 = scmp.eq.s32.totalorder %s27, 3
      %p182 = por %p180, %p181
      %p184 = scmp.ne.s32.totalorder %s167, %s183
      %p185 = scmp.eq.s32.totalorder %s27, 0
      %p186 = por %p184, %p185
      %p187 = scmp.le.s32.totalorder 1, %s21
      %p188 = scmp.lt.s32.totalorder %s21, 5
      %p189 = pnand %p187, %p188
      %p190 = pneg %p189
      // Predicated region
      $region9: #{_customized_mlp_call.1} parent=5 // pred_check
        _
      $region10: #{_customized_mlp_call.1} parent=5 // pred_check_branch
        %192 = sbr.rel (%p189) target = $region12
      $region11: #{_customized_mlp_call.1} parent=5 // pred_region
        %s193 = ssub.s32 %s21, 1
        // Predicated region
        $region13: #{_customized_mlp_call.1} parent=11 // pred_check
          %p194 = pneg %p132
        $region14: #{_customized_mlp_call.1} parent=11 // pred_check_branch
          %196 = sbr.rel (%p194) target = $region16
        $region15: #{_customized_mlp_call.1} parent=11 // pred_region
          %s198 = ssub.s32 2048, 2048
          %199 = vsyncadd [#allocation10], %s198
          %s200 = sshll.u32 [#allocation9], 4
          %s201 = int_to_ptr.vmem [resolvable:$true] %s200
          %206 = dma.hbm_to_vmem [thread:$0]  %s3, 2048, %s201, [#allocation10], 64, 64, 4
        $region16: #{_customized_mlp_call.1} parent=11 // pred_fallthru
          _
        // Predicated region
        $region17: #{_customized_mlp_call.1} parent=11 // pred_check
          %p207 = pneg %p153
        $region18: #{_customized_mlp_call.1} parent=11 // pred_check_branch
          %209 = sbr.rel (%p207) target = $region20
        $region19: #{_customized_mlp_call.1} parent=11 // pred_region
          %s211 = ssub.s32 2048, 2048
          %212 = vsyncadd [#allocation10], %s211
          %s213 = sshll.u32 [#allocation11], 4
          %s214 = int_to_ptr.vmem [resolvable:$true] %s213
          %219 = dma.hbm_to_vmem [thread:$0]  %s4, 2048, %s214, [#allocation10], 128, 128, 8
        $region20: #{_customized_mlp_call.1} parent=11 // pred_fallthru
          _
      $region12: #{_customized_mlp_call.1} parent=5 // pred_fallthru
        _
      %p220 = scmp.lt.s32.totalorder %s21, 4
      // Predicated region
      $region21: #{_customized_mlp_call.1} parent=5 // pred_check
        %p221 = pneg %p220
      $region22: #{_customized_mlp_call.1} parent=5 // pred_check_branch
        %223 = sbr.rel (%p221) target = $region24
      $region23: #{_customized_mlp_call.1} parent=5 // pred_region
        // Predicated region
        $region25: #{_customized_mlp_call.1} parent=23 // pred_check
          %p224 = pneg %p53
        $region26: #{_customized_mlp_call.1} parent=23 // pred_check_branch
          %226 = sbr.rel (%p224) target = $region28
        $region27: #{_customized_mlp_call.1} parent=23 // pred_region
          %s227 = sand.u32 %s43, 1
          %s228 = scalar_lea.sflag [#allocation4], %s227
          %s229 = sand.u32 %s43, 1
          %s230 = smul.addr %s229, 128
          %s231 = scalar_lea.vmem [#allocation3], %s230
          %s232 = smul.u32 16, %s28
          %s234 = ssub.s32 2048, 2048
          %235 = vsyncadd %s228, %s234
          %s236 = smul.addr %s232, 2
          %s237 = smul.addr %s236, 64
          %s238 = scalar_lea.hbm %s0, %s237
          %s239 = sshll.u32 %s231, 4
          %s240 = int_to_ptr.vmem [resolvable:$true] %s239
          %245 = dma.hbm_to_vmem [thread:$0]  %s238, 2048, %s240, %s228, 128, 128, 8
        $region28: #{_customized_mlp_call.1} parent=23 // pred_fallthru
          _
        // Predicated region
        $region29: #{_customized_mlp_call.1} parent=23 // pred_check
          %p246 = pneg %p79
        $region30: #{_customized_mlp_call.1} parent=23 // pred_check_branch
          %248 = sbr.rel (%p246) target = $region32
        $region31: #{_customized_mlp_call.1} parent=23 // pred_region
          %s249 = sand.u32 %s21, 1
          %s250 = scalar_lea.sflag [#allocation7], %s249
          %s251 = sand.u32 %s69, 1
          %s252 = smul.addr %s251, 512
          %s253 = scalar_lea.vmem [#allocation6], %s252
          %s255 = ssub.s32 8192, 8192
          %256 = vsyncadd %s250, %s255
          %s257 = smul.addr %s29, 128
          %s258 = smul.addr %s257, 64
          %s259 = scalar_lea.hbm %s1, %s258
          %s260 = sshll.u32 %s253, 4
          %s261 = int_to_ptr.vmem [resolvable:$true] %s260
          %266 = dma.hbm_to_vmem [thread:$0]  %s259, 8192, %s261, %s250, 256, 256, 16
        $region32: #{_customized_mlp_call.1} parent=23 // pred_fallthru
          _
        // Predicated region
        $region33: #{_customized_mlp_call.1} parent=23 // pred_check
          %p267 = pneg %p105
        $region34: #{_customized_mlp_call.1} parent=23 // pred_check_branch
          %269 = sbr.rel (%p267) target = $region36
        $region35: #{_customized_mlp_call.1} parent=23 // pred_region
          %s270 = sand.u32 %s21, 1
          %s271 = scalar_lea.sflag [#allocation7], %s270
          %s272 = sand.u32 %s95, 1
          %s273 = smul.addr %s272, 256
          %s274 = scalar_lea.vmem [#allocation8], %s273
          %s275 = smul.u32 32, %s29
          %s277 = ssub.s32 4096, 4096
          %278 = vsyncadd %s271, %s277
          %s279 = smul.addr %s275, 2
          %s280 = smul.addr %s279, 64
          %s281 = scalar_lea.hbm %s2, %s280
          %s282 = sshll.u32 %s274, 4
          %s283 = int_to_ptr.vmem [resolvable:$true] %s282
          %288 = dma.hbm_to_vmem [thread:$0]  %s281, 4096, %s283, %s271, 128, 128, 8
        $region36: #{_customized_mlp_call.1} parent=23 // pred_fallthru
          _
      $region24: #{_customized_mlp_call.1} parent=5 // pred_fallthru
        _
      %p289 = scmp.le.s32.totalorder 1, %s21
      %p290 = scmp.lt.s32.totalorder %s21, 5
      %p291 = pnand %p289, %p290
      %p292 = pneg %p291
      // Predicated region
      $region37: #{_customized_mlp_call.1} parent=5 // pred_check
        _
      $region38: #{_customized_mlp_call.1} parent=5 // pred_check_branch
        %294 = sbr.rel (%p291) target = $region40
      $region39: #{_customized_mlp_call.1} parent=5 // pred_region
        %s295 = ssub.s32 %s21, 1
        %s296 = sand.u32 %s46, 1
        %s297 = scalar_lea.sflag [#allocation4], %s296
        %s298 = sand.u32 %s46, 1
        %s299 = smul.addr %s298, 128
        %s300 = scalar_lea.vmem [#allocation3], %s299
        // Predicated region
        $region41: #{_customized_mlp_call.1} parent=39 // pred_check
          %p301 = pneg %p59
        $region42: #{_customized_mlp_call.1} parent=39 // pred_check_branch
          %303 = sbr.rel (%p301) target = $region44
        $region43: #{_customized_mlp_call.1} parent=39 // pred_region
          %304 = dma.done %s297, 2048
        $region44: #{_customized_mlp_call.1} parent=39 // pred_fallthru
          _
        %s305 = sand.u32 %s26, 1
        %s306 = scalar_lea.sflag [#allocation7], %s305
        %s307 = sand.u32 %s72, 1
        %s308 = smul.addr %s307, 512
        %s309 = scalar_lea.vmem [#allocation6], %s308
        // Predicated region
        $region45: #{_customized_mlp_call.1} parent=39 // pred_check
          %p310 = pneg %p85
        $region46: #{_customized_mlp_call.1} parent=39 // pred_check_branch
          %312 = sbr.rel (%p310) target = $region48
        $region47: #{_customized_mlp_call.1} parent=39 // pred_region
          %313 = dma.done %s306, 8192
        $region48: #{_customized_mlp_call.1} parent=39 // pred_fallthru
          _
        %s314 = sand.u32 %s26, 1
        %s315 = scalar_lea.sflag [#allocation7], %s314
        %s316 = sand.u32 %s98, 1
        %s317 = smul.addr %s316, 256
        %s318 = scalar_lea.vmem [#allocation8], %s317
        // Predicated region
        $region49: #{_customized_mlp_call.1} parent=39 // pred_check
          %p319 = pneg %p111
        $region50: #{_customized_mlp_call.1} parent=39 // pred_check_branch
          %321 = sbr.rel (%p319) target = $region52
        $region51: #{_customized_mlp_call.1} parent=39 // pred_region
          %322 = dma.done %s315, 4096
        $region52: #{_customized_mlp_call.1} parent=39 // pred_fallthru
          _
        // Predicated region
        $region53: #{_customized_mlp_call.1} parent=39 // pred_check
          %p323 = pneg %p132
        $region54: #{_customized_mlp_call.1} parent=39 // pred_check_branch
          %325 = sbr.rel (%p323) target = $region56
        $region55: #{_customized_mlp_call.1} parent=39 // pred_region
          %326 = dma.done [#allocation10], 2048
        $region56: #{_customized_mlp_call.1} parent=39 // pred_fallthru
          _
        // Predicated region
        $region57: #{_customized_mlp_call.1} parent=39 // pred_check
          %p327 = pneg %p153
        $region58: #{_customized_mlp_call.1} parent=39 // pred_check_branch
          %329 = sbr.rel (%p327) target = $region60
        $region59: #{_customized_mlp_call.1} parent=39 // pred_region
          %330 = dma.done [#allocation10], 2048
        $region60: #{_customized_mlp_call.1} parent=39 // pred_fallthru
          _
        %s331 = sand.u32 %s46, 1
        %s332 = scalar_lea.sflag [#allocation4], %s331
        %s333 = sand.u32 %s46, 1
        %s334 = smul.addr %s333, 128
        %s335 = scalar_lea.vmem [#allocation3], %s334
        %p336 = pneg %p59
        %p337 = pneg %p56
        %s338 = sand.u32 %s26, 1
        %s339 = scalar_lea.sflag [#allocation7], %s338
        %s340 = sand.u32 %s72, 1
        %s341 = smul.addr %s340, 512
        %s342 = scalar_lea.vmem [#allocation6], %s341
        %p343 = pneg %p85
        %p344 = pneg %p82
        %s345 = sand.u32 %s26, 1
        %s346 = scalar_lea.sflag [#allocation7], %s345
        %s347 = sand.u32 %s98, 1
        %s348 = smul.addr %s347, 256
        %s349 = scalar_lea.vmem [#allocation8], %s348
        %p350 = pneg %p111
        %p351 = pneg %p108
        %p352 = pneg %p132
        %p353 = pneg %p129
        %p354 = pneg %p153
        %p355 = pneg %p150
        %p356 = pneg %p179
        %p357 = pneg %p176
        %s358 = sand.u32 %s166, 1
        %s359 = scalar_lea.sflag [#allocation5], %s358
        %s360 = sand.u32 %s166, 1
        %s361 = smul.addr %s360, 128
        %s362 = scalar_lea.vmem [#allocation12], %s361
        %s363 = smul.u32 16, %s30
        %s364 = smul.u32 32, %s31
        %s365 = smul.u32 16, %s30
        %v367 = vld [vmem:[%s300] sm:$0xff]
        %v368 = vld [vmem:[%s300 + $0x8] sm:$0xff]
        %v369 = vld [vmem:[%s300 + $0x10] sm:$0xff]
        %v370 = vld [vmem:[%s300 + $0x18] sm:$0xff]
        %v371 = vld [vmem:[%s300 + $0x20] sm:$0xff]
        %v372 = vld [vmem:[%s300 + $0x28] sm:$0xff]
        %v373 = vld [vmem:[%s300 + $0x30] sm:$0xff]
        %v374 = vld [vmem:[%s300 + $0x38] sm:$0xff]
        %v375 = vld [vmem:[%s300 + $0x40] sm:$0xff]
        %v376 = vld [vmem:[%s300 + $0x48] sm:$0xff]
        %v377 = vld [vmem:[%s300 + $0x50] sm:$0xff]
        %v378 = vld [vmem:[%s300 + $0x58] sm:$0xff]
        %v379 = vld [vmem:[%s300 + $0x60] sm:$0xff]
        %v380 = vld [vmem:[%s300 + $0x68] sm:$0xff]
        %v381 = vld [vmem:[%s300 + $0x70] sm:$0xff]
        %v382 = vld [vmem:[%s300 + $0x78] sm:$0xff]
        %p383 = scmp.eq.s32.totalorder %s31, 0
        // Predicated region
        $region61: #{_customized_mlp_call.1} parent=39 // pred_check
          %p384 = pneg %p383
        $region62: #{_customized_mlp_call.1} parent=39 // pred_check_branch
          %386 = sbr.rel (%p384) target = $region64
        $region63: #{_customized_mlp_call.1} parent=39 // pred_region
          %v387 = vld [vmem:[#allocation9] sm:$0xf]
          %v388 = vld [vmem:[#allocation9 + $0x4] sm:$0xf]
          %v389 = vld [vmem:[#allocation9 + $0x8] sm:$0xf]
          %v390 = vld [vmem:[#allocation9 + $0xc] sm:$0xf]
          %v391 = vld [vmem:[#allocation9 + $0x10] sm:$0xf]
          %v392 = vld [vmem:[#allocation9 + $0x14] sm:$0xf]
          %v393 = vld [vmem:[#allocation9 + $0x18] sm:$0xf]
          %v394 = vld [vmem:[#allocation9 + $0x1c] sm:$0xf]
          %v395 = vld [vmem:[#allocation9 + $0x20] sm:$0xf]
          %v396 = vld [vmem:[#allocation9 + $0x24] sm:$0xf]
          %v397 = vld [vmem:[#allocation9 + $0x28] sm:$0xf]
          %v398 = vld [vmem:[#allocation9 + $0x2c] sm:$0xf]
          %v399 = vld [vmem:[#allocation9 + $0x30] sm:$0xf]
          %v400 = vld [vmem:[#allocation9 + $0x34] sm:$0xf]
          %v401 = vld [vmem:[#allocation9 + $0x38] sm:$0xf]
          %v402 = vld [vmem:[#allocation9 + $0x3c] sm:$0xf]
          %v403 = vld [vmem:[#allocation9 + $0x40] sm:$0xf]
          %v404 = vld [vmem:[#allocation9 + $0x44] sm:$0xf]
          %v405 = vld [vmem:[#allocation9 + $0x48] sm:$0xf]
          %v406 = vld [vmem:[#allocation9 + $0x4c] sm:$0xf]
          %v407 = vld [vmem:[#allocation9 + $0x50] sm:$0xf]
          %v408 = vld [vmem:[#allocation9 + $0x54] sm:$0xf]
          %v409 = vld [vmem:[#allocation9 + $0x58] sm:$0xf]
          %v410 = vld [vmem:[#allocation9 + $0x5c] sm:$0xf]
          %v411 = vld [vmem:[#allocation9 + $0x60] sm:$0xf]
          %v412 = vld [vmem:[#allocation9 + $0x64] sm:$0xf]
          %v413 = vld [vmem:[#allocation9 + $0x68] sm:$0xf]
          %v414 = vld [vmem:[#allocation9 + $0x6c] sm:$0xf]
          %v415 = vld [vmem:[#allocation9 + $0x70] sm:$0xf]
          %v416 = vld [vmem:[#allocation9 + $0x74] sm:$0xf]
          %v417 = vld [vmem:[#allocation9 + $0x78] sm:$0xf]
          %v418 = vld [vmem:[#allocation9 + $0x7c] sm:$0xf]
          %v435 = vunpack.c.l.b16 %v367
          %v436 = vunpack.c.h.b16 %v367
          %v437 = vunpack.c.l.b16 %v368
          %v438 = vunpack.c.h.b16 %v368
          %v439 = vunpack.c.l.b16 %v369
          %v440 = vunpack.c.h.b16 %v369
          %v441 = vunpack.c.l.b16 %v370
          %v442 = vunpack.c.h.b16 %v370
          %v443 = vunpack.c.l.b16 %v371
          %v444 = vunpack.c.h.b16 %v371
          %v445 = vunpack.c.l.b16 %v372
          %v446 = vunpack.c.h.b16 %v372
          %v447 = vunpack.c.l.b16 %v373
          %v448 = vunpack.c.h.b16 %v373
          %v449 = vunpack.c.l.b16 %v374
          %v450 = vunpack.c.h.b16 %v374
          %v451 = vunpack.c.l.b16 %v375
          %v452 = vunpack.c.h.b16 %v375
          %v453 = vunpack.c.l.b16 %v376
          %v454 = vunpack.c.h.b16 %v376
          %v455 = vunpack.c.l.b16 %v377
          %v456 = vunpack.c.h.b16 %v377
          %v457 = vunpack.c.l.b16 %v378
          %v458 = vunpack.c.h.b16 %v378
          %v459 = vunpack.c.l.b16 %v379
          %v460 = vunpack.c.h.b16 %v379
          %v461 = vunpack.c.l.b16 %v380
          %v462 = vunpack.c.h.b16 %v380
          %v463 = vunpack.c.l.b16 %v381
          %v464 = vunpack.c.h.b16 %v381
          %v465 = vunpack.c.l.b16 %v382
          %v466 = vunpack.c.h.b16 %v382
          %v467 = vpack.c.b16 %v437, %v435
          %v468 = vpack.c.b16 %v438, %v436
          %v469 = vpack.c.b16 %v441, %v439
          %v470 = vpack.c.b16 %v442, %v440
          %v471 = vpack.c.b16 %v445, %v443
          %v472 = vpack.c.b16 %v446, %v444
          %v473 = vpack.c.b16 %v449, %v447
          %v474 = vpack.c.b16 %v450, %v448
          %v475 = vpack.c.b16 %v453, %v451
          %v476 = vpack.c.b16 %v454, %v452
          %v477 = vpack.c.b16 %v457, %v455
          %v478 = vpack.c.b16 %v458, %v456
          %v479 = vpack.c.b16 %v461, %v459
          %v480 = vpack.c.b16 %v462, %v460
          %v481 = vpack.c.b16 %v465, %v463
          %v482 = vpack.c.b16 %v466, %v464
          %v531 = vunpack.c.l.b16 %v387
          %v532 = vunpack.c.l.b16 %v388
          %v533 = vunpack.c.l.b16 %v389
          %v534 = vunpack.c.l.b16 %v390
          %v535 = vunpack.c.l.b16 %v391
          %v536 = vunpack.c.l.b16 %v392
          %v537 = vunpack.c.l.b16 %v393
          %v538 = vunpack.c.l.b16 %v394
          %v539 = vunpack.c.l.b16 %v395
          %v540 = vunpack.c.l.b16 %v396
          %v541 = vunpack.c.l.b16 %v397
          %v542 = vunpack.c.l.b16 %v398
          %v543 = vunpack.c.l.b16 %v399
          %v544 = vunpack.c.l.b16 %v400
          %v545 = vunpack.c.l.b16 %v401
          %v546 = vunpack.c.l.b16 %v402
          %v547 = vunpack.c.l.b16 %v403
          %v548 = vunpack.c.l.b16 %v404
          %v549 = vunpack.c.l.b16 %v405
          %v550 = vunpack.c.l.b16 %v406
          %v551 = vunpack.c.l.b16 %v407
          %v552 = vunpack.c.l.b16 %v408
          %v553 = vunpack.c.l.b16 %v409
          %v554 = vunpack.c.l.b16 %v410
          %v555 = vunpack.c.l.b16 %v411
          %v556 = vunpack.c.l.b16 %v412
          %v557 = vunpack.c.l.b16 %v413
          %v558 = vunpack.c.l.b16 %v414
          %v559 = vunpack.c.l.b16 %v415
          %v560 = vunpack.c.l.b16 %v416
          %v561 = vunpack.c.l.b16 %v417
          %v562 = vunpack.c.l.b16 %v418
          %v563 = vpack.c.b16 %v532, %v531
          %v564 = vpack.c.b16 %v534, %v533
          %v565 = vpack.c.b16 %v536, %v535
          %v566 = vpack.c.b16 %v538, %v537
          %v567 = vpack.c.b16 %v540, %v539
          %v568 = vpack.c.b16 %v542, %v541
          %v569 = vpack.c.b16 %v544, %v543
          %v570 = vpack.c.b16 %v546, %v545
          %v571 = vpack.c.b16 %v548, %v547
          %v572 = vpack.c.b16 %v550, %v549
          %v573 = vpack.c.b16 %v552, %v551
          %v574 = vpack.c.b16 %v554, %v553
          %v575 = vpack.c.b16 %v556, %v555
          %v576 = vpack.c.b16 %v558, %v557
          %v577 = vpack.c.b16 %v560, %v559
          %v578 = vpack.c.b16 %v562, %v561
          %595 = vmatprep.subr.bf16.mxu0 0
          %596 = vmatpush1.bf16.msra.mxu0 %v570
          %597 = vmatprep.subr.bf16.mxu0 0
          %598 = vmatpush1.bf16.msra.mxu0 %v569
          %599 = vmatprep.subr.bf16.mxu0 0
          %600 = vmatpush1.bf16.msra.mxu0 %v568
          %601 = vmatprep.subr.bf16.mxu0 0
          %602 = vmatpush1.bf16.msra.mxu0 %v567
          %603 = vmatprep.subr.bf16.mxu0 0
          %604 = vmatpush1.bf16.msra.mxu0 %v566
          %605 = vmatprep.subr.bf16.mxu0 0
          %606 = vmatpush1.bf16.msra.mxu0 %v565
          %607 = vmatprep.subr.bf16.mxu0 0
          %608 = vmatpush1.bf16.msra.mxu0 %v564
          %609 = vmatprep.subr.bf16.mxu0 0
          %610 = vmatpush1.bf16.msra.mxu0 %v563
          %611 = vmatprep.subr.bf16.mxu0 0
          %612 = vmatpush2.bf16.msra.mxu0 %v578
          %613 = vmatprep.subr.bf16.mxu0 0
          %614 = vmatpush2.bf16.msra.mxu0 %v577
          %615 = vmatprep.subr.bf16.mxu0 0
          %616 = vmatpush2.bf16.msra.mxu0 %v576
          %617 = vmatprep.subr.bf16.mxu0 0
          %618 = vmatpush2.bf16.msra.mxu0 %v575
          %619 = vmatprep.subr.bf16.mxu0 0
          %620 = vmatpush2.bf16.msra.mxu0 %v574
          %621 = vmatprep.subr.bf16.mxu0 0
          %622 = vmatpush2.bf16.msra.mxu0 %v573
          %623 = vmatprep.subr.bf16.mxu0 0
          %624 = vmatpush2.bf16.msra.mxu0 %v572
          %625 = vmatprep.subr.bf16.mxu0 0
          %626 = vmatpush2.bf16.msra.mxu0 %v571
          %627 = vmatprep.mubr.bf16.mxu0 %v468
          %628 = vmatmul.mubr.bf16.gmra.mxu0 %v467
          %v629 = vpop.f32.mrf.mxu0
          %v630 = vadd.f32 0.0, %v629
          %v631 = vpop.f32.mrf.mxu0
          %v632 = vpop.f32.mrf.mxu0
          %v633 = vadd.f32 0.0, %v632
          %v634 = vpop.f32.mrf.mxu0
          %635 = vmatprep.mubr.bf16.mxu0 %v470
          %636 = vmatmul.mubr.bf16.gmra.mxu0 %v469
          %v637 = vpop.f32.mrf.mxu0
          %v638 = vadd.f32 0.0, %v637
          %v639 = vpop.f32.mrf.mxu0
          %v640 = vpop.f32.mrf.mxu0
          %v641 = vadd.f32 0.0, %v640
          %v642 = vpop.f32.mrf.mxu0
          %643 = vmatprep.mubr.bf16.mxu0 %v472
          %644 = vmatmul.mubr.bf16.gmra.mxu0 %v471
          %v645 = vpop.f32.mrf.mxu0
          %v646 = vadd.f32 0.0, %v645
          %v647 = vpop.f32.mrf.mxu0
          %v648 = vpop.f32.mrf.mxu0
          %v649 = vadd.f32 0.0, %v648
          %v650 = vpop.f32.mrf.mxu0
          %651 = vmatprep.mubr.bf16.mxu0 %v474
          %652 = vmatmul.mubr.bf16.gmra.mxu0 %v473
          %v653 = vpop.f32.mrf.mxu0
          %v654 = vadd.f32 0.0, %v653
          %v655 = vpop.f32.mrf.mxu0
          %v656 = vpop.f32.mrf.mxu0
          %v657 = vadd.f32 0.0, %v656
          %v658 = vpop.f32.mrf.mxu0
          %659 = vmatprep.mubr.bf16.mxu0 %v476
          %660 = vmatmul.mubr.bf16.gmra.mxu0 %v475
          %v661 = vpop.f32.mrf.mxu0
          %v662 = vadd.f32 0.0, %v661
          %v663 = vpop.f32.mrf.mxu0
          %v664 = vpop.f32.mrf.mxu0
          %v665 = vadd.f32 0.0, %v664
          %v666 = vpop.f32.mrf.mxu0
          %667 = vmatprep.mubr.bf16.mxu0 %v478
          %668 = vmatmul.mubr.bf16.gmra.mxu0 %v477
          %v669 = vpop.f32.mrf.mxu0
          %v670 = vadd.f32 0.0, %v669
          %v671 = vpop.f32.mrf.mxu0
          %v672 = vpop.f32.mrf.mxu0
          %v673 = vadd.f32 0.0, %v672
          %v674 = vpop.f32.mrf.mxu0
          %675 = vmatprep.mubr.bf16.mxu0 %v480
          %676 = vmatmul.mubr.bf16.gmra.mxu0 %v479
          %v677 = vpop.f32.mrf.mxu0
          %v678 = vadd.f32 0.0, %v677
          %v679 = vpop.f32.mrf.mxu0
          %v680 = vpop.f32.mrf.mxu0
          %v681 = vadd.f32 0.0, %v680
          %v682 = vpop.f32.mrf.mxu0
          %683 = vmatprep.mubr.bf16.mxu0 %v482
          %684 = vmatmul.mubr.bf16.gmra.mxu0 %v481
          %v685 = vpop.f32.mrf.mxu0
          %v686 = vadd.f32 0.0, %v685
          %v687 = vpop.f32.mrf.mxu0
          %v688 = vpop.f32.mrf.mxu0
          %v689 = vadd.f32 0.0, %v688
          %v690 = vpop.f32.mrf.mxu0
          %691 = vdwg.mxu0
          %v692 = vpack.c.bf16 %v633, %v630
          %v693 = vpack.c.bf16 %v641, %v638
          %v694 = vpack.c.bf16 %v649, %v646
          %v695 = vpack.c.bf16 %v657, %v654
          %v696 = vpack.c.bf16 %v665, %v662
          %v697 = vpack.c.bf16 %v673, %v670
          %v698 = vpack.c.bf16 %v681, %v678
          %v699 = vpack.c.bf16 %v689, %v686
          %v700 = vld [vmem:[#allocation11] sm:$0xff]
          %v701 = vld [vmem:[#allocation11 + $0x8] sm:$0xff]
          %v702 = vld [vmem:[#allocation11 + $0x10] sm:$0xff]
          %v703 = vld [vmem:[#allocation11 + $0x18] sm:$0xff]
          %v704 = vld [vmem:[#allocation11 + $0x20] sm:$0xff]
          %v705 = vld [vmem:[#allocation11 + $0x28] sm:$0xff]
          %v706 = vld [vmem:[#allocation11 + $0x30] sm:$0xff]
          %v707 = vld [vmem:[#allocation11 + $0x38] sm:$0xff]
          %v708 = vld [vmem:[#allocation11 + $0x40] sm:$0xff]
          %v709 = vld [vmem:[#allocation11 + $0x48] sm:$0xff]
          %v710 = vld [vmem:[#allocation11 + $0x50] sm:$0xff]
          %v711 = vld [vmem:[#allocation11 + $0x58] sm:$0xff]
          %v712 = vld [vmem:[#allocation11 + $0x60] sm:$0xff]
          %v713 = vld [vmem:[#allocation11 + $0x68] sm:$0xff]
          %v714 = vld [vmem:[#allocation11 + $0x70] sm:$0xff]
          %v715 = vld [vmem:[#allocation11 + $0x78] sm:$0xff]
          %v732 = vunpack.c.l.b16 %v700
          %v733 = vunpack.c.h.b16 %v700
          %v734 = vunpack.c.l.b16 %v701
          %v735 = vunpack.c.h.b16 %v701
          %v736 = vunpack.c.l.b16 %v702
          %v737 = vunpack.c.h.b16 %v702
          %v738 = vunpack.c.l.b16 %v703
          %v739 = vunpack.c.h.b16 %v703
          %v740 = vunpack.c.l.b16 %v704
          %v741 = vunpack.c.h.b16 %v704
          %v742 = vunpack.c.l.b16 %v705
          %v743 = vunpack.c.h.b16 %v705
          %v744 = vunpack.c.l.b16 %v706
          %v745 = vunpack.c.h.b16 %v706
          %v746 = vunpack.c.l.b16 %v707
          %v747 = vunpack.c.h.b16 %v707
          %v748 = vunpack.c.l.b16 %v708
          %v749 = vunpack.c.h.b16 %v708
          %v750 = vunpack.c.l.b16 %v709
          %v751 = vunpack.c.h.b16 %v709
          %v752 = vunpack.c.l.b16 %v710
          %v753 = vunpack.c.h.b16 %v710
          %v754 = vunpack.c.l.b16 %v711
          %v755 = vunpack.c.h.b16 %v711
          %v756 = vunpack.c.l.b16 %v712
          %v757 = vunpack.c.h.b16 %v712
          %v758 = vunpack.c.l.b16 %v713
          %v759 = vunpack.c.h.b16 %v713
          %v760 = vunpack.c.l.b16 %v714
          %v761 = vunpack.c.h.b16 %v714
          %v762 = vunpack.c.l.b16 %v715
          %v763 = vunpack.c.h.b16 %v715
          %v764 = vpack.c.b16 %v734, %v732
          %v765 = vpack.c.b16 %v735, %v733
          %v766 = vpack.c.b16 %v738, %v736
          %v767 = vpack.c.b16 %v739, %v737
          %v768 = vpack.c.b16 %v742, %v740
          %v769 = vpack.c.b16 %v743, %v741
          %v770 = vpack.c.b16 %v746, %v744
          %v771 = vpack.c.b16 %v747, %v745
          %v772 = vpack.c.b16 %v750, %v748
          %v773 = vpack.c.b16 %v751, %v749
          %v774 = vpack.c.b16 %v754, %v752
          %v775 = vpack.c.b16 %v755, %v753
          %v776 = vpack.c.b16 %v758, %v756
          %v777 = vpack.c.b16 %v759, %v757
          %v778 = vpack.c.b16 %v762, %v760
          %v779 = vpack.c.b16 %v763, %v761
          %796 = vmatprep.subr.bf16.mxu0 %v779
          %797 = vmatpush1.bf16.msra.mxu0 %v778
          %798 = vmatprep.subr.bf16.mxu0 %v777
          %799 = vmatpush1.bf16.msra.mxu0 %v776
          %800 = vmatprep.subr.bf16.mxu0 %v775
          %801 = vmatpush1.bf16.msra.mxu0 %v774
          %802 = vmatprep.subr.bf16.mxu0 %v773
          %803 = vmatpush1.bf16.msra.mxu0 %v772
          %804 = vmatprep.subr.bf16.mxu0 %v771
          %805 = vmatpush1.bf16.msra.mxu0 %v770
          %806 = vmatprep.subr.bf16.mxu0 %v769
          %807 = vmatpush1.bf16.msra.mxu0 %v768
          %808 = vmatprep.subr.bf16.mxu0 %v767
          %809 = vmatpush1.bf16.msra.mxu0 %v766
          %810 = vmatprep.subr.bf16.mxu0 %v765
          %811 = vmatpush1.bf16.msra.mxu0 %v764
          %812 = vmatprep.subr.bf16.mxu0 0
          %813 = vmatpush2.bf16.msra.mxu0 0
          %814 = vmatprep.subr.bf16.mxu0 0
          %815 = vmatpush2.bf16.msra.mxu0 0
          %816 = vmatprep.subr.bf16.mxu0 0
          %817 = vmatpush2.bf16.msra.mxu0 0
          %818 = vmatprep.subr.bf16.mxu0 0
          %819 = vmatpush2.bf16.msra.mxu0 0
          %820 = vmatprep.subr.bf16.mxu0 0
          %821 = vmatpush2.bf16.msra.mxu0 0
          %822 = vmatprep.subr.bf16.mxu0 0
          %823 = vmatpush2.bf16.msra.mxu0 0
          %824 = vmatprep.subr.bf16.mxu0 0
          %825 = vmatpush2.bf16.msra.mxu0 0
          %826 = vmatprep.subr.bf16.mxu0 0
          %827 = vmatpush2.bf16.msra.mxu0 0
          %828 = vmatprep.mubr.bf16.mxu0 0
          %829 = vmatmul.mubr.bf16.gmra.mxu0 %v692
          %v830 = vpop.f32.mrf.mxu0
          %v831 = vadd.f32 0.0, %v830
          %v832 = vpop.f32.mrf.mxu0
          %v833 = vadd.f32 0.0, %v832
          %v834 = vpop.f32.mrf.mxu0
          %v835 = vadd.f32 0.0, %v834
          %v836 = vpop.f32.mrf.mxu0
          %v837 = vadd.f32 0.0, %v836
          %838 = vmatprep.mubr.bf16.mxu0 0
          %839 = vmatmul.mubr.bf16.gmra.mxu0 %v693
          %v840 = vpop.f32.mrf.mxu0
          %v841 = vadd.f32 0.0, %v840
          %v842 = vpop.f32.mrf.mxu0
          %v843 = vadd.f32 0.0, %v842
          %v844 = vpop.f32.mrf.mxu0
          %v845 = vadd.f32 0.0, %v844
          %v846 = vpop.f32.mrf.mxu0
          %v847 = vadd.f32 0.0, %v846
          %848 = vmatprep.mubr.bf16.mxu0 0
          %849 = vmatmul.mubr.bf16.gmra.mxu0 %v694
          %v850 = vpop.f32.mrf.mxu0
          %v851 = vadd.f32 0.0, %v850
          %v852 = vpop.f32.mrf.mxu0
          %v853 = vadd.f32 0.0, %v852
          %v854 = vpop.f32.mrf.mxu0
          %v855 = vadd.f32 0.0, %v854
          %v856 = vpop.f32.mrf.mxu0
          %v857 = vadd.f32 0.0, %v856
          %858 = vmatprep.mubr.bf16.mxu0 0
          %859 = vmatmul.mubr.bf16.gmra.mxu0 %v695
          %v860 = vpop.f32.mrf.mxu0
          %v861 = vadd.f32 0.0, %v860
          %v862 = vpop.f32.mrf.mxu0
          %v863 = vadd.f32 0.0, %v862
          %v864 = vpop.f32.mrf.mxu0
          %v865 = vadd.f32 0.0, %v864
          %v866 = vpop.f32.mrf.mxu0
          %v867 = vadd.f32 0.0, %v866
          %868 = vmatprep.mubr.bf16.mxu0 0
          %869 = vmatmul.mubr.bf16.gmra.mxu0 %v696
          %v870 = vpop.f32.mrf.mxu0
          %v871 = vadd.f32 0.0, %v870
          %v872 = vpop.f32.mrf.mxu0
          %v873 = vadd.f32 0.0, %v872
          %v874 = vpop.f32.mrf.mxu0
          %v875 = vadd.f32 0.0, %v874
          %v876 = vpop.f32.mrf.mxu0
          %v877 = vadd.f32 0.0, %v876
          %878 = vmatprep.mubr.bf16.mxu0 0
          %879 = vmatmul.mubr.bf16.gmra.mxu0 %v697
          %v880 = vpop.f32.mrf.mxu0
          %v881 = vadd.f32 0.0, %v880
          %v882 = vpop.f32.mrf.mxu0
          %v883 = vadd.f32 0.0, %v882
          %v884 = vpop.f32.mrf.mxu0
          %v885 = vadd.f32 0.0, %v884
          %v886 = vpop.f32.mrf.mxu0
          %v887 = vadd.f32 0.0, %v886
          %888 = vmatprep.mubr.bf16.mxu0 0
          %889 = vmatmul.mubr.bf16.gmra.mxu0 %v698
          %v890 = vpop.f32.mrf.mxu0
          %v891 = vadd.f32 0.0, %v890
          %v892 = vpop.f32.mrf.mxu0
          %v893 = vadd.f32 0.0, %v892
          %v894 = vpop.f32.mrf.mxu0
          %v895 = vadd.f32 0.0, %v894
          %v896 = vpop.f32.mrf.mxu0
          %v897 = vadd.f32 0.0, %v896
          %898 = vmatprep.mubr.bf16.mxu0 0
          %899 = vmatmul.mubr.bf16.gmra.mxu0 %v699
          %v900 = vpop.f32.mrf.mxu0
          %v901 = vadd.f32 0.0, %v900
          %v902 = vpop.f32.mrf.mxu0
          %v903 = vadd.f32 0.0, %v902
          %v904 = vpop.f32.mrf.mxu0
          %v905 = vadd.f32 0.0, %v904
          %v906 = vpop.f32.mrf.mxu0
          %v907 = vadd.f32 0.0, %v906
          %908 = vdwg.mxu0
          %909 = vst [vmem:[#allocation2] sm:$0xff] %v831
          %910 = vst [vmem:[#allocation2 + $0x8] sm:$0xff] %v833
          %911 = vst [vmem:[#allocation2 + $0x10] sm:$0xff] %v835
          %912 = vst [vmem:[#allocation2 + $0x18] sm:$0xff] %v837
          %913 = vst [vmem:[#allocation2 + $0x20] sm:$0xff] %v841
          %914 = vst [vmem:[#allocation2 + $0x28] sm:$0xff] %v843
          %915 = vst [vmem:[#allocation2 + $0x30] sm:$0xff] %v845
          %916 = vst [vmem:[#allocation2 + $0x38] sm:$0xff] %v847
          %917 = vst [vmem:[#allocation2 + $0x40] sm:$0xff] %v851
          %918 = vst [vmem:[#allocation2 + $0x48] sm:$0xff] %v853
          %919 = vst [vmem:[#allocation2 + $0x50] sm:$0xff] %v855
          %920 = vst [vmem:[#allocation2 + $0x58] sm:$0xff] %v857
          %921 = vst [vmem:[#allocation2 + $0x60] sm:$0xff] %v861
          %922 = vst [vmem:[#allocation2 + $0x68] sm:$0xff] %v863
          %923 = vst [vmem:[#allocation2 + $0x70] sm:$0xff] %v865
          %924 = vst [vmem:[#allocation2 + $0x78] sm:$0xff] %v867
          %925 = vst [vmem:[#allocation2 + $0x80] sm:$0xff] %v871
          %926 = vst [vmem:[#allocation2 + $0x88] sm:$0xff] %v873
          %927 = vst [vmem:[#allocation2 + $0x90] sm:$0xff] %v875
          %928 = vst [vmem:[#allocation2 + $0x98] sm:$0xff] %v877
          %929 = vst [vmem:[#allocation2 + $0xa0] sm:$0xff] %v881
          %930 = vst [vmem:[#allocation2 + $0xa8] sm:$0xff] %v883
          %931 = vst [vmem:[#allocation2 + $0xb0] sm:$0xff] %v885
          %932 = vst [vmem:[#allocation2 + $0xb8] sm:$0xff] %v887
          %933 = vst [vmem:[#allocation2 + $0xc0] sm:$0xff] %v891
          %934 = vst [vmem:[#allocation2 + $0xc8] sm:$0xff] %v893
          %935 = vst [vmem:[#allocation2 + $0xd0] sm:$0xff] %v895
          %936 = vst [vmem:[#allocation2 + $0xd8] sm:$0xff] %v897
          %937 = vst [vmem:[#allocation2 + $0xe0] sm:$0xff] %v901
          %938 = vst [vmem:[#allocation2 + $0xe8] sm:$0xff] %v903
          %939 = vst [vmem:[#allocation2 + $0xf0] sm:$0xff] %v905
          %940 = vst [vmem:[#allocation2 + $0xf8] sm:$0xff] %v907
        $region64: #{_customized_mlp_call.1} parent=39 // pred_fallthru
          _
        %v941 = vld [vmem:[%s309] sm:$0xff]
        %v942 = vld [vmem:[%s309 + $0x8] sm:$0xff]
        %v943 = vld [vmem:[%s309 + $0x10] sm:$0xff]
        %v944 = vld [vmem:[%s309 + $0x18] sm:$0xff]
        %v945 = vld [vmem:[%s309 + $0x20] sm:$0xff]
        %v946 = vld [vmem:[%s309 + $0x28] sm:$0xff]
        %v947 = vld [vmem:[%s309 + $0x30] sm:$0xff]
        %v948 = vld [vmem:[%s309 + $0x38] sm:$0xff]
        %v949 = vld [vmem:[%s309 + $0x40] sm:$0xff]
        %v950 = vld [vmem:[%s309 + $0x48] sm:$0xff]
        %v951 = vld [vmem:[%s309 + $0x50] sm:$0xff]
        %v952 = vld [vmem:[%s309 + $0x58] sm:$0xff]
        %v953 = vld [vmem:[%s309 + $0x60] sm:$0xff]
        %v954 = vld [vmem:[%s309 + $0x68] sm:$0xff]
        %v955 = vld [vmem:[%s309 + $0x70] sm:$0xff]
        %v956 = vld [vmem:[%s309 + $0x78] sm:$0xff]
        %v957 = vld [vmem:[%s309 + $0x80] sm:$0xff]
        %v958 = vld [vmem:[%s309 + $0x88] sm:$0xff]
        %v959 = vld [vmem:[%s309 + $0x90] sm:$0xff]
        %v960 = vld [vmem:[%s309 + $0x98] sm:$0xff]
        %v961 = vld [vmem:[%s309 + $0xa0] sm:$0xff]
        %v962 = vld [vmem:[%s309 + $0xa8] sm:$0xff]
        %v963 = vld [vmem:[%s309 + $0xb0] sm:$0xff]
        %v964 = vld [vmem:[%s309 + $0xb8] sm:$0xff]
        %v965 = vld [vmem:[%s309 + $0xc0] sm:$0xff]
        %v966 = vld [vmem:[%s309 + $0xc8] sm:$0xff]
        %v967 = vld [vmem:[%s309 + $0xd0] sm:$0xff]
        %v968 = vld [vmem:[%s309 + $0xd8] sm:$0xff]
        %v969 = vld [vmem:[%s309 + $0xe0] sm:$0xff]
        %v970 = vld [vmem:[%s309 + $0xe8] sm:$0xff]
        %v971 = vld [vmem:[%s309 + $0xf0] sm:$0xff]
        %v972 = vld [vmem:[%s309 + $0xf8] sm:$0xff]
        %v973 = vld [vmem:[%s309 + $0x100] sm:$0xff]
        %v974 = vld [vmem:[%s309 + $0x108] sm:$0xff]
        %v975 = vld [vmem:[%s309 + $0x110] sm:$0xff]
        %v976 = vld [vmem:[%s309 + $0x118] sm:$0xff]
        %v977 = vld [vmem:[%s309 + $0x120] sm:$0xff]
        %v978 = vld [vmem:[%s309 + $0x128] sm:$0xff]
        %v979 = vld [vmem:[%s309 + $0x130] sm:$0xff]
        %v980 = vld [vmem:[%s309 + $0x138] sm:$0xff]
        %v981 = vld [vmem:[%s309 + $0x140] sm:$0xff]
        %v982 = vld [vmem:[%s309 + $0x148] sm:$0xff]
        %v983 = vld [vmem:[%s309 + $0x150] sm:$0xff]
        %v984 = vld [vmem:[%s309 + $0x158] sm:$0xff]
        %v985 = vld [vmem:[%s309 + $0x160] sm:$0xff]
        %v986 = vld [vmem:[%s309 + $0x168] sm:$0xff]
        %v987 = vld [vmem:[%s309 + $0x170] sm:$0xff]
        %v988 = vld [vmem:[%s309 + $0x178] sm:$0xff]
        %v989 = vld [vmem:[%s309 + $0x180] sm:$0xff]
        %v990 = vld [vmem:[%s309 + $0x188] sm:$0xff]
        %v991 = vld [vmem:[%s309 + $0x190] sm:$0xff]
        %v992 = vld [vmem:[%s309 + $0x198] sm:$0xff]
        %v993 = vld [vmem:[%s309 + $0x1a0] sm:$0xff]
        %v994 = vld [vmem:[%s309 + $0x1a8] sm:$0xff]
        %v995 = vld [vmem:[%s309 + $0x1b0] sm:$0xff]
        %v996 = vld [vmem:[%s309 + $0x1b8] sm:$0xff]
        %v997 = vld [vmem:[%s309 + $0x1c0] sm:$0xff]
        %v998 = vld [vmem:[%s309 + $0x1c8] sm:$0xff]
        %v999 = vld [vmem:[%s309 + $0x1d0] sm:$0xff]
        %v1000 = vld [vmem:[%s309 + $0x1d8] sm:$0xff]
        %v1001 = vld [vmem:[%s309 + $0x1e0] sm:$0xff]
        %v1002 = vld [vmem:[%s309 + $0x1e8] sm:$0xff]
        %v1003 = vld [vmem:[%s309 + $0x1f0] sm:$0xff]
        %v1004 = vld [vmem:[%s309 + $0x1f8] sm:$0xff]
        %v1021 = vunpack.c.l.b16 %v367
        %v1022 = vunpack.c.h.b16 %v367
        %v1023 = vunpack.c.l.b16 %v368
        %v1024 = vunpack.c.h.b16 %v368
        %v1025 = vunpack.c.l.b16 %v369
        %v1026 = vunpack.c.h.b16 %v369
        %v1027 = vunpack.c.l.b16 %v370
        %v1028 = vunpack.c.h.b16 %v370
        %v1029 = vunpack.c.l.b16 %v371
        %v1030 = vunpack.c.h.b16 %v371
        %v1031 = vunpack.c.l.b16 %v372
        %v1032 = vunpack.c.h.b16 %v372
        %v1033 = vunpack.c.l.b16 %v373
        %v1034 = vunpack.c.h.b16 %v373
        %v1035 = vunpack.c.l.b16 %v374
        %v1036 = vunpack.c.h.b16 %v374
        %v1037 = vunpack.c.l.b16 %v375
        %v1038 = vunpack.c.h.b16 %v375
        %v1039 = vunpack.c.l.b16 %v376
        %v1040 = vunpack.c.h.b16 %v376
        %v1041 = vunpack.c.l.b16 %v377
        %v1042 = vunpack.c.h.b16 %v377
        %v1043 = vunpack.c.l.b16 %v378
        %v1044 = vunpack.c.h.b16 %v378
        %v1045 = vunpack.c.l.b16 %v379
        %v1046 = vunpack.c.h.b16 %v379
        %v1047 = vunpack.c.l.b16 %v380
        %v1048 = vunpack.c.h.b16 %v380
        %v1049 = vunpack.c.l.b16 %v381
        %v1050 = vunpack.c.h.b16 %v381
        %v1051 = vunpack.c.l.b16 %v382
        %v1052 = vunpack.c.h.b16 %v382
        %v1053 = vpack.c.b16 %v1023, %v1021
        %v1054 = vpack.c.b16 %v1024, %v1022
        %v1055 = vpack.c.b16 %v1027, %v1025
        %v1056 = vpack.c.b16 %v1028, %v1026
        %v1057 = vpack.c.b16 %v1031, %v1029
        %v1058 = vpack.c.b16 %v1032, %v1030
        %v1059 = vpack.c.b16 %v1035, %v1033
        %v1060 = vpack.c.b16 %v1036, %v1034
        %v1061 = vpack.c.b16 %v1039, %v1037
        %v1062 = vpack.c.b16 %v1040, %v1038
        %v1063 = vpack.c.b16 %v1043, %v1041
        %v1064 = vpack.c.b16 %v1044, %v1042
        %v1065 = vpack.c.b16 %v1047, %v1045
        %v1066 = vpack.c.b16 %v1048, %v1046
        %v1067 = vpack.c.b16 %v1051, %v1049
        %v1068 = vpack.c.b16 %v1052, %v1050
        %v1149 = vunpack.c.l.b16 %v941
        %v1150 = vunpack.c.h.b16 %v941
        %v1151 = vunpack.c.l.b16 %v942
        %v1152 = vunpack.c.h.b16 %v942
        %v1153 = vunpack.c.l.b16 %v943
        %v1154 = vunpack.c.h.b16 %v943
        %v1155 = vunpack.c.l.b16 %v944
        %v1156 = vunpack.c.h.b16 %v944
        %v1157 = vunpack.c.l.b16 %v945
        %v1158 = vunpack.c.h.b16 %v945
        %v1159 = vunpack.c.l.b16 %v946
        %v1160 = vunpack.c.h.b16 %v946
        %v1161 = vunpack.c.l.b16 %v947
        %v1162 = vunpack.c.h.b16 %v947
        %v1163 = vunpack.c.l.b16 %v948
        %v1164 = vunpack.c.h.b16 %v948
        %v1165 = vunpack.c.l.b16 %v949
        %v1166 = vunpack.c.h.b16 %v949
        %v1167 = vunpack.c.l.b16 %v950
        %v1168 = vunpack.c.h.b16 %v950
        %v1169 = vunpack.c.l.b16 %v951
        %v1170 = vunpack.c.h.b16 %v951
        %v1171 = vunpack.c.l.b16 %v952
        %v1172 = vunpack.c.h.b16 %v952
        %v1173 = vunpack.c.l.b16 %v953
        %v1174 = vunpack.c.h.b16 %v953
        %v1175 = vunpack.c.l.b16 %v954
        %v1176 = vunpack.c.h.b16 %v954
        %v1177 = vunpack.c.l.b16 %v955
        %v1178 = vunpack.c.h.b16 %v955
        %v1179 = vunpack.c.l.b16 %v956
        %v1180 = vunpack.c.h.b16 %v956
        %v1181 = vunpack.c.l.b16 %v957
        %v1182 = vunpack.c.h.b16 %v957
        %v1183 = vunpack.c.l.b16 %v958
        %v1184 = vunpack.c.h.b16 %v958
        %v1185 = vunpack.c.l.b16 %v959
        %v1186 = vunpack.c.h.b16 %v959
        %v1187 = vunpack.c.l.b16 %v960
        %v1188 = vunpack.c.h.b16 %v960
        %v1189 = vunpack.c.l.b16 %v961
        %v1190 = vunpack.c.h.b16 %v961
        %v1191 = vunpack.c.l.b16 %v962
        %v1192 = vunpack.c.h.b16 %v962
        %v1193 = vunpack.c.l.b16 %v963
        %v1194 = vunpack.c.h.b16 %v963
        %v1195 = vunpack.c.l.b16 %v964
        %v1196 = vunpack.c.h.b16 %v964
        %v1197 = vunpack.c.l.b16 %v965
        %v1198 = vunpack.c.h.b16 %v965
        %v1199 = vunpack.c.l.b16 %v966
        %v1200 = vunpack.c.h.b16 %v966
        %v1201 = vunpack.c.l.b16 %v967
        %v1202 = vunpack.c.h.b16 %v967
        %v1203 = vunpack.c.l.b16 %v968
        %v1204 = vunpack.c.h.b16 %v968
        %v1205 = vunpack.c.l.b16 %v969
        %v1206 = vunpack.c.h.b16 %v969
        %v1207 = vunpack.c.l.b16 %v970
        %v1208 = vunpack.c.h.b16 %v970
        %v1209 = vunpack.c.l.b16 %v971
        %v1210 = vunpack.c.h.b16 %v971
        %v1211 = vunpack.c.l.b16 %v972
        %v1212 = vunpack.c.h.b16 %v972
        %v1213 = vunpack.c.l.b16 %v973
        %v1214 = vunpack.c.h.b16 %v973
        %v1215 = vunpack.c.l.b16 %v974
        %v1216 = vunpack.c.h.b16 %v974
        %v1217 = vunpack.c.l.b16 %v975
        %v1218 = vunpack.c.h.b16 %v975
        %v1219 = vunpack.c.l.b16 %v976
        %v1220 = vunpack.c.h.b16 %v976
        %v1221 = vunpack.c.l.b16 %v977
        %v1222 = vunpack.c.h.b16 %v977
        %v1223 = vunpack.c.l.b16 %v978
        %v1224 = vunpack.c.h.b16 %v978
        %v1225 = vunpack.c.l.b16 %v979
        %v1226 = vunpack.c.h.b16 %v979
        %v1227 = vunpack.c.l.b16 %v980
        %v1228 = vunpack.c.h.b16 %v980
        %v1229 = vunpack.c.l.b16 %v981
        %v1230 = vunpack.c.h.b16 %v981
        %v1231 = vunpack.c.l.b16 %v982
        %v1232 = vunpack.c.h.b16 %v982
        %v1233 = vunpack.c.l.b16 %v983
        %v1234 = vunpack.c.h.b16 %v983
        %v1235 = vunpack.c.l.b16 %v984
        %v1236 = vunpack.c.h.b16 %v984
        %v1237 = vunpack.c.l.b16 %v985
        %v1238 = vunpack.c.h.b16 %v985
        %v1239 = vunpack.c.l.b16 %v986
        %v1240 = vunpack.c.h.b16 %v986
        %v1241 = vunpack.c.l.b16 %v987
        %v1242 = vunpack.c.h.b16 %v987
        %v1243 = vunpack.c.l.b16 %v988
        %v1244 = vunpack.c.h.b16 %v988
        %v1245 = vunpack.c.l.b16 %v989
        %v1246 = vunpack.c.h.b16 %v989
        %v1247 = vunpack.c.l.b16 %v990
        %v1248 = vunpack.c.h.b16 %v990
        %v1249 = vunpack.c.l.b16 %v991
        %v1250 = vunpack.c.h.b16 %v991
        %v1251 = vunpack.c.l.b16 %v992
        %v1252 = vunpack.c.h.b16 %v992
        %v1253 = vunpack.c.l.b16 %v993
        %v1254 = vunpack.c.h.b16 %v993
        %v1255 = vunpack.c.l.b16 %v994
        %v1256 = vunpack.c.h.b16 %v994
        %v1257 = vunpack.c.l.b16 %v995
        %v1258 = vunpack.c.h.b16 %v995
        %v1259 = vunpack.c.l.b16 %v996
        %v1260 = vunpack.c.h.b16 %v996
        %v1261 = vunpack.c.l.b16 %v997
        %v1262 = vunpack.c.h.b16 %v997
        %v1263 = vunpack.c.l.b16 %v998
        %v1264 = vunpack.c.h.b16 %v998
        %v1265 = vunpack.c.l.b16 %v999
        %v1266 = vunpack.c.h.b16 %v999
        %v1267 = vunpack.c.l.b16 %v1000
        %v1268 = vunpack.c.h.b16 %v1000
        %v1269 = vunpack.c.l.b16 %v1001
        %v1270 = vunpack.c.h.b16 %v1001
        %v1271 = vunpack.c.l.b16 %v1002
        %v1272 = vunpack.c.h.b16 %v1002
        %v1273 = vunpack.c.l.b16 %v1003
        %v1274 = vunpack.c.h.b16 %v1003
        %v1275 = vunpack.c.l.b16 %v1004
        %v1276 = vunpack.c.h.b16 %v1004
        %v1277 = vpack.c.b16 %v1153, %v1149
        %v1278 = vpack.c.b16 %v1154, %v1150
        %v1279 = vpack.c.b16 %v1155, %v1151
        %v1280 = vpack.c.b16 %v1156, %v1152
        %v1281 = vpack.c.b16 %v1161, %v1157
        %v1282 = vpack.c.b16 %v1162, %v1158
        %v1283 = vpack.c.b16 %v1163, %v1159
        %v1284 = vpack.c.b16 %v1164, %v1160
        %v1285 = vpack.c.b16 %v1169, %v1165
        %v1286 = vpack.c.b16 %v1170, %v1166
        %v1287 = vpack.c.b16 %v1171, %v1167
        %v1288 = vpack.c.b16 %v1172, %v1168
        %v1289 = vpack.c.b16 %v1177, %v1173
        %v1290 = vpack.c.b16 %v1178, %v1174
        %v1291 = vpack.c.b16 %v1179, %v1175
        %v1292 = vpack.c.b16 %v1180, %v1176
        %v1293 = vpack.c.b16 %v1185, %v1181
        %v1294 = vpack.c.b16 %v1186, %v1182
        %v1295 = vpack.c.b16 %v1187, %v1183
        %v1296 = vpack.c.b16 %v1188, %v1184
        %v1297 = vpack.c.b16 %v1193, %v1189
        %v1298 = vpack.c.b16 %v1194, %v1190
        %v1299 = vpack.c.b16 %v1195, %v1191
        %v1300 = vpack.c.b16 %v1196, %v1192
        %v1301 = vpack.c.b16 %v1201, %v1197
        %v1302 = vpack.c.b16 %v1202, %v1198
        %v1303 = vpack.c.b16 %v1203, %v1199
        %v1304 = vpack.c.b16 %v1204, %v1200
        %v1305 = vpack.c.b16 %v1209, %v1205
        %v1306 = vpack.c.b16 %v1210, %v1206
        %v1307 = vpack.c.b16 %v1211, %v1207
        %v1308 = vpack.c.b16 %v1212, %v1208
        %v1309 = vpack.c.b16 %v1217, %v1213
        %v1310 = vpack.c.b16 %v1218, %v1214
        %v1311 = vpack.c.b16 %v1219, %v1215
        %v1312 = vpack.c.b16 %v1220, %v1216
        %v1313 = vpack.c.b16 %v1225, %v1221
        %v1314 = vpack.c.b16 %v1226, %v1222
        %v1315 = vpack.c.b16 %v1227, %v1223
        %v1316 = vpack.c.b16 %v1228, %v1224
        %v1317 = vpack.c.b16 %v1233, %v1229
        %v1318 = vpack.c.b16 %v1234, %v1230
        %v1319 = vpack.c.b16 %v1235, %v1231
        %v1320 = vpack.c.b16 %v1236, %v1232
        %v1321 = vpack.c.b16 %v1241, %v1237
        %v1322 = vpack.c.b16 %v1242, %v1238
        %v1323 = vpack.c.b16 %v1243, %v1239
        %v1324 = vpack.c.b16 %v1244, %v1240
        %v1325 = vpack.c.b16 %v1249, %v1245
        %v1326 = vpack.c.b16 %v1250, %v1246
        %v1327 = vpack.c.b16 %v1251, %v1247
        %v1328 = vpack.c.b16 %v1252, %v1248
        %v1329 = vpack.c.b16 %v1257, %v1253
        %v1330 = vpack.c.b16 %v1258, %v1254
        %v1331 = vpack.c.b16 %v1259, %v1255
        %v1332 = vpack.c.b16 %v1260, %v1256
        %v1333 = vpack.c.b16 %v1265, %v1261
        %v1334 = vpack.c.b16 %v1266, %v1262
        %v1335 = vpack.c.b16 %v1267, %v1263
        %v1336 = vpack.c.b16 %v1268, %v1264
        %v1337 = vpack.c.b16 %v1273, %v1269
        %v1338 = vpack.c.b16 %v1274, %v1270
        %v1339 = vpack.c.b16 %v1275, %v1271
        %v1340 = vpack.c.b16 %v1276, %v1272
        %1405 = vmatprep.subr.bf16.mxu0 %v1306
        %1406 = vmatpush1.bf16.msra.mxu0 %v1305
        %1407 = vmatprep.subr.bf16.mxu0 %v1302
        %1408 = vmatpush1.bf16.msra.mxu0 %v1301
        %1409 = vmatprep.subr.bf16.mxu0 %v1298
        %1410 = vmatpush1.bf16.msra.mxu0 %v1297
        %1411 = vmatprep.subr.bf16.mxu0 %v1294
        %1412 = vmatpush1.bf16.msra.mxu0 %v1293
        %1413 = vmatprep.subr.bf16.mxu0 %v1290
        %1414 = vmatpush1.bf16.msra.mxu0 %v1289
        %1415 = vmatprep.subr.bf16.mxu0 %v1286
        %1416 = vmatpush1.bf16.msra.mxu0 %v1285
        %1417 = vmatprep.subr.bf16.mxu0 %v1282
        %1418 = vmatpush1.bf16.msra.mxu0 %v1281
        %1419 = vmatprep.subr.bf16.mxu0 %v1278
        %1420 = vmatpush1.bf16.msra.mxu0 %v1277
        %1421 = vmatprep.subr.bf16.mxu0 %v1338
        %1422 = vmatpush2.bf16.msra.mxu0 %v1337
        %1423 = vmatprep.subr.bf16.mxu0 %v1334
        %1424 = vmatpush2.bf16.msra.mxu0 %v1333
        %1425 = vmatprep.subr.bf16.mxu0 %v1330
        %1426 = vmatpush2.bf16.msra.mxu0 %v1329
        %1427 = vmatprep.subr.bf16.mxu0 %v1326
        %1428 = vmatpush2.bf16.msra.mxu0 %v1325
        %1429 = vmatprep.subr.bf16.mxu0 %v1322
        %1430 = vmatpush2.bf16.msra.mxu0 %v1321
        %1431 = vmatprep.subr.bf16.mxu0 %v1318
        %1432 = vmatpush2.bf16.msra.mxu0 %v1317
        %1433 = vmatprep.subr.bf16.mxu0 %v1314
        %1434 = vmatpush2.bf16.msra.mxu0 %v1313
        %1435 = vmatprep.subr.bf16.mxu0 %v1310
        %1436 = vmatpush2.bf16.msra.mxu0 %v1309
        %1437 = vmatprep.mubr.bf16.mxu0 %v1054
        %1438 = vmatmul.mubr.bf16.gmra.mxu0 %v1053
        %v1439 = vpop.f32.mrf.mxu0
        %v1440 = vadd.f32 0.0, %v1439
        %v1441 = vpop.f32.mrf.mxu0
        %v1442 = vadd.f32 0.0, %v1441
        %v1443 = vpop.f32.mrf.mxu0
        %v1444 = vadd.f32 0.0, %v1443
        %v1445 = vpop.f32.mrf.mxu0
        %v1446 = vadd.f32 0.0, %v1445
        %1447 = vmatprep.mubr.bf16.mxu0 %v1056
        %1448 = vmatmul.mubr.bf16.gmra.mxu0 %v1055
        %v1449 = vpop.f32.mrf.mxu0
        %v1450 = vadd.f32 0.0, %v1449
        %v1451 = vpop.f32.mrf.mxu0
        %v1452 = vadd.f32 0.0, %v1451
        %v1453 = vpop.f32.mrf.mxu0
        %v1454 = vadd.f32 0.0, %v1453
        %v1455 = vpop.f32.mrf.mxu0
        %v1456 = vadd.f32 0.0, %v1455
        %1457 = vmatprep.mubr.bf16.mxu0 %v1058
        %1458 = vmatmul.mubr.bf16.gmra.mxu0 %v1057
        %v1459 = vpop.f32.mrf.mxu0
        %v1460 = vadd.f32 0.0, %v1459
        %v1461 = vpop.f32.mrf.mxu0
        %v1462 = vadd.f32 0.0, %v1461
        %v1463 = vpop.f32.mrf.mxu0
        %v1464 = vadd.f32 0.0, %v1463
        %v1465 = vpop.f32.mrf.mxu0
        %v1466 = vadd.f32 0.0, %v1465
        %1467 = vmatprep.mubr.bf16.mxu0 %v1060
        %1468 = vmatmul.mubr.bf16.gmra.mxu0 %v1059
        %v1469 = vpop.f32.mrf.mxu0
        %v1470 = vadd.f32 0.0, %v1469
        %v1471 = vpop.f32.mrf.mxu0
        %v1472 = vadd.f32 0.0, %v1471
        %v1473 = vpop.f32.mrf.mxu0
        %v1474 = vadd.f32 0.0, %v1473
        %v1475 = vpop.f32.mrf.mxu0
        %v1476 = vadd.f32 0.0, %v1475
        %1477 = vmatprep.mubr.bf16.mxu0 %v1062
        %1478 = vmatmul.mubr.bf16.gmra.mxu0 %v1061
        %v1479 = vpop.f32.mrf.mxu0
        %v1480 = vadd.f32 0.0, %v1479
        %v1481 = vpop.f32.mrf.mxu0
        %v1482 = vadd.f32 0.0, %v1481
        %v1483 = vpop.f32.mrf.mxu0
        %v1484 = vadd.f32 0.0, %v1483
        %v1485 = vpop.f32.mrf.mxu0
        %v1486 = vadd.f32 0.0, %v1485
        %1487 = vmatprep.mubr.bf16.mxu0 %v1064
        %1488 = vmatmul.mubr.bf16.gmra.mxu0 %v1063
        %v1489 = vpop.f32.mrf.mxu0
        %v1490 = vadd.f32 0.0, %v1489
        %v1491 = vpop.f32.mrf.mxu0
        %v1492 = vadd.f32 0.0, %v1491
        %v1493 = vpop.f32.mrf.mxu0
        %v1494 = vadd.f32 0.0, %v1493
        %v1495 = vpop.f32.mrf.mxu0
        %v1496 = vadd.f32 0.0, %v1495
        %1497 = vmatprep.mubr.bf16.mxu0 %v1066
        %1498 = vmatmul.mubr.bf16.gmra.mxu0 %v1065
        %v1499 = vpop.f32.mrf.mxu0
        %v1500 = vadd.f32 0.0, %v1499
        %v1501 = vpop.f32.mrf.mxu0
        %v1502 = vadd.f32 0.0, %v1501
        %v1503 = vpop.f32.mrf.mxu0
        %v1504 = vadd.f32 0.0, %v1503
        %v1505 = vpop.f32.mrf.mxu0
        %v1506 = vadd.f32 0.0, %v1505
        %1507 = vmatprep.mubr.bf16.mxu0 %v1068
        %1508 = vmatmul.mubr.bf16.gmra.mxu0 %v1067
        %v1509 = vpop.f32.mrf.mxu0
        %v1510 = vadd.f32 0.0, %v1509
        %v1511 = vpop.f32.mrf.mxu0
        %v1512 = vadd.f32 0.0, %v1511
        %v1513 = vpop.f32.mrf.mxu0
        %v1514 = vadd.f32 0.0, %v1513
        %v1515 = vpop.f32.mrf.mxu0
        %v1516 = vadd.f32 0.0, %v1515
        %1517 = vdwg.mxu0
        %1518 = vmatprep.subr.bf16.mxu0 %v1308
        %1519 = vmatpush1.bf16.msra.mxu0 %v1307
        %1520 = vmatprep.subr.bf16.mxu0 %v1304
        %1521 = vmatpush1.bf16.msra.mxu0 %v1303
        %1522 = vmatprep.subr.bf16.mxu0 %v1300
        %1523 = vmatpush1.bf16.msra.mxu0 %v1299
        %1524 = vmatprep.subr.bf16.mxu0 %v1296
        %1525 = vmatpush1.bf16.msra.mxu0 %v1295
        %1526 = vmatprep.subr.bf16.mxu0 %v1292
        %1527 = vmatpush1.bf16.msra.mxu0 %v1291
        %1528 = vmatprep.subr.bf16.mxu0 %v1288
        %1529 = vmatpush1.bf16.msra.mxu0 %v1287
        %1530 = vmatprep.subr.bf16.mxu0 %v1284
        %1531 = vmatpush1.bf16.msra.mxu0 %v1283
        %1532 = vmatprep.subr.bf16.mxu0 %v1280
        %1533 = vmatpush1.bf16.msra.mxu0 %v1279
        %1534 = vmatprep.subr.bf16.mxu0 %v1340
        %1535 = vmatpush2.bf16.msra.mxu0 %v1339
        %1536 = vmatprep.subr.bf16.mxu0 %v1336
        %1537 = vmatpush2.bf16.msra.mxu0 %v1335
        %1538 = vmatprep.subr.bf16.mxu0 %v1332
        %1539 = vmatpush2.bf16.msra.mxu0 %v1331
        %1540 = vmatprep.subr.bf16.mxu0 %v1328
        %1541 = vmatpush2.bf16.msra.mxu0 %v1327
        %1542 = vmatprep.subr.bf16.mxu0 %v1324
        %1543 = vmatpush2.bf16.msra.mxu0 %v1323
        %1544 = vmatprep.subr.bf16.mxu0 %v1320
        %1545 = vmatpush2.bf16.msra.mxu0 %v1319
        %1546 = vmatprep.subr.bf16.mxu0 %v1316
        %1547 = vmatpush2.bf16.msra.mxu0 %v1315
        %1548 = vmatprep.subr.bf16.mxu0 %v1312
        %1549 = vmatpush2.bf16.msra.mxu0 %v1311
        %1550 = vmatprep.mubr.bf16.mxu0 %v1054
        %1551 = vmatmul.mubr.bf16.gmra.mxu0 %v1053
        %v1552 = vpop.f32.mrf.mxu0
        %v1553 = vadd.f32 0.0, %v1552
        %v1554 = vpop.f32.mrf.mxu0
        %v1555 = vadd.f32 0.0, %v1554
        %v1556 = vpop.f32.mrf.mxu0
        %v1557 = vadd.f32 0.0, %v1556
        %v1558 = vpop.f32.mrf.mxu0
        %v1559 = vadd.f32 0.0, %v1558
        %1560 = vmatprep.mubr.bf16.mxu0 %v1056
        %1561 = vmatmul.mubr.bf16.gmra.mxu0 %v1055
        %v1562 = vpop.f32.mrf.mxu0
        %v1563 = vadd.f32 0.0, %v1562
        %v1564 = vpop.f32.mrf.mxu0
        %v1565 = vadd.f32 0.0, %v1564
        %v1566 = vpop.f32.mrf.mxu0
        %v1567 = vadd.f32 0.0, %v1566
        %v1568 = vpop.f32.mrf.mxu0
        %v1569 = vadd.f32 0.0, %v1568
        %1570 = vmatprep.mubr.bf16.mxu0 %v1058
        %1571 = vmatmul.mubr.bf16.gmra.mxu0 %v1057
        %v1572 = vpop.f32.mrf.mxu0
        %v1573 = vadd.f32 0.0, %v1572
        %v1574 = vpop.f32.mrf.mxu0
        %v1575 = vadd.f32 0.0, %v1574
        %v1576 = vpop.f32.mrf.mxu0
        %v1577 = vadd.f32 0.0, %v1576
        %v1578 = vpop.f32.mrf.mxu0
        %v1579 = vadd.f32 0.0, %v1578
        %1580 = vmatprep.mubr.bf16.mxu0 %v1060
        %1581 = vmatmul.mubr.bf16.gmra.mxu0 %v1059
        %v1582 = vpop.f32.mrf.mxu0
        %v1583 = vadd.f32 0.0, %v1582
        %v1584 = vpop.f32.mrf.mxu0
        %v1585 = vadd.f32 0.0, %v1584
        %v1586 = vpop.f32.mrf.mxu0
        %v1587 = vadd.f32 0.0, %v1586
        %v1588 = vpop.f32.mrf.mxu0
        %v1589 = vadd.f32 0.0, %v1588
        %1590 = vmatprep.mubr.bf16.mxu0 %v1062
        %1591 = vmatmul.mubr.bf16.gmra.mxu0 %v1061
        %v1592 = vpop.f32.mrf.mxu0
        %v1593 = vadd.f32 0.0, %v1592
        %v1594 = vpop.f32.mrf.mxu0
        %v1595 = vadd.f32 0.0, %v1594
        %v1596 = vpop.f32.mrf.mxu0
        %v1597 = vadd.f32 0.0, %v1596
        %v1598 = vpop.f32.mrf.mxu0
        %v1599 = vadd.f32 0.0, %v1598
        %1600 = vmatprep.mubr.bf16.mxu0 %v1064
        %1601 = vmatmul.mubr.bf16.gmra.mxu0 %v1063
        %v1602 = vpop.f32.mrf.mxu0
        %v1603 = vadd.f32 0.0, %v1602
        %v1604 = vpop.f32.mrf.mxu0
        %v1605 = vadd.f32 0.0, %v1604
        %v1606 = vpop.f32.mrf.mxu0
        %v1607 = vadd.f32 0.0, %v1606
        %v1608 = vpop.f32.mrf.mxu0
        %v1609 = vadd.f32 0.0, %v1608
        %1610 = vmatprep.mubr.bf16.mxu0 %v1066
        %1611 = vmatmul.mubr.bf16.gmra.mxu0 %v1065
        %v1612 = vpop.f32.mrf.mxu0
        %v1613 = vadd.f32 0.0, %v1612
        %v1614 = vpop.f32.mrf.mxu0
        %v1615 = vadd.f32 0.0, %v1614
        %v1616 = vpop.f32.mrf.mxu0
        %v1617 = vadd.f32 0.0, %v1616
        %v1618 = vpop.f32.mrf.mxu0
        %v1619 = vadd.f32 0.0, %v1618
        %1620 = vmatprep.mubr.bf16.mxu0 %v1068
        %1621 = vmatmul.mubr.bf16.gmra.mxu0 %v1067
        %v1622 = vpop.f32.mrf.mxu0
        %v1623 = vadd.f32 0.0, %v1622
        %v1624 = vpop.f32.mrf.mxu0
        %v1625 = vadd.f32 0.0, %v1624
        %v1626 = vpop.f32.mrf.mxu0
        %v1627 = vadd.f32 0.0, %v1626
        %v1628 = vpop.f32.mrf.mxu0
        %v1629 = vadd.f32 0.0, %v1628
        %1630 = vdwg.mxu0
        %v1631 = vxor.u32 %v1440, 2147483648
        %v1632 = vxor.u32 %v1442, 2147483648
        %v1633 = vxor.u32 %v1444, 2147483648
        %v1634 = vxor.u32 %v1446, 2147483648
        %v1635 = vxor.u32 %v1450, 2147483648
        %v1636 = vxor.u32 %v1452, 2147483648
        %v1637 = vxor.u32 %v1454, 2147483648
        %v1638 = vxor.u32 %v1456, 2147483648
        %v1639 = vxor.u32 %v1460, 2147483648
        %v1640 = vxor.u32 %v1462, 2147483648
        %v1641 = vxor.u32 %v1464, 2147483648
        %v1642 = vxor.u32 %v1466, 2147483648
        %v1643 = vxor.u32 %v1470, 2147483648
        %v1644 = vxor.u32 %v1472, 2147483648
        %v1645 = vxor.u32 %v1474, 2147483648
        %v1646 = vxor.u32 %v1476, 2147483648
        %v1647 = vxor.u32 %v1480, 2147483648
        %v1648 = vxor.u32 %v1482, 2147483648
        %v1649 = vxor.u32 %v1484, 2147483648
        %v1650 = vxor.u32 %v1486, 2147483648
        %v1651 = vxor.u32 %v1490, 2147483648
        %v1652 = vxor.u32 %v1492, 2147483648
        %v1653 = vxor.u32 %v1494, 2147483648
        %v1654 = vxor.u32 %v1496, 2147483648
        %v1655 = vxor.u32 %v1500, 2147483648
        %v1656 = vxor.u32 %v1502, 2147483648
        %v1657 = vxor.u32 %v1504, 2147483648
        %v1658 = vxor.u32 %v1506, 2147483648
        %v1659 = vxor.u32 %v1510, 2147483648
        %v1660 = vxor.u32 %v1512, 2147483648
        %v1661 = vxor.u32 %v1514, 2147483648
        %v1662 = vxor.u32 %v1516, 2147483648
        %v1663 = vmul.f32 %v1631, 1.442695
        %v1664 = vpow.pop %v1663
        %v1665 = vmul.f32 %v1632, 1.442695
        %v1666 = vpow.pop %v1665
        %v1667 = vmul.f32 %v1633, 1.442695
        %v1668 = vpow.pop %v1667
        %v1669 = vmul.f32 %v1634, 1.442695
        %v1670 = vpow.pop %v1669
        %v1671 = vmul.f32 %v1635, 1.442695
        %v1672 = vpow.pop %v1671
        %v1673 = vmul.f32 %v1636, 1.442695
        %v1674 = vpow.pop %v1673
        %v1675 = vmul.f32 %v1637, 1.442695
        %v1676 = vpow.pop %v1675
        %v1677 = vmul.f32 %v1638, 1.442695
        %v1678 = vpow.pop %v1677
        %v1679 = vmul.f32 %v1639, 1.442695
        %v1680 = vpow.pop %v1679
        %v1681 = vmul.f32 %v1640, 1.442695
        %v1682 = vpow.pop %v1681
        %v1683 = vmul.f32 %v1641, 1.442695
        %v1684 = vpow.pop %v1683
        %v1685 = vmul.f32 %v1642, 1.442695
        %v1686 = vpow.pop %v1685
        %v1687 = vmul.f32 %v1643, 1.442695
        %v1688 = vpow.pop %v1687
        %v1689 = vmul.f32 %v1644, 1.442695
        %v1690 = vpow.pop %v1689
        %v1691 = vmul.f32 %v1645, 1.442695
        %v1692 = vpow.pop %v1691
        %v1693 = vmul.f32 %v1646, 1.442695
        %v1694 = vpow.pop %v1693
        %v1695 = vmul.f32 %v1647, 1.442695
        %v1696 = vpow.pop %v1695
        %v1697 = vmul.f32 %v1648, 1.442695
        %v1698 = vpow.pop %v1697
        %v1699 = vmul.f32 %v1649, 1.442695
        %v1700 = vpow.pop %v1699
        %v1701 = vmul.f32 %v1650, 1.442695
        %v1702 = vpow.pop %v1701
        %v1703 = vmul.f32 %v1651, 1.442695
        %v1704 = vpow.pop %v1703
        %v1705 = vmul.f32 %v1652, 1.442695
        %v1706 = vpow.pop %v1705
        %v1707 = vmul.f32 %v1653, 1.442695
        %v1708 = vpow.pop %v1707
        %v1709 = vmul.f32 %v1654, 1.442695
        %v1710 = vpow.pop %v1709
        %v1711 = vmul.f32 %v1655, 1.442695
        %v1712 = vpow.pop %v1711
        %v1713 = vmul.f32 %v1656, 1.442695
        %v1714 = vpow.pop %v1713
        %v1715 = vmul.f32 %v1657, 1.442695
        %v1716 = vpow.pop %v1715
        %v1717 = vmul.f32 %v1658, 1.442695
        %v1718 = vpow.pop %v1717
        %v1719 = vmul.f32 %v1659, 1.442695
        %v1720 = vpow.pop %v1719
        %v1721 = vmul.f32 %v1660, 1.442695
        %v1722 = vpow.pop %v1721
        %v1723 = vmul.f32 %v1661, 1.442695
        %v1724 = vpow.pop %v1723
        %v1725 = vmul.f32 %v1662, 1.442695
        %v1726 = vpow.pop %v1725
        %v1727 = vadd.f32 %v1664, 1.0
        %v1728 = vadd.f32 %v1666, 1.0
        %v1729 = vadd.f32 %v1668, 1.0
        %v1730 = vadd.f32 %v1670, 1.0
        %v1731 = vadd.f32 %v1672, 1.0
        %v1732 = vadd.f32 %v1674, 1.0
        %v1733 = vadd.f32 %v1676, 1.0
        %v1734 = vadd.f32 %v1678, 1.0
        %v1735 = vadd.f32 %v1680, 1.0
        %v1736 = vadd.f32 %v1682, 1.0
        %v1737 = vadd.f32 %v1684, 1.0
        %v1738 = vadd.f32 %v1686, 1.0
        %v1739 = vadd.f32 %v1688, 1.0
        %v1740 = vadd.f32 %v1690, 1.0
        %v1741 = vadd.f32 %v1692, 1.0
        %v1742 = vadd.f32 %v1694, 1.0
        %v1743 = vadd.f32 %v1696, 1.0
        %v1744 = vadd.f32 %v1698, 1.0
        %v1745 = vadd.f32 %v1700, 1.0
        %v1746 = vadd.f32 %v1702, 1.0
        %v1747 = vadd.f32 %v1704, 1.0
        %v1748 = vadd.f32 %v1706, 1.0
        %v1749 = vadd.f32 %v1708, 1.0
        %v1750 = vadd.f32 %v1710, 1.0
        %v1751 = vadd.f32 %v1712, 1.0
        %v1752 = vadd.f32 %v1714, 1.0
        %v1753 = vadd.f32 %v1716, 1.0
        %v1754 = vadd.f32 %v1718, 1.0
        %v1755 = vadd.f32 %v1720, 1.0
        %v1756 = vadd.f32 %v1722, 1.0
        %v1757 = vadd.f32 %v1724, 1.0
        %v1758 = vadd.f32 %v1726, 1.0
        %v1759 = vrcp.pop %v1727
        %v1760 = vmul.f32 1.0, %v1759
        %v1761 = vrcp.pop %v1728
        %v1762 = vmul.f32 1.0, %v1761
        %v1763 = vrcp.pop %v1729
        %v1764 = vmul.f32 1.0, %v1763
        %v1765 = vrcp.pop %v1730
        %v1766 = vmul.f32 1.0, %v1765
        %v1767 = vrcp.pop %v1731
        %v1768 = vmul.f32 1.0, %v1767
        %v1769 = vrcp.pop %v1732
        %v1770 = vmul.f32 1.0, %v1769
        %v1771 = vrcp.pop %v1733
        %v1772 = vmul.f32 1.0, %v1771
        %v1773 = vrcp.pop %v1734
        %v1774 = vmul.f32 1.0, %v1773
        %v1775 = vrcp.pop %v1735
        %v1776 = vmul.f32 1.0, %v1775
        %v1777 = vrcp.pop %v1736
        %v1778 = vmul.f32 1.0, %v1777
        %v1779 = vrcp.pop %v1737
        %v1780 = vmul.f32 1.0, %v1779
        %v1781 = vrcp.pop %v1738
        %v1782 = vmul.f32 1.0, %v1781
        %v1783 = vrcp.pop %v1739
        %v1784 = vmul.f32 1.0, %v1783
        %v1785 = vrcp.pop %v1740
        %v1786 = vmul.f32 1.0, %v1785
        %v1787 = vrcp.pop %v1741
        %v1788 = vmul.f32 1.0, %v1787
        %v1789 = vrcp.pop %v1742
        %v1790 = vmul.f32 1.0, %v1789
        %v1791 = vrcp.pop %v1743
        %v1792 = vmul.f32 1.0, %v1791
        %v1793 = vrcp.pop %v1744
        %v1794 = vmul.f32 1.0, %v1793
        %v1795 = vrcp.pop %v1745
        %v1796 = vmul.f32 1.0, %v1795
        %v1797 = vrcp.pop %v1746
        %v1798 = vmul.f32 1.0, %v1797
        %v1799 = vrcp.pop %v1747
        %v1800 = vmul.f32 1.0, %v1799
        %v1801 = vrcp.pop %v1748
        %v1802 = vmul.f32 1.0, %v1801
        %v1803 = vrcp.pop %v1749
        %v1804 = vmul.f32 1.0, %v1803
        %v1805 = vrcp.pop %v1750
        %v1806 = vmul.f32 1.0, %v1805
        %v1807 = vrcp.pop %v1751
        %v1808 = vmul.f32 1.0, %v1807
        %v1809 = vrcp.pop %v1752
        %v1810 = vmul.f32 1.0, %v1809
        %v1811 = vrcp.pop %v1753
        %v1812 = vmul.f32 1.0, %v1811
        %v1813 = vrcp.pop %v1754
        %v1814 = vmul.f32 1.0, %v1813
        %v1815 = vrcp.pop %v1755
        %v1816 = vmul.f32 1.0, %v1815
        %v1817 = vrcp.pop %v1756
        %v1818 = vmul.f32 1.0, %v1817
        %v1819 = vrcp.pop %v1757
        %v1820 = vmul.f32 1.0, %v1819
        %v1821 = vrcp.pop %v1758
        %v1822 = vmul.f32 1.0, %v1821
        %v1823 = vmul.f32 %v1440, %v1760
        %v1824 = vmul.f32 %v1442, %v1762
        %v1825 = vmul.f32 %v1444, %v1764
        %v1826 = vmul.f32 %v1446, %v1766
        %v1827 = vmul.f32 %v1450, %v1768
        %v1828 = vmul.f32 %v1452, %v1770
        %v1829 = vmul.f32 %v1454, %v1772
        %v1830 = vmul.f32 %v1456, %v1774
        %v1831 = vmul.f32 %v1460, %v1776
        %v1832 = vmul.f32 %v1462, %v1778
        %v1833 = vmul.f32 %v1464, %v1780
        %v1834 = vmul.f32 %v1466, %v1782
        %v1835 = vmul.f32 %v1470, %v1784
        %v1836 = vmul.f32 %v1472, %v1786
        %v1837 = vmul.f32 %v1474, %v1788
        %v1838 = vmul.f32 %v1476, %v1790
        %v1839 = vmul.f32 %v1480, %v1792
        %v1840 = vmul.f32 %v1482, %v1794
        %v1841 = vmul.f32 %v1484, %v1796
        %v1842 = vmul.f32 %v1486, %v1798
        %v1843 = vmul.f32 %v1490, %v1800
        %v1844 = vmul.f32 %v1492, %v1802
        %v1845 = vmul.f32 %v1494, %v1804
        %v1846 = vmul.f32 %v1496, %v1806
        %v1847 = vmul.f32 %v1500, %v1808
        %v1848 = vmul.f32 %v1502, %v1810
        %v1849 = vmul.f32 %v1504, %v1812
        %v1850 = vmul.f32 %v1506, %v1814
        %v1851 = vmul.f32 %v1510, %v1816
        %v1852 = vmul.f32 %v1512, %v1818
        %v1853 = vmul.f32 %v1514, %v1820
        %v1854 = vmul.f32 %v1516, %v1822
        %v1855 = vmul.f32 %v1823, %v1553
        %v1856 = vmul.f32 %v1824, %v1555
        %v1857 = vmul.f32 %v1825, %v1557
        %v1858 = vmul.f32 %v1826, %v1559
        %v1859 = vmul.f32 %v1827, %v1563
        %v1860 = vmul.f32 %v1828, %v1565
        %v1861 = vmul.f32 %v1829, %v1567
        %v1862 = vmul.f32 %v1830, %v1569
        %v1863 = vmul.f32 %v1831, %v1573
        %v1864 = vmul.f32 %v1832, %v1575
        %v1865 = vmul.f32 %v1833, %v1577
        %v1866 = vmul.f32 %v1834, %v1579
        %v1867 = vmul.f32 %v1835, %v1583
        %v1868 = vmul.f32 %v1836, %v1585
        %v1869 = vmul.f32 %v1837, %v1587
        %v1870 = vmul.f32 %v1838, %v1589
        %v1871 = vmul.f32 %v1839, %v1593
        %v1872 = vmul.f32 %v1840, %v1595
        %v1873 = vmul.f32 %v1841, %v1597
        %v1874 = vmul.f32 %v1842, %v1599
        %v1875 = vmul.f32 %v1843, %v1603
        %v1876 = vmul.f32 %v1844, %v1605
        %v1877 = vmul.f32 %v1845, %v1607
        %v1878 = vmul.f32 %v1846, %v1609
        %v1879 = vmul.f32 %v1847, %v1613
        %v1880 = vmul.f32 %v1848, %v1615
        %v1881 = vmul.f32 %v1849, %v1617
        %v1882 = vmul.f32 %v1850, %v1619
        %v1883 = vmul.f32 %v1851, %v1623
        %v1884 = vmul.f32 %v1852, %v1625
        %v1885 = vmul.f32 %v1853, %v1627
        %v1886 = vmul.f32 %v1854, %v1629
        %v1887 = vld [vmem:[#allocation2] sm:$0xff]
        %v1888 = vld [vmem:[#allocation2 + $0x8] sm:$0xff]
        %v1889 = vld [vmem:[#allocation2 + $0x10] sm:$0xff]
        %v1890 = vld [vmem:[#allocation2 + $0x18] sm:$0xff]
        %v1891 = vld [vmem:[#allocation2 + $0x20] sm:$0xff]
        %v1892 = vld [vmem:[#allocation2 + $0x28] sm:$0xff]
        %v1893 = vld [vmem:[#allocation2 + $0x30] sm:$0xff]
        %v1894 = vld [vmem:[#allocation2 + $0x38] sm:$0xff]
        %v1895 = vld [vmem:[#allocation2 + $0x40] sm:$0xff]
        %v1896 = vld [vmem:[#allocation2 + $0x48] sm:$0xff]
        %v1897 = vld [vmem:[#allocation2 + $0x50] sm:$0xff]
        %v1898 = vld [vmem:[#allocation2 + $0x58] sm:$0xff]
        %v1899 = vld [vmem:[#allocation2 + $0x60] sm:$0xff]
        %v1900 = vld [vmem:[#allocation2 + $0x68] sm:$0xff]
        %v1901 = vld [vmem:[#allocation2 + $0x70] sm:$0xff]
        %v1902 = vld [vmem:[#allocation2 + $0x78] sm:$0xff]
        %v1903 = vld [vmem:[#allocation2 + $0x80] sm:$0xff]
        %v1904 = vld [vmem:[#allocation2 + $0x88] sm:$0xff]
        %v1905 = vld [vmem:[#allocation2 + $0x90] sm:$0xff]
        %v1906 = vld [vmem:[#allocation2 + $0x98] sm:$0xff]
        %v1907 = vld [vmem:[#allocation2 + $0xa0] sm:$0xff]
        %v1908 = vld [vmem:[#allocation2 + $0xa8] sm:$0xff]
        %v1909 = vld [vmem:[#allocation2 + $0xb0] sm:$0xff]
        %v1910 = vld [vmem:[#allocation2 + $0xb8] sm:$0xff]
        %v1911 = vld [vmem:[#allocation2 + $0xc0] sm:$0xff]
        %v1912 = vld [vmem:[#allocation2 + $0xc8] sm:$0xff]
        %v1913 = vld [vmem:[#allocation2 + $0xd0] sm:$0xff]
        %v1914 = vld [vmem:[#allocation2 + $0xd8] sm:$0xff]
        %v1915 = vld [vmem:[#allocation2 + $0xe0] sm:$0xff]
        %v1916 = vld [vmem:[#allocation2 + $0xe8] sm:$0xff]
        %v1917 = vld [vmem:[#allocation2 + $0xf0] sm:$0xff]
        %v1918 = vld [vmem:[#allocation2 + $0xf8] sm:$0xff]
        %v1919 = vpack.c.bf16 %v1857, %v1855
        %v1920 = vpack.c.bf16 %v1858, %v1856
        %v1921 = vpack.c.bf16 %v1861, %v1859
        %v1922 = vpack.c.bf16 %v1862, %v1860
        %v1923 = vpack.c.bf16 %v1865, %v1863
        %v1924 = vpack.c.bf16 %v1866, %v1864
        %v1925 = vpack.c.bf16 %v1869, %v1867
        %v1926 = vpack.c.bf16 %v1870, %v1868
        %v1927 = vpack.c.bf16 %v1873, %v1871
        %v1928 = vpack.c.bf16 %v1874, %v1872
        %v1929 = vpack.c.bf16 %v1877, %v1875
        %v1930 = vpack.c.bf16 %v1878, %v1876
        %v1931 = vpack.c.bf16 %v1881, %v1879
        %v1932 = vpack.c.bf16 %v1882, %v1880
        %v1933 = vpack.c.bf16 %v1885, %v1883
        %v1934 = vpack.c.bf16 %v1886, %v1884
        %v1935 = vld [vmem:[%s318] sm:$0xff]
        %v1936 = vld [vmem:[%s318 + $0x8] sm:$0xff]
        %v1937 = vld [vmem:[%s318 + $0x10] sm:$0xff]
        %v1938 = vld [vmem:[%s318 + $0x18] sm:$0xff]
        %v1939 = vld [vmem:[%s318 + $0x20] sm:$0xff]
        %v1940 = vld [vmem:[%s318 + $0x28] sm:$0xff]
        %v1941 = vld [vmem:[%s318 + $0x30] sm:$0xff]
        %v1942 = vld [vmem:[%s318 + $0x38] sm:$0xff]
        %v1943 = vld [vmem:[%s318 + $0x40] sm:$0xff]
        %v1944 = vld [vmem:[%s318 + $0x48] sm:$0xff]
        %v1945 = vld [vmem:[%s318 + $0x50] sm:$0xff]
        %v1946 = vld [vmem:[%s318 + $0x58] sm:$0xff]
        %v1947 = vld [vmem:[%s318 + $0x60] sm:$0xff]
        %v1948 = vld [vmem:[%s318 + $0x68] sm:$0xff]
        %v1949 = vld [vmem:[%s318 + $0x70] sm:$0xff]
        %v1950 = vld [vmem:[%s318 + $0x78] sm:$0xff]
        %v1951 = vld [vmem:[%s318 + $0x80] sm:$0xff]
        %v1952 = vld [vmem:[%s318 + $0x88] sm:$0xff]
        %v1953 = vld [vmem:[%s318 + $0x90] sm:$0xff]
        %v1954 = vld [vmem:[%s318 + $0x98] sm:$0xff]
        %v1955 = vld [vmem:[%s318 + $0xa0] sm:$0xff]
        %v1956 = vld [vmem:[%s318 + $0xa8] sm:$0xff]
        %v1957 = vld [vmem:[%s318 + $0xb0] sm:$0xff]
        %v1958 = vld [vmem:[%s318 + $0xb8] sm:$0xff]
        %v1959 = vld [vmem:[%s318 + $0xc0] sm:$0xff]
        %v1960 = vld [vmem:[%s318 + $0xc8] sm:$0xff]
        %v1961 = vld [vmem:[%s318 + $0xd0] sm:$0xff]
        %v1962 = vld [vmem:[%s318 + $0xd8] sm:$0xff]
        %v1963 = vld [vmem:[%s318 + $0xe0] sm:$0xff]
        %v1964 = vld [vmem:[%s318 + $0xe8] sm:$0xff]
        %v1965 = vld [vmem:[%s318 + $0xf0] sm:$0xff]
        %v1966 = vld [vmem:[%s318 + $0xf8] sm:$0xff]
        %v1999 = vunpack.c.l.b16 %v1935
        %v2000 = vunpack.c.h.b16 %v1935
        %v2001 = vunpack.c.l.b16 %v1936
        %v2002 = vunpack.c.h.b16 %v1936
        %v2003 = vunpack.c.l.b16 %v1937
        %v2004 = vunpack.c.h.b16 %v1937
        %v2005 = vunpack.c.l.b16 %v1938
        %v2006 = vunpack.c.h.b16 %v1938
        %v2007 = vunpack.c.l.b16 %v1939
        %v2008 = vunpack.c.h.b16 %v1939
        %v2009 = vunpack.c.l.b16 %v1940
        %v2010 = vunpack.c.h.b16 %v1940
        %v2011 = vunpack.c.l.b16 %v1941
        %v2012 = vunpack.c.h.b16 %v1941
        %v2013 = vunpack.c.l.b16 %v1942
        %v2014 = vunpack.c.h.b16 %v1942
        %v2015 = vunpack.c.l.b16 %v1943
        %v2016 = vunpack.c.h.b16 %v1943
        %v2017 = vunpack.c.l.b16 %v1944
        %v2018 = vunpack.c.h.b16 %v1944
        %v2019 = vunpack.c.l.b16 %v1945
        %v2020 = vunpack.c.h.b16 %v1945
        %v2021 = vunpack.c.l.b16 %v1946
        %v2022 = vunpack.c.h.b16 %v1946
        %v2023 = vunpack.c.l.b16 %v1947
        %v2024 = vunpack.c.h.b16 %v1947
        %v2025 = vunpack.c.l.b16 %v1948
        %v2026 = vunpack.c.h.b16 %v1948
        %v2027 = vunpack.c.l.b16 %v1949
        %v2028 = vunpack.c.h.b16 %v1949
        %v2029 = vunpack.c.l.b16 %v1950
        %v2030 = vunpack.c.h.b16 %v1950
        %v2031 = vunpack.c.l.b16 %v1951
        %v2032 = vunpack.c.h.b16 %v1951
        %v2033 = vunpack.c.l.b16 %v1952
        %v2034 = vunpack.c.h.b16 %v1952
        %v2035 = vunpack.c.l.b16 %v1953
        %v2036 = vunpack.c.h.b16 %v1953
        %v2037 = vunpack.c.l.b16 %v1954
        %v2038 = vunpack.c.h.b16 %v1954
        %v2039 = vunpack.c.l.b16 %v1955
        %v2040 = vunpack.c.h.b16 %v1955
        %v2041 = vunpack.c.l.b16 %v1956
        %v2042 = vunpack.c.h.b16 %v1956
        %v2043 = vunpack.c.l.b16 %v1957
        %v2044 = vunpack.c.h.b16 %v1957
        %v2045 = vunpack.c.l.b16 %v1958
        %v2046 = vunpack.c.h.b16 %v1958
        %v2047 = vunpack.c.l.b16 %v1959
        %v2048 = vunpack.c.h.b16 %v1959
        %v2049 = vunpack.c.l.b16 %v1960
        %v2050 = vunpack.c.h.b16 %v1960
        %v2051 = vunpack.c.l.b16 %v1961
        %v2052 = vunpack.c.h.b16 %v1961
        %v2053 = vunpack.c.l.b16 %v1962
        %v2054 = vunpack.c.h.b16 %v1962
        %v2055 = vunpack.c.l.b16 %v1963
        %v2056 = vunpack.c.h.b16 %v1963
        %v2057 = vunpack.c.l.b16 %v1964
        %v2058 = vunpack.c.h.b16 %v1964
        %v2059 = vunpack.c.l.b16 %v1965
        %v2060 = vunpack.c.h.b16 %v1965
        %v2061 = vunpack.c.l.b16 %v1966
        %v2062 = vunpack.c.h.b16 %v1966
        %v2063 = vpack.c.b16 %v2001, %v1999
        %v2064 = vpack.c.b16 %v2002, %v2000
        %v2065 = vpack.c.b16 %v2005, %v2003
        %v2066 = vpack.c.b16 %v2006, %v2004
        %v2067 = vpack.c.b16 %v2009, %v2007
        %v2068 = vpack.c.b16 %v2010, %v2008
        %v2069 = vpack.c.b16 %v2013, %v2011
        %v2070 = vpack.c.b16 %v2014, %v2012
        %v2071 = vpack.c.b16 %v2017, %v2015
        %v2072 = vpack.c.b16 %v2018, %v2016
        %v2073 = vpack.c.b16 %v2021, %v2019
        %v2074 = vpack.c.b16 %v2022, %v2020
        %v2075 = vpack.c.b16 %v2025, %v2023
        %v2076 = vpack.c.b16 %v2026, %v2024
        %v2077 = vpack.c.b16 %v2029, %v2027
        %v2078 = vpack.c.b16 %v2030, %v2028
        %v2079 = vpack.c.b16 %v2033, %v2031
        %v2080 = vpack.c.b16 %v2034, %v2032
        %v2081 = vpack.c.b16 %v2037, %v2035
        %v2082 = vpack.c.b16 %v2038, %v2036
        %v2083 = vpack.c.b16 %v2041, %v2039
        %v2084 = vpack.c.b16 %v2042, %v2040
        %v2085 = vpack.c.b16 %v2045, %v2043
        %v2086 = vpack.c.b16 %v2046, %v2044
        %v2087 = vpack.c.b16 %v2049, %v2047
        %v2088 = vpack.c.b16 %v2050, %v2048
        %v2089 = vpack.c.b16 %v2053, %v2051
        %v2090 = vpack.c.b16 %v2054, %v2052
        %v2091 = vpack.c.b16 %v2057, %v2055
        %v2092 = vpack.c.b16 %v2058, %v2056
        %v2093 = vpack.c.b16 %v2061, %v2059
        %v2094 = vpack.c.b16 %v2062, %v2060
        %2127 = vmatprep.subr.bf16.mxu0 %v2078
        %2128 = vmatpush1.bf16.msra.mxu0 %v2077
        %2129 = vmatprep.subr.bf16.mxu0 %v2076
        %2130 = vmatpush1.bf16.msra.mxu0 %v2075
        %2131 = vmatprep.subr.bf16.mxu0 %v2074
        %2132 = vmatpush1.bf16.msra.mxu0 %v2073
        %2133 = vmatprep.subr.bf16.mxu0 %v2072
        %2134 = vmatpush1.bf16.msra.mxu0 %v2071
        %2135 = vmatprep.subr.bf16.mxu0 %v2070
        %2136 = vmatpush1.bf16.msra.mxu0 %v2069
        %2137 = vmatprep.subr.bf16.mxu0 %v2068
        %2138 = vmatpush1.bf16.msra.mxu0 %v2067
        %2139 = vmatprep.subr.bf16.mxu0 %v2066
        %2140 = vmatpush1.bf16.msra.mxu0 %v2065
        %2141 = vmatprep.subr.bf16.mxu0 %v2064
        %2142 = vmatpush1.bf16.msra.mxu0 %v2063
        %2143 = vmatprep.subr.bf16.mxu0 %v2094
        %2144 = vmatpush2.bf16.msra.mxu0 %v2093
        %2145 = vmatprep.subr.bf16.mxu0 %v2092
        %2146 = vmatpush2.bf16.msra.mxu0 %v2091
        %2147 = vmatprep.subr.bf16.mxu0 %v2090
        %2148 = vmatpush2.bf16.msra.mxu0 %v2089
        %2149 = vmatprep.subr.bf16.mxu0 %v2088
        %2150 = vmatpush2.bf16.msra.mxu0 %v2087
        %2151 = vmatprep.subr.bf16.mxu0 %v2086
        %2152 = vmatpush2.bf16.msra.mxu0 %v2085
        %2153 = vmatprep.subr.bf16.mxu0 %v2084
        %2154 = vmatpush2.bf16.msra.mxu0 %v2083
        %2155 = vmatprep.subr.bf16.mxu0 %v2082
        %2156 = vmatpush2.bf16.msra.mxu0 %v2081
        %2157 = vmatprep.subr.bf16.mxu0 %v2080
        %2158 = vmatpush2.bf16.msra.mxu0 %v2079
        %2159 = vmatprep.mubr.bf16.mxu0 %v1920
        %2160 = vmatmul.mubr.bf16.gmra.mxu0 %v1919
        %v2161 = vpop.f32.mrf.mxu0
        %v2162 = vadd.f32 0.0, %v2161
        %v2163 = vpop.f32.mrf.mxu0
        %v2164 = vadd.f32 0.0, %v2163
        %v2165 = vpop.f32.mrf.mxu0
        %v2166 = vadd.f32 0.0, %v2165
        %v2167 = vpop.f32.mrf.mxu0
        %v2168 = vadd.f32 0.0, %v2167
        %2169 = vmatprep.mubr.bf16.mxu0 %v1922
        %2170 = vmatmul.mubr.bf16.gmra.mxu0 %v1921
        %v2171 = vpop.f32.mrf.mxu0
        %v2172 = vadd.f32 0.0, %v2171
        %v2173 = vpop.f32.mrf.mxu0
        %v2174 = vadd.f32 0.0, %v2173
        %v2175 = vpop.f32.mrf.mxu0
        %v2176 = vadd.f32 0.0, %v2175
        %v2177 = vpop.f32.mrf.mxu0
        %v2178 = vadd.f32 0.0, %v2177
        %2179 = vmatprep.mubr.bf16.mxu0 %v1924
        %2180 = vmatmul.mubr.bf16.gmra.mxu0 %v1923
        %v2181 = vpop.f32.mrf.mxu0
        %v2182 = vadd.f32 0.0, %v2181
        %v2183 = vpop.f32.mrf.mxu0
        %v2184 = vadd.f32 0.0, %v2183
        %v2185 = vpop.f32.mrf.mxu0
        %v2186 = vadd.f32 0.0, %v2185
        %v2187 = vpop.f32.mrf.mxu0
        %v2188 = vadd.f32 0.0, %v2187
        %2189 = vmatprep.mubr.bf16.mxu0 %v1926
        %2190 = vmatmul.mubr.bf16.gmra.mxu0 %v1925
        %v2191 = vpop.f32.mrf.mxu0
        %v2192 = vadd.f32 0.0, %v2191
        %v2193 = vpop.f32.mrf.mxu0
        %v2194 = vadd.f32 0.0, %v2193
        %v2195 = vpop.f32.mrf.mxu0
        %v2196 = vadd.f32 0.0, %v2195
        %v2197 = vpop.f32.mrf.mxu0
        %v2198 = vadd.f32 0.0, %v2197
        %2199 = vmatprep.mubr.bf16.mxu0 %v1928
        %2200 = vmatmul.mubr.bf16.gmra.mxu0 %v1927
        %v2201 = vpop.f32.mrf.mxu0
        %v2202 = vadd.f32 0.0, %v2201
        %v2203 = vpop.f32.mrf.mxu0
        %v2204 = vadd.f32 0.0, %v2203
        %v2205 = vpop.f32.mrf.mxu0
        %v2206 = vadd.f32 0.0, %v2205
        %v2207 = vpop.f32.mrf.mxu0
        %v2208 = vadd.f32 0.0, %v2207
        %2209 = vmatprep.mubr.bf16.mxu0 %v1930
        %2210 = vmatmul.mubr.bf16.gmra.mxu0 %v1929
        %v2211 = vpop.f32.mrf.mxu0
        %v2212 = vadd.f32 0.0, %v2211
        %v2213 = vpop.f32.mrf.mxu0
        %v2214 = vadd.f32 0.0, %v2213
        %v2215 = vpop.f32.mrf.mxu0
        %v2216 = vadd.f32 0.0, %v2215
        %v2217 = vpop.f32.mrf.mxu0
        %v2218 = vadd.f32 0.0, %v2217
        %2219 = vmatprep.mubr.bf16.mxu0 %v1932
        %2220 = vmatmul.mubr.bf16.gmra.mxu0 %v1931
        %v2221 = vpop.f32.mrf.mxu0
        %v2222 = vadd.f32 0.0, %v2221
        %v2223 = vpop.f32.mrf.mxu0
        %v2224 = vadd.f32 0.0, %v2223
        %v2225 = vpop.f32.mrf.mxu0
        %v2226 = vadd.f32 0.0, %v2225
        %v2227 = vpop.f32.mrf.mxu0
        %v2228 = vadd.f32 0.0, %v2227
        %2229 = vmatprep.mubr.bf16.mxu0 %v1934
        %2230 = vmatmul.mubr.bf16.gmra.mxu0 %v1933
        %v2231 = vpop.f32.mrf.mxu0
        %v2232 = vadd.f32 0.0, %v2231
        %v2233 = vpop.f32.mrf.mxu0
        %v2234 = vadd.f32 0.0, %v2233
        %v2235 = vpop.f32.mrf.mxu0
        %v2236 = vadd.f32 0.0, %v2235
        %v2237 = vpop.f32.mrf.mxu0
        %v2238 = vadd.f32 0.0, %v2237
        %2239 = vdwg.mxu0
        %v2240 = vadd.f32 %v1887, %v2162
        %v2241 = vadd.f32 %v1888, %v2164
        %v2242 = vadd.f32 %v1889, %v2166
        %v2243 = vadd.f32 %v1890, %v2168
        %v2244 = vadd.f32 %v1891, %v2172
        %v2245 = vadd.f32 %v1892, %v2174
        %v2246 = vadd.f32 %v1893, %v2176
        %v2247 = vadd.f32 %v1894, %v2178
        %v2248 = vadd.f32 %v1895, %v2182
        %v2249 = vadd.f32 %v1896, %v2184
        %v2250 = vadd.f32 %v1897, %v2186
        %v2251 = vadd.f32 %v1898, %v2188
        %v2252 = vadd.f32 %v1899, %v2192
        %v2253 = vadd.f32 %v1900, %v2194
        %v2254 = vadd.f32 %v1901, %v2196
        %v2255 = vadd.f32 %v1902, %v2198
        %v2256 = vadd.f32 %v1903, %v2202
        %v2257 = vadd.f32 %v1904, %v2204
        %v2258 = vadd.f32 %v1905, %v2206
        %v2259 = vadd.f32 %v1906, %v2208
        %v2260 = vadd.f32 %v1907, %v2212
        %v2261 = vadd.f32 %v1908, %v2214
        %v2262 = vadd.f32 %v1909, %v2216
        %v2263 = vadd.f32 %v1910, %v2218
        %v2264 = vadd.f32 %v1911, %v2222
        %v2265 = vadd.f32 %v1912, %v2224
        %v2266 = vadd.f32 %v1913, %v2226
        %v2267 = vadd.f32 %v1914, %v2228
        %v2268 = vadd.f32 %v1915, %v2232
        %v2269 = vadd.f32 %v1916, %v2234
        %v2270 = vadd.f32 %v1917, %v2236
        %v2271 = vadd.f32 %v1918, %v2238
        %2272 = vst [vmem:[#allocation2] sm:$0xff] %v2240
        %2273 = vst [vmem:[#allocation2 + $0x8] sm:$0xff] %v2241
        %2274 = vst [vmem:[#allocation2 + $0x10] sm:$0xff] %v2242
        %2275 = vst [vmem:[#allocation2 + $0x18] sm:$0xff] %v2243
        %2276 = vst [vmem:[#allocation2 + $0x20] sm:$0xff] %v2244
        %2277 = vst [vmem:[#allocation2 + $0x28] sm:$0xff] %v2245
        %2278 = vst [vmem:[#allocation2 + $0x30] sm:$0xff] %v2246
        %2279 = vst [vmem:[#allocation2 + $0x38] sm:$0xff] %v2247
        %2280 = vst [vmem:[#allocation2 + $0x40] sm:$0xff] %v2248
        %2281 = vst [vmem:[#allocation2 + $0x48] sm:$0xff] %v2249
        %2282 = vst [vmem:[#allocation2 + $0x50] sm:$0xff] %v2250
        %2283 = vst [vmem:[#allocation2 + $0x58] sm:$0xff] %v2251
        %2284 = vst [vmem:[#allocation2 + $0x60] sm:$0xff] %v2252
        %2285 = vst [vmem:[#allocation2 + $0x68] sm:$0xff] %v2253
        %2286 = vst [vmem:[#allocation2 + $0x70] sm:$0xff] %v2254
        %2287 = vst [vmem:[#allocation2 + $0x78] sm:$0xff] %v2255
        %2288 = vst [vmem:[#allocation2 + $0x80] sm:$0xff] %v2256
        %2289 = vst [vmem:[#allocation2 + $0x88] sm:$0xff] %v2257
        %2290 = vst [vmem:[#allocation2 + $0x90] sm:$0xff] %v2258
        %2291 = vst [vmem:[#allocation2 + $0x98] sm:$0xff] %v2259
        %2292 = vst [vmem:[#allocation2 + $0xa0] sm:$0xff] %v2260
        %2293 = vst [vmem:[#allocation2 + $0xa8] sm:$0xff] %v2261
        %2294 = vst [vmem:[#allocation2 + $0xb0] sm:$0xff] %v2262
        %2295 = vst [vmem:[#allocation2 + $0xb8] sm:$0xff] %v2263
        %2296 = vst [vmem:[#allocation2 + $0xc0] sm:$0xff] %v2264
        %2297 = vst [vmem:[#allocation2 + $0xc8] sm:$0xff] %v2265
        %2298 = vst [vmem:[#allocation2 + $0xd0] sm:$0xff] %v2266
        %2299 = vst [vmem:[#allocation2 + $0xd8] sm:$0xff] %v2267
        %2300 = vst [vmem:[#allocation2 + $0xe0] sm:$0xff] %v2268
        %2301 = vst [vmem:[#allocation2 + $0xe8] sm:$0xff] %v2269
        %2302 = vst [vmem:[#allocation2 + $0xf0] sm:$0xff] %v2270
        %2303 = vst [vmem:[#allocation2 + $0xf8] sm:$0xff] %v2271
        %p2304 = scmp.eq.s32.totalorder %s31, 1
        // Predicated region
        $region65: #{_customized_mlp_call.1} parent=39 // pred_check
          %p2305 = pneg %p2304
        $region66: #{_customized_mlp_call.1} parent=39 // pred_check_branch
          %2307 = sbr.rel (%p2305) target = $region68
        $region67: #{_customized_mlp_call.1} parent=39 // pred_region
          %v2308 = vld [vmem:[#allocation2] sm:$0xff]
          %v2309 = vld [vmem:[#allocation2 + $0x8] sm:$0xff]
          %v2310 = vld [vmem:[#allocation2 + $0x10] sm:$0xff]
          %v2311 = vld [vmem:[#allocation2 + $0x18] sm:$0xff]
          %v2312 = vld [vmem:[#allocation2 + $0x20] sm:$0xff]
          %v2313 = vld [vmem:[#allocation2 + $0x28] sm:$0xff]
          %v2314 = vld [vmem:[#allocation2 + $0x30] sm:$0xff]
          %v2315 = vld [vmem:[#allocation2 + $0x38] sm:$0xff]
          %v2316 = vld [vmem:[#allocation2 + $0x40] sm:$0xff]
          %v2317 = vld [vmem:[#allocation2 + $0x48] sm:$0xff]
          %v2318 = vld [vmem:[#allocation2 + $0x50] sm:$0xff]
          %v2319 = vld [vmem:[#allocation2 + $0x58] sm:$0xff]
          %v2320 = vld [vmem:[#allocation2 + $0x60] sm:$0xff]
          %v2321 = vld [vmem:[#allocation2 + $0x68] sm:$0xff]
          %v2322 = vld [vmem:[#allocation2 + $0x70] sm:$0xff]
          %v2323 = vld [vmem:[#allocation2 + $0x78] sm:$0xff]
          %v2324 = vld [vmem:[#allocation2 + $0x80] sm:$0xff]
          %v2325 = vld [vmem:[#allocation2 + $0x88] sm:$0xff]
          %v2326 = vld [vmem:[#allocation2 + $0x90] sm:$0xff]
          %v2327 = vld [vmem:[#allocation2 + $0x98] sm:$0xff]
          %v2328 = vld [vmem:[#allocation2 + $0xa0] sm:$0xff]
          %v2329 = vld [vmem:[#allocation2 + $0xa8] sm:$0xff]
          %v2330 = vld [vmem:[#allocation2 + $0xb0] sm:$0xff]
          %v2331 = vld [vmem:[#allocation2 + $0xb8] sm:$0xff]
          %v2332 = vld [vmem:[#allocation2 + $0xc0] sm:$0xff]
          %v2333 = vld [vmem:[#allocation2 + $0xc8] sm:$0xff]
          %v2334 = vld [vmem:[#allocation2 + $0xd0] sm:$0xff]
          %v2335 = vld [vmem:[#allocation2 + $0xd8] sm:$0xff]
          %v2336 = vld [vmem:[#allocation2 + $0xe0] sm:$0xff]
          %v2337 = vld [vmem:[#allocation2 + $0xe8] sm:$0xff]
          %v2338 = vld [vmem:[#allocation2 + $0xf0] sm:$0xff]
          %v2339 = vld [vmem:[#allocation2 + $0xf8] sm:$0xff]
          %v2340 = vpack.c.bf16 %v2310, %v2308
          %v2341 = vpack.c.bf16 %v2311, %v2309
          %v2342 = vpack.c.bf16 %v2314, %v2312
          %v2343 = vpack.c.bf16 %v2315, %v2313
          %v2344 = vpack.c.bf16 %v2318, %v2316
          %v2345 = vpack.c.bf16 %v2319, %v2317
          %v2346 = vpack.c.bf16 %v2322, %v2320
          %v2347 = vpack.c.bf16 %v2323, %v2321
          %v2348 = vpack.c.bf16 %v2326, %v2324
          %v2349 = vpack.c.bf16 %v2327, %v2325
          %v2350 = vpack.c.bf16 %v2330, %v2328
          %v2351 = vpack.c.bf16 %v2331, %v2329
          %v2352 = vpack.c.bf16 %v2334, %v2332
          %v2353 = vpack.c.bf16 %v2335, %v2333
          %v2354 = vpack.c.bf16 %v2338, %v2336
          %v2355 = vpack.c.bf16 %v2339, %v2337
          %v2372 = vunpack.c.l.b16 %v2340
          %v2373 = vunpack.c.l.b16 %v2341
          %v2374 = vunpack.c.h.b16 %v2340
          %v2375 = vunpack.c.h.b16 %v2341
          %v2376 = vunpack.c.l.b16 %v2342
          %v2377 = vunpack.c.l.b16 %v2343
          %v2378 = vunpack.c.h.b16 %v2342
          %v2379 = vunpack.c.h.b16 %v2343
          %v2380 = vunpack.c.l.b16 %v2344
          %v2381 = vunpack.c.l.b16 %v2345
          %v2382 = vunpack.c.h.b16 %v2344
          %v2383 = vunpack.c.h.b16 %v2345
          %v2384 = vunpack.c.l.b16 %v2346
          %v2385 = vunpack.c.l.b16 %v2347
          %v2386 = vunpack.c.h.b16 %v2346
          %v2387 = vunpack.c.h.b16 %v2347
          %v2388 = vunpack.c.l.b16 %v2348
          %v2389 = vunpack.c.l.b16 %v2349
          %v2390 = vunpack.c.h.b16 %v2348
          %v2391 = vunpack.c.h.b16 %v2349
          %v2392 = vunpack.c.l.b16 %v2350
          %v2393 = vunpack.c.l.b16 %v2351
          %v2394 = vunpack.c.h.b16 %v2350
          %v2395 = vunpack.c.h.b16 %v2351
          %v2396 = vunpack.c.l.b16 %v2352
          %v2397 = vunpack.c.l.b16 %v2353
          %v2398 = vunpack.c.h.b16 %v2352
          %v2399 = vunpack.c.h.b16 %v2353
          %v2400 = vunpack.c.l.b16 %v2354
          %v2401 = vunpack.c.l.b16 %v2355
          %v2402 = vunpack.c.h.b16 %v2354
          %v2403 = vunpack.c.h.b16 %v2355
          %v2404 = vpack.c.b16 %v2373, %v2372
          %v2405 = vpack.c.b16 %v2375, %v2374
          %v2406 = vpack.c.b16 %v2377, %v2376
          %v2407 = vpack.c.b16 %v2379, %v2378
          %v2408 = vpack.c.b16 %v2381, %v2380
          %v2409 = vpack.c.b16 %v2383, %v2382
          %v2410 = vpack.c.b16 %v2385, %v2384
          %v2411 = vpack.c.b16 %v2387, %v2386
          %v2412 = vpack.c.b16 %v2389, %v2388
          %v2413 = vpack.c.b16 %v2391, %v2390
          %v2414 = vpack.c.b16 %v2393, %v2392
          %v2415 = vpack.c.b16 %v2395, %v2394
          %v2416 = vpack.c.b16 %v2397, %v2396
          %v2417 = vpack.c.b16 %v2399, %v2398
          %v2418 = vpack.c.b16 %v2401, %v2400
          %v2419 = vpack.c.b16 %v2403, %v2402
          %2436 = vst [vmem:[%s362] sm:$0xff] %v2404
          %2437 = vst [vmem:[%s362 + $0x8] sm:$0xff] %v2405
          %2438 = vst [vmem:[%s362 + $0x10] sm:$0xff] %v2406
          %2439 = vst [vmem:[%s362 + $0x18] sm:$0xff] %v2407
          %2440 = vst [vmem:[%s362 + $0x20] sm:$0xff] %v2408
          %2441 = vst [vmem:[%s362 + $0x28] sm:$0xff] %v2409
          %2442 = vst [vmem:[%s362 + $0x30] sm:$0xff] %v2410
          %2443 = vst [vmem:[%s362 + $0x38] sm:$0xff] %v2411
          %2444 = vst [vmem:[%s362 + $0x40] sm:$0xff] %v2412
          %2445 = vst [vmem:[%s362 + $0x48] sm:$0xff] %v2413
          %2446 = vst [vmem:[%s362 + $0x50] sm:$0xff] %v2414
          %2447 = vst [vmem:[%s362 + $0x58] sm:$0xff] %v2415
          %2448 = vst [vmem:[%s362 + $0x60] sm:$0xff] %v2416
          %2449 = vst [vmem:[%s362 + $0x68] sm:$0xff] %v2417
          %2450 = vst [vmem:[%s362 + $0x70] sm:$0xff] %v2418
          %2451 = vst [vmem:[%s362 + $0x78] sm:$0xff] %v2419
        $region68: #{_customized_mlp_call.1} parent=39 // pred_fallthru
          _
        %s2452 = sand.u32 %s166, 1
        %s2453 = scalar_lea.sflag [#allocation5], %s2452
        %s2454 = sand.u32 %s166, 1
        %s2455 = smul.addr %s2454, 128
        %s2456 = scalar_lea.vmem [#allocation12], %s2455
        // Predicated region
        $region69: #{_customized_mlp_call.1} parent=39 // pred_check
          %p2457 = pneg %p176
        $region70: #{_customized_mlp_call.1} parent=39 // pred_check_branch
          %2459 = sbr.rel (%p2457) target = $region72
        $region71: #{_customized_mlp_call.1} parent=39 // pred_region
          %s2460 = smul.u32 16, %s30
          %s2462 = ssub.s32 2048, 2048
          %2463 = vsyncadd %s2453, %s2462
          %s2464 = smul.addr %s2460, 2
          %s2465 = smul.addr %s2464, 64
          %s2466 = scalar_lea.hbm %s5, %s2465
          %s2467 = sshll.u32 %s2456, 4
          %s2468 = int_to_ptr.vmem [resolvable:$true] %s2467
          %2473 = dma.vmem_to_hbm [thread:$0]  %s2468, 2048, %s2466, %s2453, 128, 128, 8
        $region72: #{_customized_mlp_call.1} parent=39 // pred_fallthru
          _
      $region40: #{_customized_mlp_call.1} parent=5 // pred_fallthru
        _
      %p2474 = scmp.le.s32.totalorder 2, %s21
      // Predicated region
      $region73: #{_customized_mlp_call.1} parent=5 // pred_check
        %p2475 = pneg %p2474
      $region74: #{_customized_mlp_call.1} parent=5 // pred_check_branch
        %2477 = sbr.rel (%p2475) target = $region76
      $region75: #{_customized_mlp_call.1} parent=5 // pred_region
        %s2478 = ssub.s32 %s21, 2
        // Predicated region
        $region77: #{_customized_mlp_call.1} parent=75 // pred_check
          %p2479 = pneg %p182
        $region78: #{_customized_mlp_call.1} parent=75 // pred_check_branch
          %2481 = sbr.rel (%p2479) target = $region80
        $region79: #{_customized_mlp_call.1} parent=75 // pred_region
          %s2482 = sand.u32 %s167, 1
          %s2483 = scalar_lea.sflag [#allocation5], %s2482
          %s2484 = sand.u32 %s167, 1
          %s2485 = smul.addr %s2484, 128
          %s2486 = scalar_lea.vmem [#allocation12], %s2485
          %2487 = dma.done %s2483, 2048
        $region80: #{_customized_mlp_call.1} parent=75 // pred_fallthru
          _
      $region76: #{_customized_mlp_call.1} parent=5 // pred_fallthru
        _
    $region6: #{_customized_mlp_call.1} parent=1 // loop_footer
      %s25 = sadd.s32 1, %s21
    $region7: #{_customized_mlp_call.1} parent=1 // loop_footer_branch
      %20 = sbr.rel target = $region3
    $region8: #{_customized_mlp_call.1} parent=1 // loop_exit
      _
    %2488 = vsyncpa [#allocation4], 1
    %s2489 = scalar_lea.sflag [#allocation4], 1
    %2490 = vsyncpa %s2489, 1
    %2491 = vsyncpa [#allocation7], 1
    %s2492 = scalar_lea.sflag [#allocation7], 1
    %2493 = vsyncpa %s2492, 1
    %2494 = vsyncpa [#allocation10], 1
    %2495 = vsyncpa [#allocation5], 1
    %s2496 = scalar_lea.sflag [#allocation5], 1
    %2497 = vsyncpa %s2496, 1

</llo_original>
